<compile_context>
chip_gen: v7x
topology: tpu7x:2x2x1
jax: 0.10.0
libtpu: 0.0.40
codegen_flags: <defaults>
</compile_context>

<pallas_src>
import numpy as np
import jax
import jax.numpy as jnp
from jax.experimental import pallas as pl
from jax.experimental.pallas import tpu as pltpu

# ---------------- small-but-consistent config ----------------
INPUT_SHAPE = (128, 64)        # (time, freq)  (original: (512, 128))
PATCH = (16, 16)
EMBED_DIM = 64                 # original: 768
DEPTH = 2                      # original: 12
NUM_HEADS = 4                  # original: 12
MLP_RATIO = 4
CLONE_SIZE = 2                 # original: 16
MASK_RATIO = 0.8
BATCH = 2
NPROG = 2                      # shard clone-batch across v7x's two TCs; benign on 1-TC chips

HEAD_DIM = EMBED_DIM // NUM_HEADS
SCALE = HEAD_DIM ** -0.5
HP = INPUT_SHAPE[0] // PATCH[0]     # time patches
WP = INPUT_SHAPE[1] // PATCH[1]     # freq patches
L = HP * WP                         # num patches
PATCH_FT = (WP, HP)                 # (num_freq_patches, num_time_patches) as in PatchEmbed
MLP_HIDDEN = EMBED_DIM * MLP_RATIO
EPS = 1e-6


# ---------------- 2D sin-cos positional embedding (deterministic, numpy) ----------------
def _get_1d_sincos(embed_dim, pos):
    omega = np.arange(embed_dim // 2, dtype=np.float64)
    omega /= embed_dim / 2.0
    omega = 1.0 / 10000 ** omega
    pos = pos.reshape(-1)
    out = np.einsum("m,d->md", pos, omega)
    return np.concatenate([np.sin(out), np.cos(out)], axis=1)


def get_2d_sincos_pos_embed_flexible(embed_dim, grid_size, cls_token=False):
    grid_h = np.arange(grid_size[0], dtype=np.float32)
    grid_w = np.arange(grid_size[1], dtype=np.float32)
    grid = np.meshgrid(grid_w, grid_h)
    grid = np.stack(grid, axis=0)
    grid = grid.reshape([2, 1, grid_size[0], grid_size[1]])
    emb_h = _get_1d_sincos(embed_dim // 2, grid[0])
    emb_w = _get_1d_sincos(embed_dim // 2, grid[1])
    pos = np.concatenate([emb_h, emb_w], axis=1)
    if cls_token:
        pos = np.concatenate([np.zeros([1, embed_dim]), pos], axis=0)
    return pos.astype(np.float32)


# ---------------- inverse block mask (host-side index glue) ----------------
# TODO(synk): torch RNG stream (randint / multinomial) has no JAX equivalent; the same
#             algorithm is reproduced with a seeded numpy Generator (index glue, not hot path).
def inverse_block_mask(shape, clone_size, rng, mask_ratio=0.8, num_freq_patches=8,
                       num_time_patches=32, mask_length=5, mask_prob_adjust=0.07,
                       require_same_masks=True):
    if mask_ratio == 0:
        return None, None, None
    assert mask_length > 1
    B, Lp, D = shape
    B = B * clone_size
    d = (num_time_patches, num_freq_patches)
    keep_ratio = 1.0 - mask_ratio
    mask = np.zeros((B, d[0], d[1]), dtype=np.float32)
    masking_size = int(Lp * ((keep_ratio + mask_prob_adjust) / mask_length ** 2))
    if masking_size > 0:
        mask_inds = rng.integers(0, Lp, size=(B, masking_size))
        flat = mask.reshape(B, -1)
        for b in range(B):
            flat[b, mask_inds[b]] = 1
    centers = np.nonzero(mask)
    offset = mask_length // 2
    i0l, i1l, i2l = [], [], []
    for i in range(mask_length):
        for j in range(mask_length):
            i0l.append(centers[0])
            i1l.append(centers[1] + (i - offset))
            i2l.append(centers[2] + (j - offset))
    i0 = np.concatenate(i0l)
    i1 = np.clip(np.concatenate(i1l), 0, d[0] - 1)
    i2 = np.clip(np.concatenate(i2l), 0, d[1] - 1)
    mask[i0, i1, i2] = 1
    mask = mask.reshape(B, -1)
    if require_same_masks:
        target_len = int(Lp * keep_ratio)
        for b in range(B):
            m = mask[b]
            n = int(m.sum())
            if n > target_len:
                idx = rng.choice(np.nonzero(m)[0], size=n - target_len, replace=False)
                m[idx] = 0
            elif n < target_len:
                idx = rng.choice(np.nonzero(1 - m)[0], size=target_len - n, replace=False)
                m[idx] = 1
    mask = 1 - mask
    mask = mask.astype(np.uint8)
    ids_shuffle = np.argsort(mask, axis=1, kind="stable")
    ids_restore = np.argsort(ids_shuffle, axis=1, kind="stable")
    len_keep = Lp - int(mask[0].sum())
    ids_keep = ids_shuffle[:, :len_keep].astype(np.int32)                       # (B, keep)
    ids_restore = np.broadcast_to(ids_restore[:, :, None], (B, Lp, D)).astype(np.int32)
    return mask.astype(np.float32), ids_keep, ids_restore


# ---------------- in-kernel helpers (f32 VPU/EUP math) ----------------
def _layernorm(x, w, b):
    mu = jnp.mean(x, axis=-1, keepdims=True)
    var = jnp.mean((x - mu) ** 2, axis=-1, keepdims=True)
    return (x - mu) * jax.lax.rsqrt(var + EPS) * w + b


def _gelu(x):
    # exact (erf) GELU, matching torch.nn.GELU default
    return 0.5 * x * (1.0 + jax.lax.erf(x * 0.7071067811865476))


# ---------------- fused encoder kernel ----------------
def run_encoder(xp, patch_w, patch_b, gmat, tok_bias, kp, norm_w, norm_b,
                *, bc, n_pad, n_real, nprog):
    (wqkv, bqkv, wo, ob, n1w, n1b, fc1w, fc1b, fc2w, fc2b, n2w, n2b) = kp
    d = EMBED_DIM
    depth, nheads, hd = DEPTH, NUM_HEADS, HEAD_DIM
    m_pad = bc * n_pad
    half_bc = bc // nprog              # clone-samples handled per program
    half_m = half_bc * n_pad
    bl = gmat.shape[1]                 # B * L
    bf16, f32 = jnp.bfloat16, jnp.float32

    def kernel(xp_ref, pw_ref, pb_ref, g_ref, tb_ref,
               wqkv_ref, bqkv_ref, wo_ref, ob_ref,
               n1w_ref, n1b_ref, fc1w_ref, fc1b_ref, fc2w_ref, fc2b_ref,
               n2w_ref, n2b_ref, nw_ref, nb_ref, out_ref):
        # ---- patch embed (whole mini-batch; tiny, recomputed per program) ----
        emb = jnp.dot(xp_ref[...], pw_ref[...], preferred_element_type=f32) + pb_ref[...]
        # ---- repeat_interleave + mask gather + cls concat + pos-embed: one one-hot
        #      matmul plus an additive per-row token bias ----
        x = jnp.dot(g_ref[...], emb.astype(bf16), preferred_element_type=f32) + tb_ref[...]

        # additive key mask for the padded token column(s); kept in f32
        col = jax.lax.broadcasted_iota(jnp.int32, (n_pad, n_pad), 1)
        pad_bias = jnp.where(col < n_real, 0.0, -1e30).astype(f32)

        for layer in range(depth):
            # ------- attention (post-norm AltBlock: x = x + attn(x)) -------
            xb = x.astype(bf16)
            # fused QKV: one (half_m, D) @ (D, 3D) matmul; scale folded into q columns
            qkv = jnp.dot(xb, wqkv_ref[layer], preferred_element_type=f32) + bqkv_ref[layer]

            def heads(base):
                # lane-slice each head out of the fused qkv and move heads to the
                # leading (einsum batch) dim: (H*half_bc, n_pad, hd)
                hs = jnp.stack([qkv[:, base + h * hd: base + (h + 1) * hd]
                                for h in range(nheads)], axis=0)        # (H, half_m, hd)
                return hs.reshape(nheads * half_bc, n_pad, hd).astype(bf16)

            qh, kh, vh = heads(0), heads(d), heads(2 * d)

            # one batched score einsum + one softmax + one value einsum per layer
            s = jnp.einsum('bnd,bmd->bnm', qh, kh, preferred_element_type=f32) + pad_bias
            s = s - jnp.max(s, axis=-1, keepdims=True)
            p = jnp.exp(s)
            p = p * pl.reciprocal(jnp.sum(p, axis=-1, keepdims=True), approx=True)
            o = jnp.einsum('bnm,bmd->bnd', p.astype(bf16), vh, preferred_element_type=f32)

            # re-assemble heads on the lane dim and run ONE full-width proj matmul
            o_flat = jnp.concatenate(
                [o[h * half_bc:(h + 1) * half_bc].reshape(half_m, hd)
                 for h in range(nheads)], axis=-1)                       # (half_m, D)
            x = x + jnp.dot(o_flat.astype(bf16), wo_ref[layer],
                            preferred_element_type=f32) + ob_ref[layer]

            # ------- post-norm MLP: r = norm1(x); x = norm2(r + mlp(r)) -------
            r = _layernorm(x, n1w_ref[layer], n1b_ref[layer])
            hmid = _gelu(jnp.dot(r.astype(bf16), fc1w_ref[layer],
                                 preferred_element_type=f32) + fc1b_ref[layer])
            mlp = jnp.dot(hmid.astype(bf16), fc2w_ref[layer],
                          preferred_element_type=f32) + fc2b_ref[layer]
            x = _layernorm(r + mlp, n2w_ref[layer], n2b_ref[layer])

        y = _layernorm(x, nw_ref[...], nb_ref[...])                      # (half_m, D)
        # lane-dense store: pack pairs of token rows into 128 lanes (unmasked vst)
        y3 = y.reshape(half_m // 2, 2, d)
        out_ref[...] = jnp.concatenate([y3[:, 0, :], y3[:, 1, :]], axis=-1)

    def full(a):
        r = a.ndim
        return pl.BlockSpec(a.shape, lambda i: (0,) * r)

    weight_args = (wqkv, bqkv, wo, ob, n1w, n1b, fc1w, fc1b, fc2w, fc2b, n2w, n2b)
    in_specs = ([full(xp), full(patch_w), full(patch_b),
                 pl.BlockSpec((half_m, bl), lambda i: (i, 0)),
                 pl.BlockSpec((half_m, d), lambda i: (i, 0))]
                + [full(a) for a in weight_args]
                + [full(norm_w), full(norm_b)])

    grid_spec = pltpu.PrefetchScalarGridSpec(
        num_scalar_prefetch=0,
        grid=(nprog,),
        in_specs=in_specs,
        out_specs=pl.BlockSpec((half_m // 2, 2 * d), lambda i: (i, 0)),
    )
    return pl.pallas_call(
        kernel,
        out_shape=jax.ShapeDtypeStruct((m_pad // 2, 2 * d), jnp.float32),
        grid_spec=grid_spec,
        compiler_params=pltpu.CompilerParams(dimension_semantics=("parallel",)),
    )(xp, patch_w, patch_b, gmat, tok_bias, *weight_args, norm_w, norm_b)


# ---------------- parameter prep (fused stacks, bf16 weights, scale folding) ----------------
def prepare_kernel_params(params):
    D = EMBED_DIM

    def stack(fn, dtype):
        return jnp.stack([fn(bp) for bp in params['blocks']], axis=0).astype(dtype)

    # fold the attention scale into the q third of the fused qkv weight / bias
    scale_vec = jnp.concatenate([jnp.full((D,), SCALE, jnp.float32),
                                 jnp.ones((2 * D,), jnp.float32)])
    wqkv = stack(lambda bp: bp['qkv_w'] * scale_vec, jnp.bfloat16)   # (depth, D, 3D)
    bqkv = stack(lambda bp: bp['qkv_b'] * scale_vec, jnp.float32)    # (depth, 1, 3D)
    wo = stack(lambda bp: bp['proj_w'], jnp.bfloat16)
    ob = stack(lambda bp: bp['proj_b'], jnp.float32)
    n1w = stack(lambda bp: bp['n1_w'], jnp.float32)
    n1b = stack(lambda bp: bp['n1_b'], jnp.float32)
    fc1w = stack(lambda bp: bp['fc1_w'], jnp.bfloat16)
    fc1b = stack(lambda bp: bp['fc1_b'], jnp.float32)
    fc2w = stack(lambda bp: bp['fc2_w'], jnp.bfloat16)
    fc2b = stack(lambda bp: bp['fc2_b'], jnp.float32)
    n2w = stack(lambda bp: bp['n2_w'], jnp.float32)
    n2b = stack(lambda bp: bp['n2_b'], jnp.float32)
    return (wqkv, bqkv, wo, ob, n1w, n1b, fc1w, fc1b, fc2w, fc2b, n2w, n2b)


# ---------------- parameters (deterministic, in-script) ----------------
def init_params(key):
    D, H, P = EMBED_DIM, MLP_HIDDEN, PATCH[0] * PATCH[1]
    keys = jax.random.split(key, 2 + DEPTH)
    pos = get_2d_sincos_pos_embed_flexible(D, PATCH_FT, cls_token=True)   # (L+1, D)
    params = {
        'patch_w': jax.random.normal(keys[0], (P, D), jnp.float32) * 0.02,
        'patch_b': jnp.zeros((1, D), jnp.float32),
        'pos_embed': jnp.asarray(pos, jnp.float32)[None],                  # (1, L+1, D)
        'cls_token': jax.random.normal(keys[1], (1, 1, D), jnp.float32) * 0.02,
        'norm_w': jnp.ones((1, D), jnp.float32),
        'norm_b': jnp.zeros((1, D), jnp.float32),
        'blocks': [],
    }
    for i in range(DEPTH):
        bk = jax.random.split(keys[2 + i], 4)
        params['blocks'].append({
            'qkv_w': jax.random.normal(bk[0], (D, 3 * D), jnp.float32) * 0.02,
            'qkv_b': jnp.zeros((1, 3 * D), jnp.float32),
            'proj_w': jax.random.normal(bk[1], (D, D), jnp.float32) * 0.02,
            'proj_b': jnp.zeros((1, D), jnp.float32),
            'n1_w': jnp.ones((1, D), jnp.float32),
            'n1_b': jnp.zeros((1, D), jnp.float32),
            'fc1_w': jax.random.normal(bk[2], (D, H), jnp.float32) * 0.02,
            'fc1_b': jnp.zeros((1, H), jnp.float32),
            'fc2_w': jax.random.normal(bk[3], (H, D), jnp.float32) * 0.02,
            'fc2_b': jnp.zeros((1, D), jnp.float32),
            'n2_w': jnp.ones((1, D), jnp.float32),
            'n2_b': jnp.zeros((1, D), jnp.float32),
        })
    return params


# ---------------- full student forward ----------------
def student_forward(x, params, mask_ratio, mask_rng):
    B, C, Himg, Wimg = x.shape
    assert C == 1 and Himg == INPUT_SHAPE[0] and Wimg == INPUT_SHAPE[1]
    D = EMBED_DIM
    p0, p1 = PATCH

    # conv(stride=patch) == patch extraction + matmul (glue reshape/transpose); bf16 operand
    xp = (x.reshape(B, HP, p0, WP, p1)
           .transpose(0, 1, 3, 2, 4)
           .reshape(B * L, p0 * p1)).astype(jnp.bfloat16)

    # host-side inverse block mask (index glue)
    mask, ids_keep, ids_restore = inverse_block_mask(
        (B, L, D), CLONE_SIZE, mask_rng, mask_ratio=mask_ratio,
        num_freq_patches=PATCH_FT[0], num_time_patches=PATCH_FT[1])

    Bc = B * CLONE_SIZE
    len_keep = ids_keep.shape[1]
    n_real = 1 + len_keep                     # cls + kept patches
    n_pad = ((n_real + 7) // 8) * 8           # pad token count to a sublane multiple
    m_pad = Bc * n_pad

    # one-hot gather matrix: fuses repeat_interleave + masked gather (+ zero cls/pad rows)
    # TODO(synk): at real L/D replace with scalar-prefetched ids_keep + pl.Element row gather.
    G = np.zeros((m_pad, B * L), dtype=np.float32)
    rows = (np.arange(Bc)[:, None] * n_pad + 1 + np.arange(len_keep)[None, :]).reshape(-1)
    cols = ((np.arange(Bc)[:, None] // CLONE_SIZE) * L + ids_keep).reshape(-1)
    G[rows, cols] = 1.0

    # per-row token bias: cls_token + pos[0] in row 0 of each sample; pos_embed of the
    # gathered patch in each kept-token row (folds the pre-mask pos-embed add through
    # the gather, so pos_embed is never tiled over batch); zero in pad rows.
    pos = np.asarray(params['pos_embed'][0])                     # (L+1, D)
    cls_vec = np.asarray(params['cls_token'][0, 0]) + pos[0]     # (D,)
    tok_bias = np.zeros((m_pad, D), dtype=np.float32)
    tok_bias[np.arange(Bc) * n_pad] = cls_vec
    tok_bias[rows] = pos[1 + (cols % L)]

    kp = prepare_kernel_params(params)
    nprog = NPROG if Bc % NPROG == 0 else 1
    out = run_encoder(xp, params['patch_w'].astype(jnp.bfloat16), params['patch_b'],
                      jnp.asarray(G, jnp.bfloat16), jnp.asarray(tok_bias),
                      kp, params['norm_w'], params['norm_b'],
                      bc=Bc, n_pad=n_pad, n_real=n_real, nprog=nprog)

    # undo the lane-dense packing: (m_pad/2, 2D) -> (Bc, n_pad, D)
    out = out.reshape(Bc, n_pad, D)
    cls_pred = out[:, 0]
    patch_pred = out[:, 1:n_real]
    return cls_pred, patch_pred, jnp.asarray(mask), jnp.asarray(ids_restore)


if __name__ == "__main__":
    key = jax.random.PRNGKey(0)
    pkey, xkey = jax.random.split(key)
    params = init_params(pkey)
    x = jax.random.normal(xkey, (BATCH, 1, INPUT_SHAPE[0], INPUT_SHAPE[1]), jnp.float32)
    rng = np.random.default_rng(0)

    cls_pred, patch_pred, mask, ids_restore = student_forward(x, params, MASK_RATIO, rng)
    jax.block_until_ready((cls_pred, patch_pred, mask, ids_restore))

    assert cls_pred.shape == (BATCH * CLONE_SIZE, EMBED_DIM)
    assert patch_pred.shape[0] == BATCH * CLONE_SIZE and patch_pred.shape[2] == EMBED_DIM
    assert mask.shape == (BATCH * CLONE_SIZE, L)
    assert ids_restore.shape == (BATCH * CLONE_SIZE, L, EMBED_DIM)
    assert bool(jnp.all(jnp.isfinite(cls_pred))) and bool(jnp.all(jnp.isfinite(patch_pred)))
    print("KERNEL_OK")
</pallas_src>

<mosaic_0001>
module attributes {stable_mosaic.version = 11 : i64} {
  func.func @kernel(%arg0: i32, %arg1: memref<64x256xbf16, #tpu.memory_space<vmem>>, %arg2: memref<256x64xbf16, #tpu.memory_space<vmem>>, %arg3: memref<1x64xf32, #tpu.memory_space<vmem>>, %arg4: memref<16x64xbf16, #tpu.memory_space<vmem>>, %arg5: memref<16x64xf32, #tpu.memory_space<vmem>>, %arg6: memref<2x64x192xbf16, #tpu.memory_space<vmem>>, %arg7: memref<2x1x192xf32, #tpu.memory_space<vmem>>, %arg8: memref<2x64x64xbf16, #tpu.memory_space<vmem>>, %arg9: memref<2x1x64xf32, #tpu.memory_space<vmem>>, %arg10: memref<2x1x64xf32, #tpu.memory_space<vmem>>, %arg11: memref<2x1x64xf32, #tpu.memory_space<vmem>>, %arg12: memref<2x64x256xbf16, #tpu.memory_space<vmem>>, %arg13: memref<2x1x256xf32, #tpu.memory_space<vmem>>, %arg14: memref<2x256x64xbf16, #tpu.memory_space<vmem>>, %arg15: memref<2x1x64xf32, #tpu.memory_space<vmem>>, %arg16: memref<2x1x64xf32, #tpu.memory_space<vmem>>, %arg17: memref<2x1x64xf32, #tpu.memory_space<vmem>>, %arg18: memref<1x64xf32, #tpu.memory_space<vmem>>, %arg19: memref<1x64xf32, #tpu.memory_space<vmem>>, %arg20: memref<8x128xf32, #tpu.memory_space<vmem>>) attributes {dimension_semantics = [#tpu.dimension_semantics<parallel>], iteration_bounds = array<i64: 2>, scalar_prefetch = 0 : i64, scratch_operands = 0 : i64, tpu.core_type = #tpu.core_type<tc>, window_params = [{pipeline_mode = #tpu.pipeline_mode<synchronous>, transform_indices = @transform_0, window_bounds = array<i64: 64, 256>}, {pipeline_mode = #tpu.pipeline_mode<synchronous>, transform_indices = @transform_1, window_bounds = array<i64: 256, 64>}, {pipeline_mode = #tpu.pipeline_mode<synchronous>, transform_indices = @transform_2, window_bounds = array<i64: 1, 64>}, {transform_indices = @transform_3, window_bounds = array<i64: 16, 64>}, {transform_indices = @transform_4, window_bounds = array<i64: 16, 64>}, {pipeline_mode = #tpu.pipeline_mode<synchronous>, transform_indices = @transform_5, window_bounds = array<i64: 2, 64, 192>}, {pipeline_mode = #tpu.pipeline_mode<synchronous>, transform_indices = @transform_6, window_bounds = array<i64: 2, 1, 192>}, {pipeline_mode = #tpu.pipeline_mode<synchronous>, transform_indices = @transform_7, window_bounds = array<i64: 2, 64, 64>}, {pipeline_mode = #tpu.pipeline_mode<synchronous>, transform_indices = @transform_8, window_bounds = array<i64: 2, 1, 64>}, {pipeline_mode = #tpu.pipeline_mode<synchronous>, transform_indices = @transform_9, window_bounds = array<i64: 2, 1, 64>}, {pipeline_mode = #tpu.pipeline_mode<synchronous>, transform_indices = @transform_10, window_bounds = array<i64: 2, 1, 64>}, {pipeline_mode = #tpu.pipeline_mode<synchronous>, transform_indices = @transform_11, window_bounds = array<i64: 2, 64, 256>}, {pipeline_mode = #tpu.pipeline_mode<synchronous>, transform_indices = @transform_12, window_bounds = array<i64: 2, 1, 256>}, {pipeline_mode = #tpu.pipeline_mode<synchronous>, transform_indices = @transform_13, window_bounds = array<i64: 2, 256, 64>}, {pipeline_mode = #tpu.pipeline_mode<synchronous>, transform_indices = @transform_14, window_bounds = array<i64: 2, 1, 64>}, {pipeline_mode = #tpu.pipeline_mode<synchronous>, transform_indices = @transform_15, window_bounds = array<i64: 2, 1, 64>}, {pipeline_mode = #tpu.pipeline_mode<synchronous>, transform_indices = @transform_16, window_bounds = array<i64: 2, 1, 64>}, {pipeline_mode = #tpu.pipeline_mode<synchronous>, transform_indices = @transform_17, window_bounds = array<i64: 1, 64>}, {pipeline_mode = #tpu.pipeline_mode<synchronous>, transform_indices = @transform_18, window_bounds = array<i64: 1, 64>}, {transform_indices = @transform_19, window_bounds = array<i64: 8, 128>}]} {
    %c0 = arith.constant 0 : index
    %c0_0 = arith.constant 0 : index
    %0 = vector.load %arg1[%c0, %c0_0] : memref<64x256xbf16, #tpu.memory_space<vmem>>, vector<64x256xbf16>
    %c0_1 = arith.constant 0 : index
    %c0_2 = arith.constant 0 : index
    %1 = vector.load %arg2[%c0_1, %c0_2] : memref<256x64xbf16, #tpu.memory_space<vmem>>, vector<256x64xbf16>
    %cst = arith.constant dense<0.000000e+00> : vector<64x64xf32>
    %2 = tpu.matmul %0, %1, %cst {dimension_numbers = #tpu.dot_dimension_numbers<[1], [0], [0], [1], [0, 0, 1, 1], [], []>} : vector<64x256xbf16>, vector<256x64xbf16>, vector<64x64xf32> -> vector<64x64xf32>
    %c0_3 = arith.constant 0 : index
    %c0_4 = arith.constant 0 : index
    %3 = vector.load %arg3[%c0_3, %c0_4] : memref<1x64xf32, #tpu.memory_space<vmem>>, vector<1x64xf32>
    %4 = vector.broadcast %3 : vector<1x64xf32> to vector<64x64xf32>
    %5 = arith.addf %2, %4 : vector<64x64xf32>
    %c0_5 = arith.constant 0 : index
    %c0_6 = arith.constant 0 : index
    %6 = vector.load %arg4[%c0_5, %c0_6] : memref<16x64xbf16, #tpu.memory_space<vmem>>, vector<16x64xbf16>
    %7 = arith.truncf %5 : vector<64x64xf32> to vector<64x64xbf16>
    %cst_7 = arith.constant dense<0.000000e+00> : vector<16x64xf32>
    %8 = tpu.matmul %6, %7, %cst_7 {dimension_numbers = #tpu.dot_dimension_numbers<[1], [0], [0], [1], [0, 0, 1, 1], [], []>} : vector<16x64xbf16>, vector<64x64xbf16>, vector<16x64xf32> -> vector<16x64xf32>
    %c0_8 = arith.constant 0 : index
    %c0_9 = arith.constant 0 : index
    %9 = vector.load %arg5[%c0_8, %c0_9] : memref<16x64xf32, #tpu.memory_space<vmem>>, vector<16x64xf32>
    %10 = arith.addf %8, %9 : vector<16x64xf32>
    %11 = tpu.iota {dimensions = array<i32: 1>} : vector<8x8xi32>
    %c7_i32 = arith.constant 7 : i32
    %12 = vector.broadcast %c7_i32 : i32 to vector<8x8xi32>
    %13 = arith.cmpi slt, %11, %12 : vector<8x8xi32>
    %cst_10 = arith.constant 0.000000e+00 : f32
    %cst_11 = arith.constant -1.000000e+30 : f32
    %14 = vector.broadcast %cst_10 : f32 to vector<8x8xf32>
    %15 = vector.broadcast %cst_11 : f32 to vector<8x8xf32>
    %16 = arith.select %13, %14, %15 : vector<8x8xi1>, vector<8x8xf32>
    %17 = arith.truncf %10 : vector<16x64xf32> to vector<16x64xbf16>
    %c0_12 = arith.constant 0 : index
    %c0_13 = arith.constant 0 : index
    %c0_14 = arith.constant 0 : index
    %18 = vector.load %arg6[%c0_12, %c0_13, %c0_14] : memref<2x64x192xbf16, #tpu.memory_space<vmem>>, vector<1x64x192xbf16>
    %19 = vector.shape_cast %18 : vector<1x64x192xbf16> to vector<64x192xbf16>
    %cst_15 = arith.constant dense<0.000000e+00> : vector<16x192xf32>
    %20 = tpu.matmul %17, %19, %cst_15 {dimension_numbers = #tpu.dot_dimension_numbers<[1], [0], [0], [1], [0, 0, 1, 1], [], []>} : vector<16x64xbf16>, vector<64x192xbf16>, vector<16x192xf32> -> vector<16x192xf32>
    %c0_16 = arith.constant 0 : index
    %c0_17 = arith.constant 0 : index
    %c0_18 = arith.constant 0 : index
    %21 = vector.load %arg7[%c0_16, %c0_17, %c0_18] : memref<2x1x192xf32, #tpu.memory_space<vmem>>, vector<1x1x192xf32>
    %22 = vector.shape_cast %21 : vector<1x1x192xf32> to vector<1x192xf32>
    %23 = vector.broadcast %22 : vector<1x192xf32> to vector<16x192xf32>
    %24 = arith.addf %20, %23 : vector<16x192xf32>
    %25 = vector.extract_strided_slice %24 {offsets = [0, 0], sizes = [16, 16], strides = [1, 1]} : vector<16x192xf32> to vector<16x16xf32>
    %26 = vector.extract_strided_slice %24 {offsets = [0, 16], sizes = [16, 16], strides = [1, 1]} : vector<16x192xf32> to vector<16x16xf32>
    %27 = vector.extract_strided_slice %24 {offsets = [0, 32], sizes = [16, 16], strides = [1, 1]} : vector<16x192xf32> to vector<16x16xf32>
    %28 = vector.extract_strided_slice %24 {offsets = [0, 48], sizes = [16, 16], strides = [1, 1]} : vector<16x192xf32> to vector<16x16xf32>
    %29 = vector.shape_cast %25 : vector<16x16xf32> to vector<1x16x16xf32>
    %30 = vector.shape_cast %26 : vector<16x16xf32> to vector<1x16x16xf32>
    %31 = vector.shape_cast %27 : vector<16x16xf32> to vector<1x16x16xf32>
    %32 = vector.shape_cast %28 : vector<16x16xf32> to vector<1x16x16xf32>
    %33 = tpu.concatenate %29, %30, %31, %32 in 0 : vector<1x16x16xf32>, vector<1x16x16xf32>, vector<1x16x16xf32>, vector<1x16x16xf32> -> vector<4x16x16xf32>
    %34 = vector.shape_cast %33 : vector<4x16x16xf32> to vector<8x8x16xf32>
    %35 = arith.truncf %34 : vector<8x8x16xf32> to vector<8x8x16xbf16>
    %36 = vector.extract_strided_slice %24 {offsets = [0, 64], sizes = [16, 16], strides = [1, 1]} : vector<16x192xf32> to vector<16x16xf32>
    %37 = vector.extract_strided_slice %24 {offsets = [0, 80], sizes = [16, 16], strides = [1, 1]} : vector<16x192xf32> to vector<16x16xf32>
    %38 = vector.extract_strided_slice %24 {offsets = [0, 96], sizes = [16, 16], strides = [1, 1]} : vector<16x192xf32> to vector<16x16xf32>
    %39 = vector.extract_strided_slice %24 {offsets = [0, 112], sizes = [16, 16], strides = [1, 1]} : vector<16x192xf32> to vector<16x16xf32>
    %40 = vector.shape_cast %36 : vector<16x16xf32> to vector<1x16x16xf32>
    %41 = vector.shape_cast %37 : vector<16x16xf32> to vector<1x16x16xf32>
    %42 = vector.shape_cast %38 : vector<16x16xf32> to vector<1x16x16xf32>
    %43 = vector.shape_cast %39 : vector<16x16xf32> to vector<1x16x16xf32>
    %44 = tpu.concatenate %40, %41, %42, %43 in 0 : vector<1x16x16xf32>, vector<1x16x16xf32>, vector<1x16x16xf32>, vector<1x16x16xf32> -> vector<4x16x16xf32>
    %45 = vector.shape_cast %44 : vector<4x16x16xf32> to vector<8x8x16xf32>
    %46 = arith.truncf %45 : vector<8x8x16xf32> to vector<8x8x16xbf16>
    %47 = vector.extract_strided_slice %24 {offsets = [0, 128], sizes = [16, 16], strides = [1, 1]} : vector<16x192xf32> to vector<16x16xf32>
    %48 = vector.extract_strided_slice %24 {offsets = [0, 144], sizes = [16, 16], strides = [1, 1]} : vector<16x192xf32> to vector<16x16xf32>
    %49 = vector.extract_strided_slice %24 {offsets = [0, 160], sizes = [16, 16], strides = [1, 1]} : vector<16x192xf32> to vector<16x16xf32>
    %50 = vector.extract_strided_slice %24 {offsets = [0, 176], sizes = [16, 16], strides = [1, 1]} : vector<16x192xf32> to vector<16x16xf32>
    %51 = vector.shape_cast %47 : vector<16x16xf32> to vector<1x16x16xf32>
    %52 = vector.shape_cast %48 : vector<16x16xf32> to vector<1x16x16xf32>
    %53 = vector.shape_cast %49 : vector<16x16xf32> to vector<1x16x16xf32>
    %54 = vector.shape_cast %50 : vector<16x16xf32> to vector<1x16x16xf32>
    %55 = tpu.concatenate %51, %52, %53, %54 in 0 : vector<1x16x16xf32>, vector<1x16x16xf32>, vector<1x16x16xf32>, vector<1x16x16xf32> -> vector<4x16x16xf32>
    %56 = vector.shape_cast %55 : vector<4x16x16xf32> to vector<8x8x16xf32>
    %57 = arith.truncf %56 : vector<8x8x16xf32> to vector<8x8x16xbf16>
    "tpu.trace_start"() <{level = 10 : i32, message = "bnd,bmd->bnm"}> : () -> ()
    %cst_19 = arith.constant dense<0.000000e+00> : vector<8x8x8xf32>
    %58 = tpu.matmul %35, %46, %cst_19 {dimension_numbers = #tpu.dot_dimension_numbers<[2], [2], [1], [1], [0, 0, 0, 1, 1, 1], [0], [0]>} : vector<8x8x16xbf16>, vector<8x8x16xbf16>, vector<8x8x8xf32> -> vector<8x8x8xf32>
    "tpu.trace_stop"() : () -> ()
    %59 = vector.shape_cast %16 : vector<8x8xf32> to vector<1x8x8xf32>
    %60 = vector.broadcast %59 : vector<1x8x8xf32> to vector<8x8x8xf32>
    %61 = arith.addf %58, %60 : vector<8x8x8xf32>
    %cst_20 = arith.constant dense<0xFF800000> : vector<8x8xf32>
    %62 = vector.multi_reduction <maximumf>, %61, %cst_20 [2] : vector<8x8x8xf32> to vector<8x8xf32>
    %63 = vector.shape_cast %62 : vector<8x8xf32> to vector<8x8x1xf32>
    %64 = vector.broadcast %63 : vector<8x8x1xf32> to vector<8x8x8xf32>
    %65 = arith.subf %61, %64 : vector<8x8x8xf32>
    %66 = math.exp %65 : vector<8x8x8xf32>
    %cst_21 = arith.constant dense<0.000000e+00> : vector<8x8xf32>
    %67 = vector.multi_reduction <add>, %66, %cst_21 [2] : vector<8x8x8xf32> to vector<8x8xf32>
    %68 = vector.shape_cast %67 : vector<8x8xf32> to vector<8x8x1xf32>
    %69 = tpu.reciprocal %68 {approx = true} : vector<8x8x1xf32> -> vector<8x8x1xf32>
    %70 = vector.broadcast %69 : vector<8x8x1xf32> to vector<8x8x8xf32>
    %71 = arith.mulf %66, %70 : vector<8x8x8xf32>
    %72 = arith.truncf %71 : vector<8x8x8xf32> to vector<8x8x8xbf16>
    "tpu.trace_start"() <{level = 10 : i32, message = "bnm,bmd->bnd"}> : () -> ()
    %cst_22 = arith.constant dense<0.000000e+00> : vector<8x8x16xf32>
    %73 = tpu.matmul %72, %57, %cst_22 {dimension_numbers = #tpu.dot_dimension_numbers<[2], [1], [1], [2], [0, 0, 0, 1, 1, 2], [0], [0]>} : vector<8x8x8xbf16>, vector<8x8x16xbf16>, vector<8x8x16xf32> -> vector<8x8x16xf32>
    "tpu.trace_stop"() : () -> ()
    %74 = vector.extract_strided_slice %73 {offsets = [0, 0, 0], sizes = [2, 8, 16], strides = [1, 1, 1]} : vector<8x8x16xf32> to vector<2x8x16xf32>
    %75 = vector.shape_cast %74 : vector<2x8x16xf32> to vector<16x16xf32>
    %76 = vector.extract_strided_slice %73 {offsets = [2, 0, 0], sizes = [2, 8, 16], strides = [1, 1, 1]} : vector<8x8x16xf32> to vector<2x8x16xf32>
    %77 = vector.shape_cast %76 : vector<2x8x16xf32> to vector<16x16xf32>
    %78 = vector.extract_strided_slice %73 {offsets = [4, 0, 0], sizes = [2, 8, 16], strides = [1, 1, 1]} : vector<8x8x16xf32> to vector<2x8x16xf32>
    %79 = vector.shape_cast %78 : vector<2x8x16xf32> to vector<16x16xf32>
    %80 = vector.extract_strided_slice %73 {offsets = [6, 0, 0], sizes = [2, 8, 16], strides = [1, 1, 1]} : vector<8x8x16xf32> to vector<2x8x16xf32>
    %81 = vector.shape_cast %80 : vector<2x8x16xf32> to vector<16x16xf32>
    %82 = tpu.concatenate %75, %77, %79, %81 in 1 : vector<16x16xf32>, vector<16x16xf32>, vector<16x16xf32>, vector<16x16xf32> -> vector<16x64xf32>
    %83 = arith.truncf %82 : vector<16x64xf32> to vector<16x64xbf16>
    %c0_23 = arith.constant 0 : index
    %c0_24 = arith.constant 0 : index
    %c0_25 = arith.constant 0 : index
    %84 = vector.load %arg8[%c0_23, %c0_24, %c0_25] : memref<2x64x64xbf16, #tpu.memory_space<vmem>>, vector<1x64x64xbf16>
    %85 = vector.shape_cast %84 : vector<1x64x64xbf16> to vector<64x64xbf16>
    %cst_26 = arith.constant dense<0.000000e+00> : vector<16x64xf32>
    %86 = tpu.matmul %83, %85, %cst_26 {dimension_numbers = #tpu.dot_dimension_numbers<[1], [0], [0], [1], [0, 0, 1, 1], [], []>} : vector<16x64xbf16>, vector<64x64xbf16>, vector<16x64xf32> -> vector<16x64xf32>
    %87 = arith.addf %10, %86 : vector<16x64xf32>
    %c0_27 = arith.constant 0 : index
    %c0_28 = arith.constant 0 : index
    %c0_29 = arith.constant 0 : index
    %88 = vector.load %arg9[%c0_27, %c0_28, %c0_29] : memref<2x1x64xf32, #tpu.memory_space<vmem>>, vector<1x1x64xf32>
    %89 = vector.shape_cast %88 : vector<1x1x64xf32> to vector<1x64xf32>
    %90 = vector.broadcast %89 : vector<1x64xf32> to vector<16x64xf32>
    %91 = arith.addf %87, %90 : vector<16x64xf32>
    %c0_30 = arith.constant 0 : index
    %c0_31 = arith.constant 0 : index
    %c0_32 = arith.constant 0 : index
    %92 = vector.load %arg10[%c0_30, %c0_31, %c0_32] : memref<2x1x64xf32, #tpu.memory_space<vmem>>, vector<1x1x64xf32>
    %93 = vector.shape_cast %92 : vector<1x1x64xf32> to vector<1x64xf32>
    %c0_33 = arith.constant 0 : index
    %c0_34 = arith.constant 0 : index
    %c0_35 = arith.constant 0 : index
    %94 = vector.load %arg11[%c0_33, %c0_34, %c0_35] : memref<2x1x64xf32, #tpu.memory_space<vmem>>, vector<1x1x64xf32>
    %95 = vector.shape_cast %94 : vector<1x1x64xf32> to vector<1x64xf32>
    %cst_36 = arith.constant dense<0.000000e+00> : vector<16xf32>
    %96 = vector.multi_reduction <add>, %91, %cst_36 [1] : vector<16x64xf32> to vector<16xf32>
    %97 = vector.shape_cast %96 : vector<16xf32> to vector<16x1xf32>
    %cst_37 = arith.constant 6.400000e+01 : f32
    %98 = vector.broadcast %cst_37 : f32 to vector<16x1xf32>
    %99 = arith.divf %97, %98 : vector<16x1xf32>
    %100 = vector.broadcast %99 : vector<16x1xf32> to vector<16x64xf32>
    %101 = arith.subf %91, %100 : vector<16x64xf32>
    %102 = arith.mulf %101, %101 : vector<16x64xf32>
    %cst_38 = arith.constant dense<0.000000e+00> : vector<16xf32>
    %103 = vector.multi_reduction <add>, %102, %cst_38 [1] : vector<16x64xf32> to vector<16xf32>
    %104 = vector.shape_cast %103 : vector<16xf32> to vector<16x1xf32>
    %cst_39 = arith.constant 6.400000e+01 : f32
    %105 = vector.broadcast %cst_39 : f32 to vector<16x1xf32>
    %106 = arith.divf %104, %105 : vector<16x1xf32>
    %107 = vector.broadcast %99 : vector<16x1xf32> to vector<16x64xf32>
    %108 = arith.subf %91, %107 : vector<16x64xf32>
    %cst_40 = arith.constant 9.99999997E-7 : f32
    %109 = vector.broadcast %cst_40 : f32 to vector<16x1xf32>
    %110 = arith.addf %106, %109 : vector<16x1xf32>
    %111 = math.rsqrt %110 : vector<16x1xf32>
    %112 = vector.broadcast %111 : vector<16x1xf32> to vector<16x64xf32>
    %113 = arith.mulf %108, %112 : vector<16x64xf32>
    %114 = vector.broadcast %93 : vector<1x64xf32> to vector<16x64xf32>
    %115 = arith.mulf %113, %114 : vector<16x64xf32>
    %116 = vector.broadcast %95 : vector<1x64xf32> to vector<16x64xf32>
    %117 = arith.addf %115, %116 : vector<16x64xf32>
    %118 = arith.truncf %117 : vector<16x64xf32> to vector<16x64xbf16>
    %c0_41 = arith.constant 0 : index
    %c0_42 = arith.constant 0 : index
    %c0_43 = arith.constant 0 : index
    %119 = vector.load %arg12[%c0_41, %c0_42, %c0_43] : memref<2x64x256xbf16, #tpu.memory_space<vmem>>, vector<1x64x256xbf16>
    %120 = vector.shape_cast %119 : vector<1x64x256xbf16> to vector<64x256xbf16>
    %cst_44 = arith.constant dense<0.000000e+00> : vector<16x256xf32>
    %121 = tpu.matmul %118, %120, %cst_44 {dimension_numbers = #tpu.dot_dimension_numbers<[1], [0], [0], [1], [0, 0, 1, 1], [], []>} : vector<16x64xbf16>, vector<64x256xbf16>, vector<16x256xf32> -> vector<16x256xf32>
    %c0_45 = arith.constant 0 : index
    %c0_46 = arith.constant 0 : index
    %c0_47 = arith.constant 0 : index
    %122 = vector.load %arg13[%c0_45, %c0_46, %c0_47] : memref<2x1x256xf32, #tpu.memory_space<vmem>>, vector<1x1x256xf32>
    %123 = vector.shape_cast %122 : vector<1x1x256xf32> to vector<1x256xf32>
    %124 = vector.broadcast %123 : vector<1x256xf32> to vector<16x256xf32>
    %125 = arith.addf %121, %124 : vector<16x256xf32>
    %cst_48 = arith.constant 5.000000e-01 : f32
    %126 = vector.broadcast %cst_48 : f32 to vector<16x256xf32>
    %127 = arith.mulf %126, %125 : vector<16x256xf32>
    %cst_49 = arith.constant 0.707106769 : f32
    %128 = vector.broadcast %cst_49 : f32 to vector<16x256xf32>
    %129 = arith.mulf %125, %128 : vector<16x256xf32>
    %130 = math.erf %129 : vector<16x256xf32>
    %cst_50 = arith.constant 1.000000e+00 : f32
    %131 = vector.broadcast %cst_50 : f32 to vector<16x256xf32>
    %132 = arith.addf %131, %130 : vector<16x256xf32>
    %133 = arith.mulf %127, %132 : vector<16x256xf32>
    %134 = arith.truncf %133 : vector<16x256xf32> to vector<16x256xbf16>
    %c0_51 = arith.constant 0 : index
    %c0_52 = arith.constant 0 : index
    %c0_53 = arith.constant 0 : index
    %135 = vector.load %arg14[%c0_51, %c0_52, %c0_53] : memref<2x256x64xbf16, #tpu.memory_space<vmem>>, vector<1x256x64xbf16>
    %136 = vector.shape_cast %135 : vector<1x256x64xbf16> to vector<256x64xbf16>
    %cst_54 = arith.constant dense<0.000000e+00> : vector<16x64xf32>
    %137 = tpu.matmul %134, %136, %cst_54 {dimension_numbers = #tpu.dot_dimension_numbers<[1], [0], [0], [1], [0, 0, 1, 1], [], []>} : vector<16x256xbf16>, vector<256x64xbf16>, vector<16x64xf32> -> vector<16x64xf32>
    %c0_55 = arith.constant 0 : index
    %c0_56 = arith.constant 0 : index
    %c0_57 = arith.constant 0 : index
    %138 = vector.load %arg15[%c0_55, %c0_56, %c0_57] : memref<2x1x64xf32, #tpu.memory_space<vmem>>, vector<1x1x64xf32>
    %139 = vector.shape_cast %138 : vector<1x1x64xf32> to vector<1x64xf32>
    %140 = vector.broadcast %139 : vector<1x64xf32> to vector<16x64xf32>
    %141 = arith.addf %137, %140 : vector<16x64xf32>
    %142 = arith.addf %117, %141 : vector<16x64xf32>
    %c0_58 = arith.constant 0 : index
    %c0_59 = arith.constant 0 : index
    %c0_60 = arith.constant 0 : index
    %143 = vector.load %arg16[%c0_58, %c0_59, %c0_60] : memref<2x1x64xf32, #tpu.memory_space<vmem>>, vector<1x1x64xf32>
    %144 = vector.shape_cast %143 : vector<1x1x64xf32> to vector<1x64xf32>
    %c0_61 = arith.constant 0 : index
    %c0_62 = arith.constant 0 : index
    %c0_63 = arith.constant 0 : index
    %145 = vector.load %arg17[%c0_61, %c0_62, %c0_63] : memref<2x1x64xf32, #tpu.memory_space<vmem>>, vector<1x1x64xf32>
    %146 = vector.shape_cast %145 : vector<1x1x64xf32> to vector<1x64xf32>
    %cst_64 = arith.constant dense<0.000000e+00> : vector<16xf32>
    %147 = vector.multi_reduction <add>, %142, %cst_64 [1] : vector<16x64xf32> to vector<16xf32>
    %148 = vector.shape_cast %147 : vector<16xf32> to vector<16x1xf32>
    %cst_65 = arith.constant 6.400000e+01 : f32
    %149 = vector.broadcast %cst_65 : f32 to vector<16x1xf32>
    %150 = arith.divf %148, %149 : vector<16x1xf32>
    %151 = vector.broadcast %150 : vector<16x1xf32> to vector<16x64xf32>
    %152 = arith.subf %142, %151 : vector<16x64xf32>
    %153 = arith.mulf %152, %152 : vector<16x64xf32>
    %cst_66 = arith.constant dense<0.000000e+00> : vector<16xf32>
    %154 = vector.multi_reduction <add>, %153, %cst_66 [1] : vector<16x64xf32> to vector<16xf32>
    %155 = vector.shape_cast %154 : vector<16xf32> to vector<16x1xf32>
    %cst_67 = arith.constant 6.400000e+01 : f32
    %156 = vector.broadcast %cst_67 : f32 to vector<16x1xf32>
    %157 = arith.divf %155, %156 : vector<16x1xf32>
    %158 = vector.broadcast %150 : vector<16x1xf32> to vector<16x64xf32>
    %159 = arith.subf %142, %158 : vector<16x64xf32>
    %cst_68 = arith.constant 9.99999997E-7 : f32
    %160 = vector.broadcast %cst_68 : f32 to vector<16x1xf32>
    %161 = arith.addf %157, %160 : vector<16x1xf32>
    %162 = math.rsqrt %161 : vector<16x1xf32>
    %163 = vector.broadcast %162 : vector<16x1xf32> to vector<16x64xf32>
    %164 = arith.mulf %159, %163 : vector<16x64xf32>
    %165 = vector.broadcast %144 : vector<1x64xf32> to vector<16x64xf32>
    %166 = arith.mulf %164, %165 : vector<16x64xf32>
    %167 = vector.broadcast %146 : vector<1x64xf32> to vector<16x64xf32>
    %168 = arith.addf %166, %167 : vector<16x64xf32>
    %169 = arith.truncf %168 : vector<16x64xf32> to vector<16x64xbf16>
    %c1 = arith.constant 1 : index
    %c0_69 = arith.constant 0 : index
    %c0_70 = arith.constant 0 : index
    %170 = vector.load %arg6[%c1, %c0_69, %c0_70] : memref<2x64x192xbf16, #tpu.memory_space<vmem>>, vector<1x64x192xbf16>
    %171 = vector.shape_cast %170 : vector<1x64x192xbf16> to vector<64x192xbf16>
    %cst_71 = arith.constant dense<0.000000e+00> : vector<16x192xf32>
    %172 = tpu.matmul %169, %171, %cst_71 {dimension_numbers = #tpu.dot_dimension_numbers<[1], [0], [0], [1], [0, 0, 1, 1], [], []>} : vector<16x64xbf16>, vector<64x192xbf16>, vector<16x192xf32> -> vector<16x192xf32>
    %c1_72 = arith.constant 1 : index
    %c0_73 = arith.constant 0 : index
    %c0_74 = arith.constant 0 : index
    %173 = vector.load %arg7[%c1_72, %c0_73, %c0_74] : memref<2x1x192xf32, #tpu.memory_space<vmem>>, vector<1x1x192xf32>
    %174 = vector.shape_cast %173 : vector<1x1x192xf32> to vector<1x192xf32>
    %175 = vector.broadcast %174 : vector<1x192xf32> to vector<16x192xf32>
    %176 = arith.addf %172, %175 : vector<16x192xf32>
    %177 = vector.extract_strided_slice %176 {offsets = [0, 0], sizes = [16, 16], strides = [1, 1]} : vector<16x192xf32> to vector<16x16xf32>
    %178 = vector.extract_strided_slice %176 {offsets = [0, 16], sizes = [16, 16], strides = [1, 1]} : vector<16x192xf32> to vector<16x16xf32>
    %179 = vector.extract_strided_slice %176 {offsets = [0, 32], sizes = [16, 16], strides = [1, 1]} : vector<16x192xf32> to vector<16x16xf32>
    %180 = vector.extract_strided_slice %176 {offsets = [0, 48], sizes = [16, 16], strides = [1, 1]} : vector<16x192xf32> to vector<16x16xf32>
    %181 = vector.shape_cast %177 : vector<16x16xf32> to vector<1x16x16xf32>
    %182 = vector.shape_cast %178 : vector<16x16xf32> to vector<1x16x16xf32>
    %183 = vector.shape_cast %179 : vector<16x16xf32> to vector<1x16x16xf32>
    %184 = vector.shape_cast %180 : vector<16x16xf32> to vector<1x16x16xf32>
    %185 = tpu.concatenate %181, %182, %183, %184 in 0 : vector<1x16x16xf32>, vector<1x16x16xf32>, vector<1x16x16xf32>, vector<1x16x16xf32> -> vector<4x16x16xf32>
    %186 = vector.shape_cast %185 : vector<4x16x16xf32> to vector<8x8x16xf32>
    %187 = arith.truncf %186 : vector<8x8x16xf32> to vector<8x8x16xbf16>
    %188 = vector.extract_strided_slice %176 {offsets = [0, 64], sizes = [16, 16], strides = [1, 1]} : vector<16x192xf32> to vector<16x16xf32>
    %189 = vector.extract_strided_slice %176 {offsets = [0, 80], sizes = [16, 16], strides = [1, 1]} : vector<16x192xf32> to vector<16x16xf32>
    %190 = vector.extract_strided_slice %176 {offsets = [0, 96], sizes = [16, 16], strides = [1, 1]} : vector<16x192xf32> to vector<16x16xf32>
    %191 = vector.extract_strided_slice %176 {offsets = [0, 112], sizes = [16, 16], strides = [1, 1]} : vector<16x192xf32> to vector<16x16xf32>
    %192 = vector.shape_cast %188 : vector<16x16xf32> to vector<1x16x16xf32>
    %193 = vector.shape_cast %189 : vector<16x16xf32> to vector<1x16x16xf32>
    %194 = vector.shape_cast %190 : vector<16x16xf32> to vector<1x16x16xf32>
    %195 = vector.shape_cast %191 : vector<16x16xf32> to vector<1x16x16xf32>
    %196 = tpu.concatenate %192, %193, %194, %195 in 0 : vector<1x16x16xf32>, vector<1x16x16xf32>, vector<1x16x16xf32>, vector<1x16x16xf32> -> vector<4x16x16xf32>
    %197 = vector.shape_cast %196 : vector<4x16x16xf32> to vector<8x8x16xf32>
    %198 = arith.truncf %197 : vector<8x8x16xf32> to vector<8x8x16xbf16>
    %199 = vector.extract_strided_slice %176 {offsets = [0, 128], sizes = [16, 16], strides = [1, 1]} : vector<16x192xf32> to vector<16x16xf32>
    %200 = vector.extract_strided_slice %176 {offsets = [0, 144], sizes = [16, 16], strides = [1, 1]} : vector<16x192xf32> to vector<16x16xf32>
    %201 = vector.extract_strided_slice %176 {offsets = [0, 160], sizes = [16, 16], strides = [1, 1]} : vector<16x192xf32> to vector<16x16xf32>
    %202 = vector.extract_strided_slice %176 {offsets = [0, 176], sizes = [16, 16], strides = [1, 1]} : vector<16x192xf32> to vector<16x16xf32>
    %203 = vector.shape_cast %199 : vector<16x16xf32> to vector<1x16x16xf32>
    %204 = vector.shape_cast %200 : vector<16x16xf32> to vector<1x16x16xf32>
    %205 = vector.shape_cast %201 : vector<16x16xf32> to vector<1x16x16xf32>
    %206 = vector.shape_cast %202 : vector<16x16xf32> to vector<1x16x16xf32>
    %207 = tpu.concatenate %203, %204, %205, %206 in 0 : vector<1x16x16xf32>, vector<1x16x16xf32>, vector<1x16x16xf32>, vector<1x16x16xf32> -> vector<4x16x16xf32>
    %208 = vector.shape_cast %207 : vector<4x16x16xf32> to vector<8x8x16xf32>
    %209 = arith.truncf %208 : vector<8x8x16xf32> to vector<8x8x16xbf16>
    "tpu.trace_start"() <{level = 10 : i32, message = "bnd,bmd->bnm"}> : () -> ()
    %cst_75 = arith.constant dense<0.000000e+00> : vector<8x8x8xf32>
    %210 = tpu.matmul %187, %198, %cst_75 {dimension_numbers = #tpu.dot_dimension_numbers<[2], [2], [1], [1], [0, 0, 0, 1, 1, 1], [0], [0]>} : vector<8x8x16xbf16>, vector<8x8x16xbf16>, vector<8x8x8xf32> -> vector<8x8x8xf32>
    "tpu.trace_stop"() : () -> ()
    %211 = vector.shape_cast %16 : vector<8x8xf32> to vector<1x8x8xf32>
    %212 = vector.broadcast %211 : vector<1x8x8xf32> to vector<8x8x8xf32>
    %213 = arith.addf %210, %212 : vector<8x8x8xf32>
    %cst_76 = arith.constant dense<0xFF800000> : vector<8x8xf32>
    %214 = vector.multi_reduction <maximumf>, %213, %cst_76 [2] : vector<8x8x8xf32> to vector<8x8xf32>
    %215 = vector.shape_cast %214 : vector<8x8xf32> to vector<8x8x1xf32>
    %216 = vector.broadcast %215 : vector<8x8x1xf32> to vector<8x8x8xf32>
    %217 = arith.subf %213, %216 : vector<8x8x8xf32>
    %218 = math.exp %217 : vector<8x8x8xf32>
    %cst_77 = arith.constant dense<0.000000e+00> : vector<8x8xf32>
    %219 = vector.multi_reduction <add>, %218, %cst_77 [2] : vector<8x8x8xf32> to vector<8x8xf32>
    %220 = vector.shape_cast %219 : vector<8x8xf32> to vector<8x8x1xf32>
    %221 = tpu.reciprocal %220 {approx = true} : vector<8x8x1xf32> -> vector<8x8x1xf32>
    %222 = vector.broadcast %221 : vector<8x8x1xf32> to vector<8x8x8xf32>
    %223 = arith.mulf %218, %222 : vector<8x8x8xf32>
    %224 = arith.truncf %223 : vector<8x8x8xf32> to vector<8x8x8xbf16>
    "tpu.trace_start"() <{level = 10 : i32, message = "bnm,bmd->bnd"}> : () -> ()
    %cst_78 = arith.constant dense<0.000000e+00> : vector<8x8x16xf32>
    %225 = tpu.matmul %224, %209, %cst_78 {dimension_numbers = #tpu.dot_dimension_numbers<[2], [1], [1], [2], [0, 0, 0, 1, 1, 2], [0], [0]>} : vector<8x8x8xbf16>, vector<8x8x16xbf16>, vector<8x8x16xf32> -> vector<8x8x16xf32>
    "tpu.trace_stop"() : () -> ()
    %226 = vector.extract_strided_slice %225 {offsets = [0, 0, 0], sizes = [2, 8, 16], strides = [1, 1, 1]} : vector<8x8x16xf32> to vector<2x8x16xf32>
    %227 = vector.shape_cast %226 : vector<2x8x16xf32> to vector<16x16xf32>
    %228 = vector.extract_strided_slice %225 {offsets = [2, 0, 0], sizes = [2, 8, 16], strides = [1, 1, 1]} : vector<8x8x16xf32> to vector<2x8x16xf32>
    %229 = vector.shape_cast %228 : vector<2x8x16xf32> to vector<16x16xf32>
    %230 = vector.extract_strided_slice %225 {offsets = [4, 0, 0], sizes = [2, 8, 16], strides = [1, 1, 1]} : vector<8x8x16xf32> to vector<2x8x16xf32>
    %231 = vector.shape_cast %230 : vector<2x8x16xf32> to vector<16x16xf32>
    %232 = vector.extract_strided_slice %225 {offsets = [6, 0, 0], sizes = [2, 8, 16], strides = [1, 1, 1]} : vector<8x8x16xf32> to vector<2x8x16xf32>
    %233 = vector.shape_cast %232 : vector<2x8x16xf32> to vector<16x16xf32>
    %234 = tpu.concatenate %227, %229, %231, %233 in 1 : vector<16x16xf32>, vector<16x16xf32>, vector<16x16xf32>, vector<16x16xf32> -> vector<16x64xf32>
    %235 = arith.truncf %234 : vector<16x64xf32> to vector<16x64xbf16>
    %c1_79 = arith.constant 1 : index
    %c0_80 = arith.constant 0 : index
    %c0_81 = arith.constant 0 : index
    %236 = vector.load %arg8[%c1_79, %c0_80, %c0_81] : memref<2x64x64xbf16, #tpu.memory_space<vmem>>, vector<1x64x64xbf16>
    %237 = vector.shape_cast %236 : vector<1x64x64xbf16> to vector<64x64xbf16>
    %cst_82 = arith.constant dense<0.000000e+00> : vector<16x64xf32>
    %238 = tpu.matmul %235, %237, %cst_82 {dimension_numbers = #tpu.dot_dimension_numbers<[1], [0], [0], [1], [0, 0, 1, 1], [], []>} : vector<16x64xbf16>, vector<64x64xbf16>, vector<16x64xf32> -> vector<16x64xf32>
    %239 = arith.addf %168, %238 : vector<16x64xf32>
    %c1_83 = arith.constant 1 : index
    %c0_84 = arith.constant 0 : index
    %c0_85 = arith.constant 0 : index
    %240 = vector.load %arg9[%c1_83, %c0_84, %c0_85] : memref<2x1x64xf32, #tpu.memory_space<vmem>>, vector<1x1x64xf32>
    %241 = vector.shape_cast %240 : vector<1x1x64xf32> to vector<1x64xf32>
    %242 = vector.broadcast %241 : vector<1x64xf32> to vector<16x64xf32>
    %243 = arith.addf %239, %242 : vector<16x64xf32>
    %c1_86 = arith.constant 1 : index
    %c0_87 = arith.constant 0 : index
    %c0_88 = arith.constant 0 : index
    %244 = vector.load %arg10[%c1_86, %c0_87, %c0_88] : memref<2x1x64xf32, #tpu.memory_space<vmem>>, vector<1x1x64xf32>
    %245 = vector.shape_cast %244 : vector<1x1x64xf32> to vector<1x64xf32>
    %c1_89 = arith.constant 1 : index
    %c0_90 = arith.constant 0 : index
    %c0_91 = arith.constant 0 : index
    %246 = vector.load %arg11[%c1_89, %c0_90, %c0_91] : memref<2x1x64xf32, #tpu.memory_space<vmem>>, vector<1x1x64xf32>
    %247 = vector.shape_cast %246 : vector<1x1x64xf32> to vector<1x64xf32>
    %cst_92 = arith.constant dense<0.000000e+00> : vector<16xf32>
    %248 = vector.multi_reduction <add>, %243, %cst_92 [1] : vector<16x64xf32> to vector<16xf32>
    %249 = vector.shape_cast %248 : vector<16xf32> to vector<16x1xf32>
    %cst_93 = arith.constant 6.400000e+01 : f32
    %250 = vector.broadcast %cst_93 : f32 to vector<16x1xf32>
    %251 = arith.divf %249, %250 : vector<16x1xf32>
    %252 = vector.broadcast %251 : vector<16x1xf32> to vector<16x64xf32>
    %253 = arith.subf %243, %252 : vector<16x64xf32>
    %254 = arith.mulf %253, %253 : vector<16x64xf32>
    %cst_94 = arith.constant dense<0.000000e+00> : vector<16xf32>
    %255 = vector.multi_reduction <add>, %254, %cst_94 [1] : vector<16x64xf32> to vector<16xf32>
    %256 = vector.shape_cast %255 : vector<16xf32> to vector<16x1xf32>
    %cst_95 = arith.constant 6.400000e+01 : f32
    %257 = vector.broadcast %cst_95 : f32 to vector<16x1xf32>
    %258 = arith.divf %256, %257 : vector<16x1xf32>
    %259 = vector.broadcast %251 : vector<16x1xf32> to vector<16x64xf32>
    %260 = arith.subf %243, %259 : vector<16x64xf32>
    %cst_96 = arith.constant 9.99999997E-7 : f32
    %261 = vector.broadcast %cst_96 : f32 to vector<16x1xf32>
    %262 = arith.addf %258, %261 : vector<16x1xf32>
    %263 = math.rsqrt %262 : vector<16x1xf32>
    %264 = vector.broadcast %263 : vector<16x1xf32> to vector<16x64xf32>
    %265 = arith.mulf %260, %264 : vector<16x64xf32>
    %266 = vector.broadcast %245 : vector<1x64xf32> to vector<16x64xf32>
    %267 = arith.mulf %265, %266 : vector<16x64xf32>
    %268 = vector.broadcast %247 : vector<1x64xf32> to vector<16x64xf32>
    %269 = arith.addf %267, %268 : vector<16x64xf32>
    %270 = arith.truncf %269 : vector<16x64xf32> to vector<16x64xbf16>
    %c1_97 = arith.constant 1 : index
    %c0_98 = arith.constant 0 : index
    %c0_99 = arith.constant 0 : index
    %271 = vector.load %arg12[%c1_97, %c0_98, %c0_99] : memref<2x64x256xbf16, #tpu.memory_space<vmem>>, vector<1x64x256xbf16>
    %272 = vector.shape_cast %271 : vector<1x64x256xbf16> to vector<64x256xbf16>
    %cst_100 = arith.constant dense<0.000000e+00> : vector<16x256xf32>
    %273 = tpu.matmul %270, %272, %cst_100 {dimension_numbers = #tpu.dot_dimension_numbers<[1], [0], [0], [1], [0, 0, 1, 1], [], []>} : vector<16x64xbf16>, vector<64x256xbf16>, vector<16x256xf32> -> vector<16x256xf32>
    %c1_101 = arith.constant 1 : index
    %c0_102 = arith.constant 0 : index
    %c0_103 = arith.constant 0 : index
    %274 = vector.load %arg13[%c1_101, %c0_102, %c0_103] : memref<2x1x256xf32, #tpu.memory_space<vmem>>, vector<1x1x256xf32>
    %275 = vector.shape_cast %274 : vector<1x1x256xf32> to vector<1x256xf32>
    %276 = vector.broadcast %275 : vector<1x256xf32> to vector<16x256xf32>
    %277 = arith.addf %273, %276 : vector<16x256xf32>
    %cst_104 = arith.constant 5.000000e-01 : f32
    %278 = vector.broadcast %cst_104 : f32 to vector<16x256xf32>
    %279 = arith.mulf %278, %277 : vector<16x256xf32>
    %cst_105 = arith.constant 0.707106769 : f32
    %280 = vector.broadcast %cst_105 : f32 to vector<16x256xf32>
    %281 = arith.mulf %277, %280 : vector<16x256xf32>
    %282 = math.erf %281 : vector<16x256xf32>
    %cst_106 = arith.constant 1.000000e+00 : f32
    %283 = vector.broadcast %cst_106 : f32 to vector<16x256xf32>
    %284 = arith.addf %283, %282 : vector<16x256xf32>
    %285 = arith.mulf %279, %284 : vector<16x256xf32>
    %286 = arith.truncf %285 : vector<16x256xf32> to vector<16x256xbf16>
    %c1_107 = arith.constant 1 : index
    %c0_108 = arith.constant 0 : index
    %c0_109 = arith.constant 0 : index
    %287 = vector.load %arg14[%c1_107, %c0_108, %c0_109] : memref<2x256x64xbf16, #tpu.memory_space<vmem>>, vector<1x256x64xbf16>
    %288 = vector.shape_cast %287 : vector<1x256x64xbf16> to vector<256x64xbf16>
    %cst_110 = arith.constant dense<0.000000e+00> : vector<16x64xf32>
    %289 = tpu.matmul %286, %288, %cst_110 {dimension_numbers = #tpu.dot_dimension_numbers<[1], [0], [0], [1], [0, 0, 1, 1], [], []>} : vector<16x256xbf16>, vector<256x64xbf16>, vector<16x64xf32> -> vector<16x64xf32>
    %c1_111 = arith.constant 1 : index
    %c0_112 = arith.constant 0 : index
    %c0_113 = arith.constant 0 : index
    %290 = vector.load %arg15[%c1_111, %c0_112, %c0_113] : memref<2x1x64xf32, #tpu.memory_space<vmem>>, vector<1x1x64xf32>
    %291 = vector.shape_cast %290 : vector<1x1x64xf32> to vector<1x64xf32>
    %292 = vector.broadcast %291 : vector<1x64xf32> to vector<16x64xf32>
    %293 = arith.addf %289, %292 : vector<16x64xf32>
    %294 = arith.addf %269, %293 : vector<16x64xf32>
    %c1_114 = arith.constant 1 : index
    %c0_115 = arith.constant 0 : index
    %c0_116 = arith.constant 0 : index
    %295 = vector.load %arg16[%c1_114, %c0_115, %c0_116] : memref<2x1x64xf32, #tpu.memory_space<vmem>>, vector<1x1x64xf32>
    %296 = vector.shape_cast %295 : vector<1x1x64xf32> to vector<1x64xf32>
    %c1_117 = arith.constant 1 : index
    %c0_118 = arith.constant 0 : index
    %c0_119 = arith.constant 0 : index
    %297 = vector.load %arg17[%c1_117, %c0_118, %c0_119] : memref<2x1x64xf32, #tpu.memory_space<vmem>>, vector<1x1x64xf32>
    %298 = vector.shape_cast %297 : vector<1x1x64xf32> to vector<1x64xf32>
    %cst_120 = arith.constant dense<0.000000e+00> : vector<16xf32>
    %299 = vector.multi_reduction <add>, %294, %cst_120 [1] : vector<16x64xf32> to vector<16xf32>
    %300 = vector.shape_cast %299 : vector<16xf32> to vector<16x1xf32>
    %cst_121 = arith.constant 6.400000e+01 : f32
    %301 = vector.broadcast %cst_121 : f32 to vector<16x1xf32>
    %302 = arith.divf %300, %301 : vector<16x1xf32>
    %303 = vector.broadcast %302 : vector<16x1xf32> to vector<16x64xf32>
    %304 = arith.subf %294, %303 : vector<16x64xf32>
    %305 = arith.mulf %304, %304 : vector<16x64xf32>
    %cst_122 = arith.constant dense<0.000000e+00> : vector<16xf32>
    %306 = vector.multi_reduction <add>, %305, %cst_122 [1] : vector<16x64xf32> to vector<16xf32>
    %307 = vector.shape_cast %306 : vector<16xf32> to vector<16x1xf32>
    %cst_123 = arith.constant 6.400000e+01 : f32
    %308 = vector.broadcast %cst_123 : f32 to vector<16x1xf32>
    %309 = arith.divf %307, %308 : vector<16x1xf32>
    %310 = vector.broadcast %302 : vector<16x1xf32> to vector<16x64xf32>
    %311 = arith.subf %294, %310 : vector<16x64xf32>
    %cst_124 = arith.constant 9.99999997E-7 : f32
    %312 = vector.broadcast %cst_124 : f32 to vector<16x1xf32>
    %313 = arith.addf %309, %312 : vector<16x1xf32>
    %314 = math.rsqrt %313 : vector<16x1xf32>
    %315 = vector.broadcast %314 : vector<16x1xf32> to vector<16x64xf32>
    %316 = arith.mulf %311, %315 : vector<16x64xf32>
    %317 = vector.broadcast %296 : vector<1x64xf32> to vector<16x64xf32>
    %318 = arith.mulf %316, %317 : vector<16x64xf32>
    %319 = vector.broadcast %298 : vector<1x64xf32> to vector<16x64xf32>
    %320 = arith.addf %318, %319 : vector<16x64xf32>
    %c0_125 = arith.constant 0 : index
    %c0_126 = arith.constant 0 : index
    %321 = vector.load %arg18[%c0_125, %c0_126] : memref<1x64xf32, #tpu.memory_space<vmem>>, vector<1x64xf32>
    %c0_127 = arith.constant 0 : index
    %c0_128 = arith.constant 0 : index
    %322 = vector.load %arg19[%c0_127, %c0_128] : memref<1x64xf32, #tpu.memory_space<vmem>>, vector<1x64xf32>
    %cst_129 = arith.constant dense<0.000000e+00> : vector<16xf32>
    %323 = vector.multi_reduction <add>, %320, %cst_129 [1] : vector<16x64xf32> to vector<16xf32>
    %324 = vector.shape_cast %323 : vector<16xf32> to vector<16x1xf32>
    %cst_130 = arith.constant 6.400000e+01 : f32
    %325 = vector.broadcast %cst_130 : f32 to vector<16x1xf32>
    %326 = arith.divf %324, %325 : vector<16x1xf32>
    %327 = vector.broadcast %326 : vector<16x1xf32> to vector<16x64xf32>
    %328 = arith.subf %320, %327 : vector<16x64xf32>
    %329 = arith.mulf %328, %328 : vector<16x64xf32>
    %cst_131 = arith.constant dense<0.000000e+00> : vector<16xf32>
    %330 = vector.multi_reduction <add>, %329, %cst_131 [1] : vector<16x64xf32> to vector<16xf32>
    %331 = vector.shape_cast %330 : vector<16xf32> to vector<16x1xf32>
    %cst_132 = arith.constant 6.400000e+01 : f32
    %332 = vector.broadcast %cst_132 : f32 to vector<16x1xf32>
    %333 = arith.divf %331, %332 : vector<16x1xf32>
    %334 = vector.broadcast %326 : vector<16x1xf32> to vector<16x64xf32>
    %335 = arith.subf %320, %334 : vector<16x64xf32>
    %cst_133 = arith.constant 9.99999997E-7 : f32
    %336 = vector.broadcast %cst_133 : f32 to vector<16x1xf32>
    %337 = arith.addf %333, %336 : vector<16x1xf32>
    %338 = math.rsqrt %337 : vector<16x1xf32>
    %339 = vector.broadcast %338 : vector<16x1xf32> to vector<16x64xf32>
    %340 = arith.mulf %335, %339 : vector<16x64xf32>
    %341 = vector.broadcast %321 : vector<1x64xf32> to vector<16x64xf32>
    %342 = arith.mulf %340, %341 : vector<16x64xf32>
    %343 = vector.broadcast %322 : vector<1x64xf32> to vector<16x64xf32>
    %344 = arith.addf %342, %343 : vector<16x64xf32>
    %345 = vector.shape_cast %344 : vector<16x64xf32> to vector<8x2x64xf32>
    %346 = vector.extract_strided_slice %345 {offsets = [0, 0, 0], sizes = [8, 1, 64], strides = [1, 1, 1]} : vector<8x2x64xf32> to vector<8x1x64xf32>
    %347 = vector.shape_cast %346 : vector<8x1x64xf32> to vector<8x64xf32>
    %348 = vector.extract_strided_slice %345 {offsets = [0, 1, 0], sizes = [8, 1, 64], strides = [1, 1, 1]} : vector<8x2x64xf32> to vector<8x1x64xf32>
    %349 = vector.shape_cast %348 : vector<8x1x64xf32> to vector<8x64xf32>
    %350 = tpu.concatenate %347, %349 in 1 : vector<8x64xf32>, vector<8x64xf32> -> vector<8x128xf32>
    %c0_134 = arith.constant 0 : index
    %c0_135 = arith.constant 0 : index
    %351 = vector.load %arg20[%c0_134, %c0_135] : memref<8x128xf32, #tpu.memory_space<vmem>>, vector<8x128xf32>
    tpu.vector_store %arg20[%c0_134, %c0_135], %350 {strides = array<i32>} : memref<8x128xf32, #tpu.memory_space<vmem>>, vector<8x128xf32>,
    return
  }
  func.func @transform_0(%arg0: i32) -> (i32, i32) {
    %c0_i32 = arith.constant 0 : i32
    %c0_i32_0 = arith.constant 0 : i32
    %c0_i32_1 = arith.constant 0 : i32
    return %c0_i32, %c0_i32_0 : i32, i32
  }
  func.func @transform_1(%arg0: i32) -> (i32, i32) {
    %c0_i32 = arith.constant 0 : i32
    %c0_i32_0 = arith.constant 0 : i32
    %c0_i32_1 = arith.constant 0 : i32
    return %c0_i32, %c0_i32_0 : i32, i32
  }
  func.func @transform_2(%arg0: i32) -> (i32, i32) {
    %c0_i32 = arith.constant 0 : i32
    %c0_i32_0 = arith.constant 0 : i32
    %c0_i32_1 = arith.constant 0 : i32
    return %c0_i32, %c0_i32_0 : i32, i32
  }
  func.func @transform_3(%arg0: i32) -> (i32, i32) {
    %c0_i32 = arith.constant 0 : i32
    %c0_i32_0 = arith.constant 0 : i32
    return %arg0, %c0_i32 : i32, i32
  }
  func.func @transform_4(%arg0: i32) -> (i32, i32) {
    %c0_i32 = arith.constant 0 : i32
    %c0_i32_0 = arith.constant 0 : i32
    return %arg0, %c0_i32 : i32, i32
  }
  func.func @transform_5(%arg0: i32) -> (i32, i32, i32) {
    %c0_i32 = arith.constant 0 : i32
    %c0_i32_0 = arith.constant 0 : i32
    %c0_i32_1 = arith.constant 0 : i32
    %c0_i32_2 = arith.constant 0 : i32
    return %c0_i32, %c0_i32_0, %c0_i32_1 : i32, i32, i32
  }
  func.func @transform_6(%arg0: i32) -> (i32, i32, i32) {
    %c0_i32 = arith.constant 0 : i32
    %c0_i32_0 = arith.constant 0 : i32
    %c0_i32_1 = arith.constant 0 : i32
    %c0_i32_2 = arith.constant 0 : i32
    return %c0_i32, %c0_i32_0, %c0_i32_1 : i32, i32, i32
  }
  func.func @transform_7(%arg0: i32) -> (i32, i32, i32) {
    %c0_i32 = arith.constant 0 : i32
    %c0_i32_0 = arith.constant 0 : i32
    %c0_i32_1 = arith.constant 0 : i32
    %c0_i32_2 = arith.constant 0 : i32
    return %c0_i32, %c0_i32_0, %c0_i32_1 : i32, i32, i32
  }
  func.func @transform_8(%arg0: i32) -> (i32, i32, i32) {
    %c0_i32 = arith.constant 0 : i32
    %c0_i32_0 = arith.constant 0 : i32
    %c0_i32_1 = arith.constant 0 : i32
    %c0_i32_2 = arith.constant 0 : i32
    return %c0_i32, %c0_i32_0, %c0_i32_1 : i32, i32, i32
  }
  func.func @transform_9(%arg0: i32) -> (i32, i32, i32) {
    %c0_i32 = arith.constant 0 : i32
    %c0_i32_0 = arith.constant 0 : i32
    %c0_i32_1 = arith.constant 0 : i32
    %c0_i32_2 = arith.constant 0 : i32
    return %c0_i32, %c0_i32_0, %c0_i32_1 : i32, i32, i32
  }
  func.func @transform_10(%arg0: i32) -> (i32, i32, i32) {
    %c0_i32 = arith.constant 0 : i32
    %c0_i32_0 = arith.constant 0 : i32
    %c0_i32_1 = arith.constant 0 : i32
    %c0_i32_2 = arith.constant 0 : i32
    return %c0_i32, %c0_i32_0, %c0_i32_1 : i32, i32, i32
  }
  func.func @transform_11(%arg0: i32) -> (i32, i32, i32) {
    %c0_i32 = arith.constant 0 : i32
    %c0_i32_0 = arith.constant 0 : i32
    %c0_i32_1 = arith.constant 0 : i32
    %c0_i32_2 = arith.constant 0 : i32
    return %c0_i32, %c0_i32_0, %c0_i32_1 : i32, i32, i32
  }
  func.func @transform_12(%arg0: i32) -> (i32, i32, i32) {
    %c0_i32 = arith.constant 0 : i32
    %c0_i32_0 = arith.constant 0 : i32
    %c0_i32_1 = arith.constant 0 : i32
    %c0_i32_2 = arith.constant 0 : i32
    return %c0_i32, %c0_i32_0, %c0_i32_1 : i32, i32, i32
  }
  func.func @transform_13(%arg0: i32) -> (i32, i32, i32) {
    %c0_i32 = arith.constant 0 : i32
    %c0_i32_0 = arith.constant 0 : i32
    %c0_i32_1 = arith.constant 0 : i32
    %c0_i32_2 = arith.constant 0 : i32
    return %c0_i32, %c0_i32_0, %c0_i32_1 : i32, i32, i32
  }
  func.func @transform_14(%arg0: i32) -> (i32, i32, i32) {
    %c0_i32 = arith.constant 0 : i32
    %c0_i32_0 = arith.constant 0 : i32
    %c0_i32_1 = arith.constant 0 : i32
    %c0_i32_2 = arith.constant 0 : i32
    return %c0_i32, %c0_i32_0, %c0_i32_1 : i32, i32, i32
  }
  func.func @transform_15(%arg0: i32) -> (i32, i32, i32) {
    %c0_i32 = arith.constant 0 : i32
    %c0_i32_0 = arith.constant 0 : i32
    %c0_i32_1 = arith.constant 0 : i32
    %c0_i32_2 = arith.constant 0 : i32
    return %c0_i32, %c0_i32_0, %c0_i32_1 : i32, i32, i32
  }
  func.func @transform_16(%arg0: i32) -> (i32, i32, i32) {
    %c0_i32 = arith.constant 0 : i32
    %c0_i32_0 = arith.constant 0 : i32
    %c0_i32_1 = arith.constant 0 : i32
    %c0_i32_2 = arith.constant 0 : i32
    return %c0_i32, %c0_i32_0, %c0_i32_1 : i32, i32, i32
  }
  func.func @transform_17(%arg0: i32) -> (i32, i32) {
    %c0_i32 = arith.constant 0 : i32
    %c0_i32_0 = arith.constant 0 : i32
    %c0_i32_1 = arith.constant 0 : i32
    return %c0_i32, %c0_i32_0 : i32, i32
  }
  func.func @transform_18(%arg0: i32) -> (i32, i32) {
    %c0_i32 = arith.constant 0 : i32
    %c0_i32_0 = arith.constant 0 : i32
    %c0_i32_1 = arith.constant 0 : i32
    return %c0_i32, %c0_i32_0 : i32, i32
  }
  func.func @transform_19(%arg0: i32) -> (i32, i32) {
    %c0_i32 = arith.constant 0 : i32
    %c0_i32_0 = arith.constant 0 : i32
    return %arg0, %c0_i32 : i32, i32
  }
}

</mosaic_0001>

<llo_original>
// kernel: tpu_custom_call.1
$region0: #{tpu_custom_call.1}
  #allocation0 [shape = 'u32[]', space=smem, size = 0x4, offset = 0x4, fixed_abs, tag = 'smem constant byte address 0x4 - core index']
  #allocation1 [shape = 'u32[144,128]{1,0:T(1,128)}', space=vmem, size = 0x12000, scoped, tag = 'internal scratch']
  %s0 = inlined_call_operand.vmem [shape: bf16[64,256], index: 0, kind: input, shape index: {}]
  %s1 = inlined_call_operand.vmem [shape: bf16[256,64], index: 1, kind: input, shape index: {}]
  %s2 = inlined_call_operand.vmem [shape: f32[1,64], index: 2, kind: input, shape index: {}]
  %s3 = inlined_call_operand.vmem [shape: bf16[32,64], index: 3, kind: input, shape index: {}]
  %s4 = inlined_call_operand.vmem [shape: f32[32,64], index: 4, kind: input, shape index: {}]
  %s5 = inlined_call_operand.vmem [shape: bf16[2,64,192], index: 5, kind: input, shape index: {}]
  %s6 = inlined_call_operand.vmem [shape: f32[2,1,192], index: 6, kind: input, shape index: {}]
  %s7 = inlined_call_operand.vmem [shape: bf16[2,64,64], index: 7, kind: input, shape index: {}]
  %s8 = inlined_call_operand.vmem [shape: f32[2,1,64], index: 8, kind: input, shape index: {}]
  %s9 = inlined_call_operand.vmem [shape: f32[2,1,64], index: 9, kind: input, shape index: {}]
  %s10 = inlined_call_operand.vmem [shape: f32[2,1,64], index: 10, kind: input, shape index: {}]
  %s11 = inlined_call_operand.vmem [shape: bf16[2,64,256], index: 11, kind: input, shape index: {}]
  %s12 = inlined_call_operand.vmem [shape: f32[2,1,256], index: 12, kind: input, shape index: {}]
  %s13 = inlined_call_operand.vmem [shape: bf16[2,256,64], index: 13, kind: input, shape index: {}]
  %s14 = inlined_call_operand.vmem [shape: f32[2,1,64], index: 14, kind: input, shape index: {}]
  %s15 = inlined_call_operand.vmem [shape: f32[2,1,64], index: 15, kind: input, shape index: {}]
  %s16 = inlined_call_operand.vmem [shape: f32[2,1,64], index: 16, kind: input, shape index: {}]
  %s17 = inlined_call_operand.vmem [shape: f32[1,64], index: 17, kind: input, shape index: {}]
  %s18 = inlined_call_operand.vmem [shape: f32[1,64], index: 18, kind: input, shape index: {}]
  %s19 = inlined_call_operand.hbm [shape: f32[16,128], index: 19, kind: output, shape index: {}]
  %s20 = sld [smem:[#allocation0]]
  $region109: #{tpu_custom_call.1} parent=0
    _
  %s22 = ssub.s32 1, %s20
  %s23 = scalar_select 0, %s22, %s20
  $region1: #{tpu_custom_call.1} parent=0
    #allocation2 [shape = 'u8[8192]{0}', space=vmem, size = 0x2000, scoped, tag = 'output window, operand 0']
    #allocation3 [shape = 's32[2]{0}', space=sflag, size = 0x8, scoped, tag = 'scoped memory for tpu_custom_call.1']
    %24 = vsyncpa [#allocation3], 0
    %s25 = scalar_lea.sflag [#allocation3], 1
    %26 = vsyncpa %s25, 0
    loop: start=0, step=1, limit=4
    $region2: #{tpu_custom_call.1} parent=1 // loop_pre_header
      _
    $region3: #{tpu_custom_call.1} parent=1 // loop_header
      %s28 = sphi 0, %s32
      %p29 = scmp.ge.s32.totalorder %s28, 4
      %s36 = sphi 0, %s36
      %s38 = sphi 0, %s36
      %s39 = sphi 0, %s38
      %s53 = sphi 0, %s39
      %s57 = sphi 0, %s57
      %s59 = sphi 0, %s57
      %s60 = sphi 0, %s59
      %s74 = sphi 0, %s60
      %s78 = sphi 0, %s78
      %s80 = sphi 0, %s78
      %s81 = sphi 0, %s80
      %s95 = sphi 0, %s81
      %s101 = sphi 0, %s103
      %s104 = sphi 0, %s101
      %s105 = sphi 0, %s104
      %s121 = sphi 0, %s105
      %s127 = sphi 0, %s129
      %s130 = sphi 0, %s127
      %s131 = sphi 0, %s130
      %s147 = sphi 0, %s131
      %s151 = sphi 0, %s151
      %s153 = sphi 0, %s151
      %s154 = sphi 0, %s153
      %s168 = sphi 0, %s154
      %s172 = sphi 0, %s172
      %s174 = sphi 0, %s172
      %s175 = sphi 0, %s174
      %s189 = sphi 0, %s175
      %s193 = sphi 0, %s193
      %s195 = sphi 0, %s193
      %s196 = sphi 0, %s195
      %s210 = sphi 0, %s196
      %s214 = sphi 0, %s214
      %s216 = sphi 0, %s214
      %s217 = sphi 0, %s216
      %s231 = sphi 0, %s217
      %s235 = sphi 0, %s235
      %s237 = sphi 0, %s235
      %s238 = sphi 0, %s237
      %s252 = sphi 0, %s238
      %s256 = sphi 0, %s256
      %s258 = sphi 0, %s256
      %s259 = sphi 0, %s258
      %s273 = sphi 0, %s259
      %s277 = sphi 0, %s277
      %s279 = sphi 0, %s277
      %s280 = sphi 0, %s279
      %s294 = sphi 0, %s280
      %s298 = sphi 0, %s298
      %s300 = sphi 0, %s298
      %s301 = sphi 0, %s300
      %s315 = sphi 0, %s301
      %s319 = sphi 0, %s319
      %s321 = sphi 0, %s319
      %s322 = sphi 0, %s321
      %s336 = sphi 0, %s322
      %s340 = sphi 0, %s340
      %s342 = sphi 0, %s340
      %s343 = sphi 0, %s342
      %s357 = sphi 0, %s343
      %s361 = sphi 0, %s361
      %s363 = sphi 0, %s361
      %s364 = sphi 0, %s363
      %s378 = sphi 0, %s364
      %s382 = sphi 0, %s382
      %s384 = sphi 0, %s382
      %s385 = sphi 0, %s384
      %s399 = sphi 0, %s385
      %s403 = sphi 0, %s403
      %s405 = sphi 0, %s403
      %s406 = sphi 0, %s405
      %s420 = sphi 0, %s406
      %s424 = sphi 0, %s424
      %s426 = sphi 0, %s424
      %s427 = sphi 0, %s426
      %s441 = sphi 0, %s427
      %s447 = sphi 0, %s449
      %s450 = sphi 0, %s447
      %s451 = sphi 0, %s450
      %s467 = sphi 0, %s451
    $region4: #{tpu_custom_call.1} parent=1 // loop_header_branch
      %31 = sbr.rel (%p29) target = $region8
    $region5: #{tpu_custom_call.1} parent=1 // loop_body
      %s33 = ssub.s32 %s28, 1
      %s34 = ssub.s32 %s28, 2
      %s35 = sadd.s32 %s28, 1
      %s37 = sadd.s32 %s36, 1
      %p40 = scmp.eq.s32.totalorder %s28, 1
      %p41 = scmp.ne.s32.totalorder %s36, %s38
      %p42 = scmp.eq.s32.totalorder %s28, 0
      %p43 = por %p41, %p42
      %p44 = scmp.ne.s32.totalorder %s36, %s38
      %p45 = scmp.eq.s32.totalorder %s33, 1
      %p46 = por %p44, %p45
      %p47 = scmp.ne.s32.totalorder %s38, %s39
      %p48 = scmp.eq.s32.totalorder %s33, 0
      %p49 = por %p47, %p48
      %p50 = scmp.ne.s32.totalorder %s38, %s39
      %p51 = scmp.eq.s32.totalorder %s34, 1
      %p52 = por %p50, %p51
      %p54 = scmp.ne.s32.totalorder %s39, %s53
      %p55 = scmp.eq.s32.totalorder %s34, 0
      %p56 = por %p54, %p55
      %s58 = sadd.s32 %s57, 1
      %p61 = scmp.eq.s32.totalorder %s28, 1
      %p62 = scmp.ne.s32.totalorder %s57, %s59
      %p63 = scmp.eq.s32.totalorder %s28, 0
      %p64 = por %p62, %p63
      %p65 = scmp.ne.s32.totalorder %s57, %s59
      %p66 = scmp.eq.s32.totalorder %s33, 1
      %p67 = por %p65, %p66
      %p68 = scmp.ne.s32.totalorder %s59, %s60
      %p69 = scmp.eq.s32.totalorder %s33, 0
      %p70 = por %p68, %p69
      %p71 = scmp.ne.s32.totalorder %s59, %s60
      %p72 = scmp.eq.s32.totalorder %s34, 1
      %p73 = por %p71, %p72
      %p75 = scmp.ne.s32.totalorder %s60, %s74
      %p76 = scmp.eq.s32.totalorder %s34, 0
      %p77 = por %p75, %p76
      %s79 = sadd.s32 %s78, 1
      %p82 = scmp.eq.s32.totalorder %s28, 1
      %p83 = scmp.ne.s32.totalorder %s78, %s80
      %p84 = scmp.eq.s32.totalorder %s28, 0
      %p85 = por %p83, %p84
      %p86 = scmp.ne.s32.totalorder %s78, %s80
      %p87 = scmp.eq.s32.totalorder %s33, 1
      %p88 = por %p86, %p87
      %p89 = scmp.ne.s32.totalorder %s80, %s81
      %p90 = scmp.eq.s32.totalorder %s33, 0
      %p91 = por %p89, %p90
      %p92 = scmp.ne.s32.totalorder %s80, %s81
      %p93 = scmp.eq.s32.totalorder %s34, 1
      %p94 = por %p92, %p93
      %p96 = scmp.ne.s32.totalorder %s81, %s95
      %p97 = scmp.eq.s32.totalorder %s34, 0
      %p98 = por %p96, %p97
      %s99 = ssub.s32 %s28, %s35
      %p100 = scmp.eq.s32.totalorder %s99, 0
      %s102 = sadd.s32 %s101, 1
      %s103 = scalar_select %p100, %s101, %s102
      %p106 = pneg %p100
      %p107 = scmp.eq.s32.totalorder %s28, 1
      %p108 = por %p106, %p107
      %p109 = scmp.ne.s32.totalorder %s101, %s104
      %p110 = scmp.eq.s32.totalorder %s28, 0
      %p111 = por %p109, %p110
      %p112 = scmp.ne.s32.totalorder %s101, %s104
      %p113 = scmp.eq.s32.totalorder %s33, 1
      %p114 = por %p112, %p113
      %p115 = scmp.ne.s32.totalorder %s104, %s105
      %p116 = scmp.eq.s32.totalorder %s33, 0
      %p117 = por %p115, %p116
      %p118 = scmp.ne.s32.totalorder %s104, %s105
      %p119 = scmp.eq.s32.totalorder %s34, 1
      %p120 = por %p118, %p119
      %p122 = scmp.ne.s32.totalorder %s105, %s121
      %p123 = scmp.eq.s32.totalorder %s34, 0
      %p124 = por %p122, %p123
      %s125 = ssub.s32 %s28, %s35
      %p126 = scmp.eq.s32.totalorder %s125, 0
      %s128 = sadd.s32 %s127, 1
      %s129 = scalar_select %p126, %s127, %s128
      %p132 = pneg %p126
      %p133 = scmp.eq.s32.totalorder %s28, 1
      %p134 = por %p132, %p133
      %p135 = scmp.ne.s32.totalorder %s127, %s130
      %p136 = scmp.eq.s32.totalorder %s28, 0
      %p137 = por %p135, %p136
      %p138 = scmp.ne.s32.totalorder %s127, %s130
      %p139 = scmp.eq.s32.totalorder %s33, 1
      %p140 = por %p138, %p139
      %p141 = scmp.ne.s32.totalorder %s130, %s131
      %p142 = scmp.eq.s32.totalorder %s33, 0
      %p143 = por %p141, %p142
      %p144 = scmp.ne.s32.totalorder %s130, %s131
      %p145 = scmp.eq.s32.totalorder %s34, 1
      %p146 = por %p144, %p145
      %p148 = scmp.ne.s32.totalorder %s131, %s147
      %p149 = scmp.eq.s32.totalorder %s34, 0
      %p150 = por %p148, %p149
      %s152 = sadd.s32 %s151, 1
      %p155 = scmp.eq.s32.totalorder %s28, 1
      %p156 = scmp.ne.s32.totalorder %s151, %s153
      %p157 = scmp.eq.s32.totalorder %s28, 0
      %p158 = por %p156, %p157
      %p159 = scmp.ne.s32.totalorder %s151, %s153
      %p160 = scmp.eq.s32.totalorder %s33, 1
      %p161 = por %p159, %p160
      %p162 = scmp.ne.s32.totalorder %s153, %s154
      %p163 = scmp.eq.s32.totalorder %s33, 0
      %p164 = por %p162, %p163
      %p165 = scmp.ne.s32.totalorder %s153, %s154
      %p166 = scmp.eq.s32.totalorder %s34, 1
      %p167 = por %p165, %p166
      %p169 = scmp.ne.s32.totalorder %s154, %s168
      %p170 = scmp.eq.s32.totalorder %s34, 0
      %p171 = por %p169, %p170
      %s173 = sadd.s32 %s172, 1
      %p176 = scmp.eq.s32.totalorder %s28, 1
      %p177 = scmp.ne.s32.totalorder %s172, %s174
      %p178 = scmp.eq.s32.totalorder %s28, 0
      %p179 = por %p177, %p178
      %p180 = scmp.ne.s32.totalorder %s172, %s174
      %p181 = scmp.eq.s32.totalorder %s33, 1
      %p182 = por %p180, %p181
      %p183 = scmp.ne.s32.totalorder %s174, %s175
      %p184 = scmp.eq.s32.totalorder %s33, 0
      %p185 = por %p183, %p184
      %p186 = scmp.ne.s32.totalorder %s174, %s175
      %p187 = scmp.eq.s32.totalorder %s34, 1
      %p188 = por %p186, %p187
      %p190 = scmp.ne.s32.totalorder %s175, %s189
      %p191 = scmp.eq.s32.totalorder %s34, 0
      %p192 = por %p190, %p191
      %s194 = sadd.s32 %s193, 1
      %p197 = scmp.eq.s32.totalorder %s28, 1
      %p198 = scmp.ne.s32.totalorder %s193, %s195
      %p199 = scmp.eq.s32.totalorder %s28, 0
      %p200 = por %p198, %p199
      %p201 = scmp.ne.s32.totalorder %s193, %s195
      %p202 = scmp.eq.s32.totalorder %s33, 1
      %p203 = por %p201, %p202
      %p204 = scmp.ne.s32.totalorder %s195, %s196
      %p205 = scmp.eq.s32.totalorder %s33, 0
      %p206 = por %p204, %p205
      %p207 = scmp.ne.s32.totalorder %s195, %s196
      %p208 = scmp.eq.s32.totalorder %s34, 1
      %p209 = por %p207, %p208
      %p211 = scmp.ne.s32.totalorder %s196, %s210
      %p212 = scmp.eq.s32.totalorder %s34, 0
      %p213 = por %p211, %p212
      %s215 = sadd.s32 %s214, 1
      %p218 = scmp.eq.s32.totalorder %s28, 1
      %p219 = scmp.ne.s32.totalorder %s214, %s216
      %p220 = scmp.eq.s32.totalorder %s28, 0
      %p221 = por %p219, %p220
      %p222 = scmp.ne.s32.totalorder %s214, %s216
      %p223 = scmp.eq.s32.totalorder %s33, 1
      %p224 = por %p222, %p223
      %p225 = scmp.ne.s32.totalorder %s216, %s217
      %p226 = scmp.eq.s32.totalorder %s33, 0
      %p227 = por %p225, %p226
      %p228 = scmp.ne.s32.totalorder %s216, %s217
      %p229 = scmp.eq.s32.totalorder %s34, 1
      %p230 = por %p228, %p229
      %p232 = scmp.ne.s32.totalorder %s217, %s231
      %p233 = scmp.eq.s32.totalorder %s34, 0
      %p234 = por %p232, %p233
      %s236 = sadd.s32 %s235, 1
      %p239 = scmp.eq.s32.totalorder %s28, 1
      %p240 = scmp.ne.s32.totalorder %s235, %s237
      %p241 = scmp.eq.s32.totalorder %s28, 0
      %p242 = por %p240, %p241
      %p243 = scmp.ne.s32.totalorder %s235, %s237
      %p244 = scmp.eq.s32.totalorder %s33, 1
      %p245 = por %p243, %p244
      %p246 = scmp.ne.s32.totalorder %s237, %s238
      %p247 = scmp.eq.s32.totalorder %s33, 0
      %p248 = por %p246, %p247
      %p249 = scmp.ne.s32.totalorder %s237, %s238
      %p250 = scmp.eq.s32.totalorder %s34, 1
      %p251 = por %p249, %p250
      %p253 = scmp.ne.s32.totalorder %s238, %s252
      %p254 = scmp.eq.s32.totalorder %s34, 0
      %p255 = por %p253, %p254
      %s257 = sadd.s32 %s256, 1
      %p260 = scmp.eq.s32.totalorder %s28, 1
      %p261 = scmp.ne.s32.totalorder %s256, %s258
      %p262 = scmp.eq.s32.totalorder %s28, 0
      %p263 = por %p261, %p262
      %p264 = scmp.ne.s32.totalorder %s256, %s258
      %p265 = scmp.eq.s32.totalorder %s33, 1
      %p266 = por %p264, %p265
      %p267 = scmp.ne.s32.totalorder %s258, %s259
      %p268 = scmp.eq.s32.totalorder %s33, 0
      %p269 = por %p267, %p268
      %p270 = scmp.ne.s32.totalorder %s258, %s259
      %p271 = scmp.eq.s32.totalorder %s34, 1
      %p272 = por %p270, %p271
      %p274 = scmp.ne.s32.totalorder %s259, %s273
      %p275 = scmp.eq.s32.totalorder %s34, 0
      %p276 = por %p274, %p275
      %s278 = sadd.s32 %s277, 1
      %p281 = scmp.eq.s32.totalorder %s28, 1
      %p282 = scmp.ne.s32.totalorder %s277, %s279
      %p283 = scmp.eq.s32.totalorder %s28, 0
      %p284 = por %p282, %p283
      %p285 = scmp.ne.s32.totalorder %s277, %s279
      %p286 = scmp.eq.s32.totalorder %s33, 1
      %p287 = por %p285, %p286
      %p288 = scmp.ne.s32.totalorder %s279, %s280
      %p289 = scmp.eq.s32.totalorder %s33, 0
      %p290 = por %p288, %p289
      %p291 = scmp.ne.s32.totalorder %s279, %s280
      %p292 = scmp.eq.s32.totalorder %s34, 1
      %p293 = por %p291, %p292
      %p295 = scmp.ne.s32.totalorder %s280, %s294
      %p296 = scmp.eq.s32.totalorder %s34, 0
      %p297 = por %p295, %p296
      %s299 = sadd.s32 %s298, 1
      %p302 = scmp.eq.s32.totalorder %s28, 1
      %p303 = scmp.ne.s32.totalorder %s298, %s300
      %p304 = scmp.eq.s32.totalorder %s28, 0
      %p305 = por %p303, %p304
      %p306 = scmp.ne.s32.totalorder %s298, %s300
      %p307 = scmp.eq.s32.totalorder %s33, 1
      %p308 = por %p306, %p307
      %p309 = scmp.ne.s32.totalorder %s300, %s301
      %p310 = scmp.eq.s32.totalorder %s33, 0
      %p311 = por %p309, %p310
      %p312 = scmp.ne.s32.totalorder %s300, %s301
      %p313 = scmp.eq.s32.totalorder %s34, 1
      %p314 = por %p312, %p313
      %p316 = scmp.ne.s32.totalorder %s301, %s315
      %p317 = scmp.eq.s32.totalorder %s34, 0
      %p318 = por %p316, %p317
      %s320 = sadd.s32 %s319, 1
      %p323 = scmp.eq.s32.totalorder %s28, 1
      %p324 = scmp.ne.s32.totalorder %s319, %s321
      %p325 = scmp.eq.s32.totalorder %s28, 0
      %p326 = por %p324, %p325
      %p327 = scmp.ne.s32.totalorder %s319, %s321
      %p328 = scmp.eq.s32.totalorder %s33, 1
      %p329 = por %p327, %p328
      %p330 = scmp.ne.s32.totalorder %s321, %s322
      %p331 = scmp.eq.s32.totalorder %s33, 0
      %p332 = por %p330, %p331
      %p333 = scmp.ne.s32.totalorder %s321, %s322
      %p334 = scmp.eq.s32.totalorder %s34, 1
      %p335 = por %p333, %p334
      %p337 = scmp.ne.s32.totalorder %s322, %s336
      %p338 = scmp.eq.s32.totalorder %s34, 0
      %p339 = por %p337, %p338
      %s341 = sadd.s32 %s340, 1
      %p344 = scmp.eq.s32.totalorder %s28, 1
      %p345 = scmp.ne.s32.totalorder %s340, %s342
      %p346 = scmp.eq.s32.totalorder %s28, 0
      %p347 = por %p345, %p346
      %p348 = scmp.ne.s32.totalorder %s340, %s342
      %p349 = scmp.eq.s32.totalorder %s33, 1
      %p350 = por %p348, %p349
      %p351 = scmp.ne.s32.totalorder %s342, %s343
      %p352 = scmp.eq.s32.totalorder %s33, 0
      %p353 = por %p351, %p352
      %p354 = scmp.ne.s32.totalorder %s342, %s343
      %p355 = scmp.eq.s32.totalorder %s34, 1
      %p356 = por %p354, %p355
      %p358 = scmp.ne.s32.totalorder %s343, %s357
      %p359 = scmp.eq.s32.totalorder %s34, 0
      %p360 = por %p358, %p359
      %s362 = sadd.s32 %s361, 1
      %p365 = scmp.eq.s32.totalorder %s28, 1
      %p366 = scmp.ne.s32.totalorder %s361, %s363
      %p367 = scmp.eq.s32.totalorder %s28, 0
      %p368 = por %p366, %p367
      %p369 = scmp.ne.s32.totalorder %s361, %s363
      %p370 = scmp.eq.s32.totalorder %s33, 1
      %p371 = por %p369, %p370
      %p372 = scmp.ne.s32.totalorder %s363, %s364
      %p373 = scmp.eq.s32.totalorder %s33, 0
      %p374 = por %p372, %p373
      %p375 = scmp.ne.s32.totalorder %s363, %s364
      %p376 = scmp.eq.s32.totalorder %s34, 1
      %p377 = por %p375, %p376
      %p379 = scmp.ne.s32.totalorder %s364, %s378
      %p380 = scmp.eq.s32.totalorder %s34, 0
      %p381 = por %p379, %p380
      %s383 = sadd.s32 %s382, 1
      %p386 = scmp.eq.s32.totalorder %s28, 1
      %p387 = scmp.ne.s32.totalorder %s382, %s384
      %p388 = scmp.eq.s32.totalorder %s28, 0
      %p389 = por %p387, %p388
      %p390 = scmp.ne.s32.totalorder %s382, %s384
      %p391 = scmp.eq.s32.totalorder %s33, 1
      %p392 = por %p390, %p391
      %p393 = scmp.ne.s32.totalorder %s384, %s385
      %p394 = scmp.eq.s32.totalorder %s33, 0
      %p395 = por %p393, %p394
      %p396 = scmp.ne.s32.totalorder %s384, %s385
      %p397 = scmp.eq.s32.totalorder %s34, 1
      %p398 = por %p396, %p397
      %p400 = scmp.ne.s32.totalorder %s385, %s399
      %p401 = scmp.eq.s32.totalorder %s34, 0
      %p402 = por %p400, %p401
      %s404 = sadd.s32 %s403, 1
      %p407 = scmp.eq.s32.totalorder %s28, 1
      %p408 = scmp.ne.s32.totalorder %s403, %s405
      %p409 = scmp.eq.s32.totalorder %s28, 0
      %p410 = por %p408, %p409
      %p411 = scmp.ne.s32.totalorder %s403, %s405
      %p412 = scmp.eq.s32.totalorder %s33, 1
      %p413 = por %p411, %p412
      %p414 = scmp.ne.s32.totalorder %s405, %s406
      %p415 = scmp.eq.s32.totalorder %s33, 0
      %p416 = por %p414, %p415
      %p417 = scmp.ne.s32.totalorder %s405, %s406
      %p418 = scmp.eq.s32.totalorder %s34, 1
      %p419 = por %p417, %p418
      %p421 = scmp.ne.s32.totalorder %s406, %s420
      %p422 = scmp.eq.s32.totalorder %s34, 0
      %p423 = por %p421, %p422
      %s425 = sadd.s32 %s424, 1
      %p428 = scmp.eq.s32.totalorder %s28, 1
      %p429 = scmp.ne.s32.totalorder %s424, %s426
      %p430 = scmp.eq.s32.totalorder %s28, 0
      %p431 = por %p429, %p430
      %p432 = scmp.ne.s32.totalorder %s424, %s426
      %p433 = scmp.eq.s32.totalorder %s33, 1
      %p434 = por %p432, %p433
      %p435 = scmp.ne.s32.totalorder %s426, %s427
      %p436 = scmp.eq.s32.totalorder %s33, 0
      %p437 = por %p435, %p436
      %p438 = scmp.ne.s32.totalorder %s426, %s427
      %p439 = scmp.eq.s32.totalorder %s34, 1
      %p440 = por %p438, %p439
      %p442 = scmp.ne.s32.totalorder %s427, %s441
      %p443 = scmp.eq.s32.totalorder %s34, 0
      %p444 = por %p442, %p443
      %s445 = ssub.s32 %s28, %s35
      %p446 = scmp.eq.s32.totalorder %s445, 0
      %s448 = sadd.s32 %s447, 1
      %s449 = scalar_select %p446, %s447, %s448
      %p452 = pneg %p446
      %p453 = scmp.eq.s32.totalorder %s28, 1
      %p454 = por %p452, %p453
      %p455 = scmp.ne.s32.totalorder %s447, %s450
      %p456 = scmp.eq.s32.totalorder %s28, 0
      %p457 = por %p455, %p456
      %p458 = scmp.ne.s32.totalorder %s447, %s450
      %p459 = scmp.eq.s32.totalorder %s33, 1
      %p460 = por %p458, %p459
      %p461 = scmp.ne.s32.totalorder %s450, %s451
      %p462 = scmp.eq.s32.totalorder %s33, 0
      %p463 = por %p461, %p462
      %p464 = scmp.ne.s32.totalorder %s450, %s451
      %p465 = scmp.eq.s32.totalorder %s34, 1
      %p466 = por %p464, %p465
      %p468 = scmp.ne.s32.totalorder %s451, %s467
      %p469 = scmp.eq.s32.totalorder %s34, 0
      %p470 = por %p468, %p469
      %p471 = scmp.le.s32.totalorder 1, %s28
      %p472 = scmp.lt.s32.totalorder %s28, 3
      %p473 = pnand %p471, %p472
      %p474 = pneg %p473
      // Predicated region
      $region9: #{tpu_custom_call.1} parent=5 // pred_check
        _
      $region10: #{tpu_custom_call.1} parent=5 // pred_check_branch
        %476 = sbr.rel (%p473) target = $region12
      $region11: #{tpu_custom_call.1} parent=5 // pred_region
        %s477 = ssub.s32 %s28, 1
        // Predicated region
        $region13: #{tpu_custom_call.1} parent=11 // pred_check
          %p478 = pneg %p49
        $region14: #{tpu_custom_call.1} parent=11 // pred_check_branch
          %480 = sbr.rel (%p478) target = $region16
        $region15: #{tpu_custom_call.1} parent=11 // pred_region
          _
        $region16: #{tpu_custom_call.1} parent=11 // pred_fallthru
          _
        // Predicated region
        $region17: #{tpu_custom_call.1} parent=11 // pred_check
          %p481 = pneg %p70
        $region18: #{tpu_custom_call.1} parent=11 // pred_check_branch
          %483 = sbr.rel (%p481) target = $region20
        $region19: #{tpu_custom_call.1} parent=11 // pred_region
          _
        $region20: #{tpu_custom_call.1} parent=11 // pred_fallthru
          _
        // Predicated region
        $region21: #{tpu_custom_call.1} parent=11 // pred_check
          %p484 = pneg %p91
        $region22: #{tpu_custom_call.1} parent=11 // pred_check_branch
          %486 = sbr.rel (%p484) target = $region24
        $region23: #{tpu_custom_call.1} parent=11 // pred_region
          _
        $region24: #{tpu_custom_call.1} parent=11 // pred_fallthru
          _
        // Predicated region
        $region25: #{tpu_custom_call.1} parent=11 // pred_check
          %p487 = pneg %p164
        $region26: #{tpu_custom_call.1} parent=11 // pred_check_branch
          %489 = sbr.rel (%p487) target = $region28
        $region27: #{tpu_custom_call.1} parent=11 // pred_region
          _
        $region28: #{tpu_custom_call.1} parent=11 // pred_fallthru
          _
        // Predicated region
        $region29: #{tpu_custom_call.1} parent=11 // pred_check
          %p490 = pneg %p185
        $region30: #{tpu_custom_call.1} parent=11 // pred_check_branch
          %492 = sbr.rel (%p490) target = $region32
        $region31: #{tpu_custom_call.1} parent=11 // pred_region
          _
        $region32: #{tpu_custom_call.1} parent=11 // pred_fallthru
          _
        // Predicated region
        $region33: #{tpu_custom_call.1} parent=11 // pred_check
          %p493 = pneg %p206
        $region34: #{tpu_custom_call.1} parent=11 // pred_check_branch
          %495 = sbr.rel (%p493) target = $region36
        $region35: #{tpu_custom_call.1} parent=11 // pred_region
          _
        $region36: #{tpu_custom_call.1} parent=11 // pred_fallthru
          _
        // Predicated region
        $region37: #{tpu_custom_call.1} parent=11 // pred_check
          %p496 = pneg %p227
        $region38: #{tpu_custom_call.1} parent=11 // pred_check_branch
          %498 = sbr.rel (%p496) target = $region40
        $region39: #{tpu_custom_call.1} parent=11 // pred_region
          _
        $region40: #{tpu_custom_call.1} parent=11 // pred_fallthru
          _
        // Predicated region
        $region41: #{tpu_custom_call.1} parent=11 // pred_check
          %p499 = pneg %p248
        $region42: #{tpu_custom_call.1} parent=11 // pred_check_branch
          %501 = sbr.rel (%p499) target = $region44
        $region43: #{tpu_custom_call.1} parent=11 // pred_region
          _
        $region44: #{tpu_custom_call.1} parent=11 // pred_fallthru
          _
        // Predicated region
        $region45: #{tpu_custom_call.1} parent=11 // pred_check
          %p502 = pneg %p269
        $region46: #{tpu_custom_call.1} parent=11 // pred_check_branch
          %504 = sbr.rel (%p502) target = $region48
        $region47: #{tpu_custom_call.1} parent=11 // pred_region
          _
        $region48: #{tpu_custom_call.1} parent=11 // pred_fallthru
          _
        // Predicated region
        $region49: #{tpu_custom_call.1} parent=11 // pred_check
          %p505 = pneg %p290
        $region50: #{tpu_custom_call.1} parent=11 // pred_check_branch
          %507 = sbr.rel (%p505) target = $region52
        $region51: #{tpu_custom_call.1} parent=11 // pred_region
          _
        $region52: #{tpu_custom_call.1} parent=11 // pred_fallthru
          _
        // Predicated region
        $region53: #{tpu_custom_call.1} parent=11 // pred_check
          %p508 = pneg %p311
        $region54: #{tpu_custom_call.1} parent=11 // pred_check_branch
          %510 = sbr.rel (%p508) target = $region56
        $region55: #{tpu_custom_call.1} parent=11 // pred_region
          _
        $region56: #{tpu_custom_call.1} parent=11 // pred_fallthru
          _
        // Predicated region
        $region57: #{tpu_custom_call.1} parent=11 // pred_check
          %p511 = pneg %p332
        $region58: #{tpu_custom_call.1} parent=11 // pred_check_branch
          %513 = sbr.rel (%p511) target = $region60
        $region59: #{tpu_custom_call.1} parent=11 // pred_region
          _
        $region60: #{tpu_custom_call.1} parent=11 // pred_fallthru
          _
        // Predicated region
        $region61: #{tpu_custom_call.1} parent=11 // pred_check
          %p514 = pneg %p353
        $region62: #{tpu_custom_call.1} parent=11 // pred_check_branch
          %516 = sbr.rel (%p514) target = $region64
        $region63: #{tpu_custom_call.1} parent=11 // pred_region
          _
        $region64: #{tpu_custom_call.1} parent=11 // pred_fallthru
          _
        // Predicated region
        $region65: #{tpu_custom_call.1} parent=11 // pred_check
          %p517 = pneg %p374
        $region66: #{tpu_custom_call.1} parent=11 // pred_check_branch
          %519 = sbr.rel (%p517) target = $region68
        $region67: #{tpu_custom_call.1} parent=11 // pred_region
          _
        $region68: #{tpu_custom_call.1} parent=11 // pred_fallthru
          _
        // Predicated region
        $region69: #{tpu_custom_call.1} parent=11 // pred_check
          %p520 = pneg %p395
        $region70: #{tpu_custom_call.1} parent=11 // pred_check_branch
          %522 = sbr.rel (%p520) target = $region72
        $region71: #{tpu_custom_call.1} parent=11 // pred_region
          _
        $region72: #{tpu_custom_call.1} parent=11 // pred_fallthru
          _
        // Predicated region
        $region73: #{tpu_custom_call.1} parent=11 // pred_check
          %p523 = pneg %p416
        $region74: #{tpu_custom_call.1} parent=11 // pred_check_branch
          %525 = sbr.rel (%p523) target = $region76
        $region75: #{tpu_custom_call.1} parent=11 // pred_region
          _
        $region76: #{tpu_custom_call.1} parent=11 // pred_fallthru
          _
        // Predicated region
        $region77: #{tpu_custom_call.1} parent=11 // pred_check
          %p526 = pneg %p437
        $region78: #{tpu_custom_call.1} parent=11 // pred_check_branch
          %528 = sbr.rel (%p526) target = $region80
        $region79: #{tpu_custom_call.1} parent=11 // pred_region
          _
        $region80: #{tpu_custom_call.1} parent=11 // pred_fallthru
          _
      $region12: #{tpu_custom_call.1} parent=5 // pred_fallthru
        _
      %p529 = scmp.lt.s32.totalorder %s28, 2
      // Predicated region
      $region81: #{tpu_custom_call.1} parent=5 // pred_check
        %p530 = pneg %p529
      $region82: #{tpu_custom_call.1} parent=5 // pred_check_branch
        %532 = sbr.rel (%p530) target = $region84
      $region83: #{tpu_custom_call.1} parent=5 // pred_region
        // Predicated region
        $region85: #{tpu_custom_call.1} parent=83 // pred_check
          %p533 = pneg %p111
        $region86: #{tpu_custom_call.1} parent=83 // pred_check_branch
          %535 = sbr.rel (%p533) target = $region88
        $region87: #{tpu_custom_call.1} parent=83 // pred_region
          %s536 = smul.u32 2, %s28
          %p537 = scmp.lt.s32.totalorder %s536, 3
          %s538 = scalar_select %p537, %s536, 3
          %s539 = smul.addr %s538, 4
          %s540 = scalar_lea.vmem %s3, %s539
          %s541 = smul.u32 2, %s28
        $region88: #{tpu_custom_call.1} parent=83 // pred_fallthru
          _
        // Predicated region
        $region89: #{tpu_custom_call.1} parent=83 // pred_check
          %p542 = pneg %p137
        $region90: #{tpu_custom_call.1} parent=83 // pred_check_branch
          %544 = sbr.rel (%p542) target = $region92
        $region91: #{tpu_custom_call.1} parent=83 // pred_region
          %s545 = smul.u32 2, %s28
          %p546 = scmp.lt.s32.totalorder %s545, 3
          %s547 = scalar_select %p546, %s545, 3
          %s548 = smul.addr %s547, 8
          %s549 = scalar_lea.vmem %s4, %s548
          %s550 = smul.u32 2, %s28
        $region92: #{tpu_custom_call.1} parent=83 // pred_fallthru
          _
      $region84: #{tpu_custom_call.1} parent=5 // pred_fallthru
        _
      %p551 = scmp.le.s32.totalorder 1, %s28
      %p552 = scmp.lt.s32.totalorder %s28, 3
      %p553 = pnand %p551, %p552
      %p554 = pneg %p553
      // Predicated region
      $region93: #{tpu_custom_call.1} parent=5 // pred_check
        _
      $region94: #{tpu_custom_call.1} parent=5 // pred_check_branch
        %556 = sbr.rel (%p553) target = $region96
      $region95: #{tpu_custom_call.1} parent=5 // pred_region
        %s557 = ssub.s32 %s28, 1
        %p558 = pneg %p49
        %p559 = pneg %p46
        %p560 = pneg %p70
        %p561 = pneg %p67
        %p562 = pneg %p91
        %p563 = pneg %p88
        %s564 = smul.u32 2, %s33
        %p565 = scmp.lt.s32.totalorder %s564, 3
        %s566 = scalar_select %p565, %s564, 3
        %s567 = smul.addr %s566, 4
        %s568 = scalar_lea.vmem %s3, %s567
        %p569 = pneg %p117
        %p570 = pneg %p114
        %s571 = smul.u32 2, %s33
        %p572 = scmp.lt.s32.totalorder %s571, 3
        %s573 = scalar_select %p572, %s571, 3
        %s574 = smul.addr %s573, 8
        %s575 = scalar_lea.vmem %s4, %s574
        %p576 = pneg %p143
        %p577 = pneg %p140
        %p578 = pneg %p164
        %p579 = pneg %p161
        %p580 = pneg %p185
        %p581 = pneg %p182
        %p582 = pneg %p206
        %p583 = pneg %p203
        %p584 = pneg %p227
        %p585 = pneg %p224
        %p586 = pneg %p248
        %p587 = pneg %p245
        %p588 = pneg %p269
        %p589 = pneg %p266
        %p590 = pneg %p290
        %p591 = pneg %p287
        %p592 = pneg %p311
        %p593 = pneg %p308
        %p594 = pneg %p332
        %p595 = pneg %p329
        %p596 = pneg %p353
        %p597 = pneg %p350
        %p598 = pneg %p374
        %p599 = pneg %p371
        %p600 = pneg %p395
        %p601 = pneg %p392
        %p602 = pneg %p416
        %p603 = pneg %p413
        %p604 = pneg %p437
        %p605 = pneg %p434
        %p606 = pneg %p463
        %p607 = pneg %p460
        %s608 = sand.u32 %s450, 1
        %s609 = scalar_lea.sflag [#allocation3], %s608
        %s610 = sand.u32 %s450, 1
        %s611 = smul.addr %s610, 8
        %s612 = scalar_lea.vmem [#allocation2], %s611
        %s613 = smul.u32 2, %s33
        %p614 = scmp.lt.s32.totalorder %s613, 3
        %s615 = scalar_select %p614, %s613, 3
        %s616 = smul.addr %s615, 4
        %s617 = scalar_lea.vmem %s3, %s616
        %s618 = smul.u32 2, %s33
        %s619 = smul.u32 2, %s33
        %p620 = scmp.lt.s32.totalorder %s619, 3
        %s621 = scalar_select %p620, %s619, 3
        %s622 = smul.addr %s621, 8
        %s623 = scalar_lea.vmem %s4, %s622
        %s624 = smul.u32 2, %s33
        %v626 = vld [vmem:[%s0] sm:$0xff]
        %v627 = vld [vmem:[%s0 + $0x8] sm:$0xff]
        %v628 = vld [vmem:[%s0 + $0x10] sm:$0xff]
        %v629 = vld [vmem:[%s0 + $0x18] sm:$0xff]
        %v630 = vld [vmem:[%s0 + $0x20] sm:$0xff]
        %v631 = vld [vmem:[%s0 + $0x28] sm:$0xff]
        %v632 = vld [vmem:[%s0 + $0x30] sm:$0xff]
        %v633 = vld [vmem:[%s0 + $0x38] sm:$0xff]
        %v634 = vld [vmem:[%s1] sm:$0xf]
        %v635 = vld [vmem:[%s1 + $0x4] sm:$0xf]
        %v636 = vld [vmem:[%s1 + $0x8] sm:$0xf]
        %v637 = vld [vmem:[%s1 + $0xc] sm:$0xf]
        %v638 = vld [vmem:[%s1 + $0x10] sm:$0xf]
        %v639 = vld [vmem:[%s1 + $0x14] sm:$0xf]
        %v640 = vld [vmem:[%s1 + $0x18] sm:$0xf]
        %v641 = vld [vmem:[%s1 + $0x1c] sm:$0xf]
        %v642 = vld [vmem:[%s1 + $0x20] sm:$0xf]
        %v643 = vld [vmem:[%s1 + $0x24] sm:$0xf]
        %v644 = vld [vmem:[%s1 + $0x28] sm:$0xf]
        %v645 = vld [vmem:[%s1 + $0x2c] sm:$0xf]
        %v646 = vld [vmem:[%s1 + $0x30] sm:$0xf]
        %v647 = vld [vmem:[%s1 + $0x34] sm:$0xf]
        %v648 = vld [vmem:[%s1 + $0x38] sm:$0xf]
        %v649 = vld [vmem:[%s1 + $0x3c] sm:$0xf]
        %v650 = vld [vmem:[%s1 + $0x40] sm:$0xf]
        %v651 = vld [vmem:[%s1 + $0x44] sm:$0xf]
        %v652 = vld [vmem:[%s1 + $0x48] sm:$0xf]
        %v653 = vld [vmem:[%s1 + $0x4c] sm:$0xf]
        %v654 = vld [vmem:[%s1 + $0x50] sm:$0xf]
        %v655 = vld [vmem:[%s1 + $0x54] sm:$0xf]
        %v656 = vld [vmem:[%s1 + $0x58] sm:$0xf]
        %v657 = vld [vmem:[%s1 + $0x5c] sm:$0xf]
        %v658 = vld [vmem:[%s1 + $0x60] sm:$0xf]
        %v659 = vld [vmem:[%s1 + $0x64] sm:$0xf]
        %v660 = vld [vmem:[%s1 + $0x68] sm:$0xf]
        %v661 = vld [vmem:[%s1 + $0x6c] sm:$0xf]
        %v662 = vld [vmem:[%s1 + $0x70] sm:$0xf]
        %v663 = vld [vmem:[%s1 + $0x74] sm:$0xf]
        %v664 = vld [vmem:[%s1 + $0x78] sm:$0xf]
        %v665 = vld [vmem:[%s1 + $0x7c] sm:$0xf]
        %v666 = vld [vmem:[%s2] sm:$0x1]
        %v668 = vlaneseq
        %v669 = vshrl.u32 %v668, 7
        %v670 = vsub.s32 0, %v669
        %v671 = vrot.slane %v666, %v670
        %v681 = vunpack.c.l.b16 %v626
        %v682 = vunpack.c.h.b16 %v626
        %v683 = vunpack.c.l.b16 %v627
        %v684 = vunpack.c.h.b16 %v627
        %v685 = vunpack.c.l.b16 %v628
        %v686 = vunpack.c.h.b16 %v628
        %v687 = vunpack.c.l.b16 %v629
        %v688 = vunpack.c.h.b16 %v629
        %v689 = vunpack.c.l.b16 %v630
        %v690 = vunpack.c.h.b16 %v630
        %v691 = vunpack.c.l.b16 %v631
        %v692 = vunpack.c.h.b16 %v631
        %v693 = vunpack.c.l.b16 %v632
        %v694 = vunpack.c.h.b16 %v632
        %v695 = vunpack.c.l.b16 %v633
        %v696 = vunpack.c.h.b16 %v633
        %v697 = vpack.c.b16 %v683, %v681
        %v698 = vpack.c.b16 %v684, %v682
        %v699 = vpack.c.b16 %v687, %v685
        %v700 = vpack.c.b16 %v688, %v686
        %v701 = vpack.c.b16 %v691, %v689
        %v702 = vpack.c.b16 %v692, %v690
        %v703 = vpack.c.b16 %v695, %v693
        %v704 = vpack.c.b16 %v696, %v694
        %v745 = vunpack.c.l.b16 %v634
        %v746 = vunpack.c.l.b16 %v635
        %v747 = vunpack.c.l.b16 %v636
        %v748 = vunpack.c.l.b16 %v637
        %v749 = vunpack.c.l.b16 %v638
        %v750 = vunpack.c.l.b16 %v639
        %v751 = vunpack.c.l.b16 %v640
        %v752 = vunpack.c.l.b16 %v641
        %v753 = vunpack.c.l.b16 %v642
        %v754 = vunpack.c.l.b16 %v643
        %v755 = vunpack.c.l.b16 %v644
        %v756 = vunpack.c.l.b16 %v645
        %v757 = vunpack.c.l.b16 %v646
        %v758 = vunpack.c.l.b16 %v647
        %v759 = vunpack.c.l.b16 %v648
        %v760 = vunpack.c.l.b16 %v649
        %v761 = vunpack.c.l.b16 %v650
        %v762 = vunpack.c.l.b16 %v651
        %v763 = vunpack.c.l.b16 %v652
        %v764 = vunpack.c.l.b16 %v653
        %v765 = vunpack.c.l.b16 %v654
        %v766 = vunpack.c.l.b16 %v655
        %v767 = vunpack.c.l.b16 %v656
        %v768 = vunpack.c.l.b16 %v657
        %v769 = vunpack.c.l.b16 %v658
        %v770 = vunpack.c.l.b16 %v659
        %v771 = vunpack.c.l.b16 %v660
        %v772 = vunpack.c.l.b16 %v661
        %v773 = vunpack.c.l.b16 %v662
        %v774 = vunpack.c.l.b16 %v663
        %v775 = vunpack.c.l.b16 %v664
        %v776 = vunpack.c.l.b16 %v665
        %v777 = vpack.c.b16 %v746, %v745
        %v778 = vpack.c.b16 %v748, %v747
        %v779 = vpack.c.b16 %v750, %v749
        %v780 = vpack.c.b16 %v752, %v751
        %v781 = vpack.c.b16 %v754, %v753
        %v782 = vpack.c.b16 %v756, %v755
        %v783 = vpack.c.b16 %v758, %v757
        %v784 = vpack.c.b16 %v760, %v759
        %v785 = vpack.c.b16 %v762, %v761
        %v786 = vpack.c.b16 %v764, %v763
        %v787 = vpack.c.b16 %v766, %v765
        %v788 = vpack.c.b16 %v768, %v767
        %v789 = vpack.c.b16 %v770, %v769
        %v790 = vpack.c.b16 %v772, %v771
        %v791 = vpack.c.b16 %v774, %v773
        %v792 = vpack.c.b16 %v776, %v775
        %809 = vmatprep.subr.bf16.mxu0 0
        %810 = vmatpush1.bf16.msra.mxu0 %v777
        %811 = vmatprep.subr.bf16.mxu0 0
        %812 = vmatpush1.bf16.msra.mxu0 %v778
        %813 = vmatprep.subr.bf16.mxu0 0
        %814 = vmatpush1.bf16.msra.mxu0 %v779
        %815 = vmatprep.subr.bf16.mxu0 0
        %816 = vmatpush1.bf16.msra.mxu0 %v780
        %817 = vmatprep.subr.bf16.mxu0 0
        %818 = vmatpush1.bf16.msra.mxu0 %v781
        %819 = vmatprep.subr.bf16.mxu0 0
        %820 = vmatpush1.bf16.msra.mxu0 %v782
        %821 = vmatprep.subr.bf16.mxu0 0
        %822 = vmatpush1.bf16.msra.mxu0 %v783
        %823 = vmatprep.subr.bf16.mxu0 0
        %824 = vmatpush1.bf16.msra.mxu0 %v784
        %825 = vmatprep.subr.bf16.mxu0 0
        %826 = vmatpush1.bf16.msra.mxu0 %v785
        %827 = vmatprep.subr.bf16.mxu0 0
        %828 = vmatpush1.bf16.msra.mxu0 %v786
        %829 = vmatprep.subr.bf16.mxu0 0
        %830 = vmatpush1.bf16.msra.mxu0 %v787
        %831 = vmatprep.subr.bf16.mxu0 0
        %832 = vmatpush1.bf16.msra.mxu0 %v788
        %833 = vmatprep.subr.bf16.mxu0 0
        %834 = vmatpush1.bf16.msra.mxu0 %v789
        %835 = vmatprep.subr.bf16.mxu0 0
        %836 = vmatpush1.bf16.msra.mxu0 %v790
        %837 = vmatprep.subr.bf16.mxu0 0
        %838 = vmatpush1.bf16.msra.mxu0 %v791
        %839 = vmatprep.subr.bf16.mxu0 0
        %840 = vmatpush1.bf16.msra.mxu0 %v792
        %841 = vmatprep.mubr.bf16.mxu0 %v698
        %842 = vmatmul.mubr.bf16.gmra.mrb[0].mxu0 %v697
        %v843 = vpop.f32.mrb[0].mxu0
        %v844 = vadd.f32 %v671, %v843
        %v845 = vpop.f32.mrb[0].mxu0
        %v846 = vpop.f32.mrb[0].mxu0
        %v847 = vadd.f32 %v671, %v846
        %v848 = vpop.f32.mrb[0].mxu0
        %849 = vmatprep.mubr.bf16.mxu0 %v700
        %850 = vmatmul.mubr.bf16.gmra.mrb[0].mxu0 %v699
        %v851 = vpop.f32.mrb[0].mxu0
        %v852 = vadd.f32 %v671, %v851
        %v853 = vpop.f32.mrb[0].mxu0
        %v854 = vpop.f32.mrb[0].mxu0
        %v855 = vadd.f32 %v671, %v854
        %v856 = vpop.f32.mrb[0].mxu0
        %857 = vmatprep.mubr.bf16.mxu0 %v702
        %858 = vmatmul.mubr.bf16.gmra.mrb[0].mxu0 %v701
        %v859 = vpop.f32.mrb[0].mxu0
        %v860 = vadd.f32 %v671, %v859
        %v861 = vpop.f32.mrb[0].mxu0
        %v862 = vpop.f32.mrb[0].mxu0
        %v863 = vadd.f32 %v671, %v862
        %v864 = vpop.f32.mrb[0].mxu0
        %865 = vmatprep.mubr.bf16.mxu0 %v704
        %866 = vmatmul.mubr.bf16.gmra.mrb[0].mxu0 %v703
        %v867 = vpop.f32.mrb[0].mxu0
        %v868 = vadd.f32 %v671, %v867
        %v869 = vpop.f32.mrb[0].mxu0
        %v870 = vpop.f32.mrb[0].mxu0
        %v871 = vadd.f32 %v671, %v870
        %v872 = vpop.f32.mrb[0].mxu0
        %873 = vdwg.mxu0
        %v874 = vld [vmem:[%s617] sm:$0xf]
        %v875 = vld [vmem:[%s617 + $0x4] sm:$0xf]
        %v876 = vpack.c.bf16 %v847, %v844
        %v877 = vpack.c.bf16 %v855, %v852
        %v878 = vpack.c.bf16 %v863, %v860
        %v879 = vpack.c.bf16 %v871, %v868
        %v880 = vld [vmem:[%s623] sm:$0xff]
        %v881 = vld [vmem:[%s623 + $0x8] sm:$0xff]
        %v884 = vunpack.c.l.b16 %v874
        %v885 = vunpack.c.l.b16 %v875
        %v886 = vpack.c.b16 %v885, %v884
        %vm887 = vcmask 523264
        %v889 = vsel %vm887, %v886, 0
        %891 = vmatprep.subr.bf16.mxu0 0
        %892 = vmatpush1.bf16.msra.mxu0 %v876
        %893 = vmatprep.subr.bf16.mxu0 0
        %894 = vmatpush1.bf16.msra.mxu0 %v877
        %895 = vmatprep.subr.bf16.mxu0 0
        %896 = vmatpush1.bf16.msra.mxu0 %v878
        %897 = vmatprep.subr.bf16.mxu0 0
        %898 = vmatpush1.bf16.msra.mxu0 %v879
        %899 = vmatprep.subr.bf16.mxu0 0
        %900 = vmatpush1.bf16.msra.mxu0 0
        %901 = vmatprep.subr.bf16.mxu0 0
        %902 = vmatpush1.bf16.msra.mxu0 0
        %903 = vmatprep.subr.bf16.mxu0 0
        %904 = vmatpush1.bf16.msra.mxu0 0
        %905 = vmatprep.subr.bf16.mxu0 0
        %906 = vmatpush1.bf16.msra.mxu0 0
        %907 = vmatprep.subr.bf16.mxu0 0
        %908 = vmatpush1.bf16.msra.mxu0 0
        %909 = vmatprep.subr.bf16.mxu0 0
        %910 = vmatpush1.bf16.msra.mxu0 0
        %911 = vmatprep.subr.bf16.mxu0 0
        %912 = vmatpush1.bf16.msra.mxu0 0
        %913 = vmatprep.subr.bf16.mxu0 0
        %914 = vmatpush1.bf16.msra.mxu0 0
        %915 = vmatprep.subr.bf16.mxu0 0
        %916 = vmatpush1.bf16.msra.mxu0 0
        %917 = vmatprep.subr.bf16.mxu0 0
        %918 = vmatpush1.bf16.msra.mxu0 0
        %919 = vmatprep.subr.bf16.mxu0 0
        %920 = vmatpush1.bf16.msra.mxu0 0
        %921 = vmatprep.subr.bf16.mxu0 0
        %922 = vmatpush1.bf16.msra.mxu0 0
        %923 = vmatprep.mubr.bf16.mxu0 0
        %924 = vmatmul.mubr.bf16.gmra.mrb[0].mxu0 %v889
        %v925 = vpop.f32.mrb[0].mxu0
        %v926 = vadd.f32 %v880, %v925
        %v927 = vpop.f32.mrb[0].mxu0
        %v928 = vpop.f32.mrb[0].mxu0
        %v929 = vadd.f32 %v881, %v928
        %v930 = vpop.f32.mrb[0].mxu0
        %931 = vdwg.mxu0
        %v932 = vlaneseq
        %v933 = vand.u32 %v932, 127
        %vm934 = vcmp.lt.s32.totalorder %v933, 7
        %v935 = vsel %vm934, 0.0, -1e+30
        %v936 = vpack.c.bf16 %v929, %v926
        %v937 = vld [vmem:[%s5] sm:$0xff]
        %v938 = vld [vmem:[%s5 + $0x8] sm:$0xff]
        %v939 = vld [vmem:[%s5 + $0x10] sm:$0xff]
        %v940 = vld [vmem:[%s5 + $0x18] sm:$0xff]
        %v941 = vld [vmem:[%s5 + $0x20] sm:$0xff]
        %v942 = vld [vmem:[%s5 + $0x28] sm:$0xff]
        %v943 = vld [vmem:[%s5 + $0x30] sm:$0xff]
        %v944 = vld [vmem:[%s5 + $0x38] sm:$0xff]
        %v945 = vld [vmem:[%s6] sm:$0x3]
        %v947 = vlaneseq
        %v948 = vshrl.u32 %v947, 7
        %v949 = vsub.s32 0, %v948
        %v950 = vrot.slane %v945, %v949
        %v951 = vlaneseq
        %v952 = vshrl.u32 %v951, 7
        %v953 = vsub.s32 1, %v952
        %v954 = vrot.slane %v945, %v953
        %v965 = vunpack.c.l.b16 %v937
        %v966 = vunpack.c.h.b16 %v937
        %v967 = vunpack.c.l.b16 %v938
        %v968 = vunpack.c.h.b16 %v938
        %v969 = vunpack.c.l.b16 %v939
        %v970 = vunpack.c.h.b16 %v939
        %v971 = vunpack.c.l.b16 %v940
        %v972 = vunpack.c.h.b16 %v940
        %v973 = vunpack.c.l.b16 %v941
        %v974 = vunpack.c.h.b16 %v941
        %v975 = vunpack.c.l.b16 %v942
        %v976 = vunpack.c.h.b16 %v942
        %v977 = vunpack.c.l.b16 %v943
        %v978 = vunpack.c.h.b16 %v943
        %v979 = vunpack.c.l.b16 %v944
        %v980 = vunpack.c.h.b16 %v944
        %v981 = vpack.c.b16 %v967, %v965
        %v982 = vpack.c.b16 %v968, %v966
        %v983 = vpack.c.b16 %v971, %v969
        %v984 = vpack.c.b16 %v972, %v970
        %v985 = vpack.c.b16 %v975, %v973
        %v986 = vpack.c.b16 %v976, %v974
        %v987 = vpack.c.b16 %v979, %v977
        %v988 = vpack.c.b16 %v980, %v978
        %v998 = vsel %vm887, %v936, 0
        %1000 = vmatprep.subr.bf16.mxu0 %v982
        %1001 = vmatpush1.bf16.msra.mxu0 %v981
        %1002 = vmatprep.subr.bf16.mxu0 %v984
        %1003 = vmatpush1.bf16.msra.mxu0 %v983
        %1004 = vmatprep.subr.bf16.mxu0 %v986
        %1005 = vmatpush1.bf16.msra.mxu0 %v985
        %1006 = vmatprep.subr.bf16.mxu0 %v988
        %1007 = vmatpush1.bf16.msra.mxu0 %v987
        %1008 = vmatprep.subr.bf16.mxu0 0
        %1009 = vmatpush1.bf16.msra.mxu0 0
        %1010 = vmatprep.subr.bf16.mxu0 0
        %1011 = vmatpush1.bf16.msra.mxu0 0
        %1012 = vmatprep.subr.bf16.mxu0 0
        %1013 = vmatpush1.bf16.msra.mxu0 0
        %1014 = vmatprep.subr.bf16.mxu0 0
        %1015 = vmatpush1.bf16.msra.mxu0 0
        %1016 = vmatprep.subr.bf16.mxu0 0
        %1017 = vmatpush1.bf16.msra.mxu0 0
        %1018 = vmatprep.subr.bf16.mxu0 0
        %1019 = vmatpush1.bf16.msra.mxu0 0
        %1020 = vmatprep.subr.bf16.mxu0 0
        %1021 = vmatpush1.bf16.msra.mxu0 0
        %1022 = vmatprep.subr.bf16.mxu0 0
        %1023 = vmatpush1.bf16.msra.mxu0 0
        %1024 = vmatprep.subr.bf16.mxu0 0
        %1025 = vmatpush1.bf16.msra.mxu0 0
        %1026 = vmatprep.subr.bf16.mxu0 0
        %1027 = vmatpush1.bf16.msra.mxu0 0
        %1028 = vmatprep.subr.bf16.mxu0 0
        %1029 = vmatpush1.bf16.msra.mxu0 0
        %1030 = vmatprep.subr.bf16.mxu0 0
        %1031 = vmatpush1.bf16.msra.mxu0 0
        %1032 = vmatprep.mubr.bf16.mxu0 0
        %1033 = vmatmul.mubr.bf16.gmra.mrb[0].mxu0 %v998
        %v1034 = vpop.f32.mrb[0].mxu0
        %v1035 = vadd.f32 %v950, %v1034
        %v1036 = vpop.f32.mrb[0].mxu0
        %v1037 = vadd.f32 %v954, %v1036
        %v1038 = vpop.f32.mrb[0].mxu0
        %v1039 = vadd.f32 %v950, %v1038
        %v1040 = vpop.f32.mrb[0].mxu0
        %v1041 = vadd.f32 %v954, %v1040
        %1042 = vdwg.mxu0
        %1045 = vrot.lane.b32.xlu0 %v1035, 112
        %v1046 = vpop.permute.xlu0 %1045
        %1047 = vrot.lane.b32.xlu0 %v1039, 112
        %v1048 = vpop.permute.xlu0 %1047
        %1051 = vrot.lane.b32.xlu0 %v1035, 96
        %v1052 = vpop.permute.xlu0 %1051
        %1053 = vrot.lane.b32.xlu0 %v1039, 96
        %v1054 = vpop.permute.xlu0 %1053
        %1057 = vrot.lane.b32.xlu0 %v1035, 80
        %v1058 = vpop.permute.xlu0 %1057
        %1059 = vrot.lane.b32.xlu0 %v1039, 80
        %v1060 = vpop.permute.xlu0 %1059
        %v1063 = vpack.c.bf16 %v1035, %v1035
        %v1064 = vpack.c.bf16 %v1039, %v1039
        %v1065 = vpack.c.bf16 %v1046, %v1046
        %v1066 = vpack.c.bf16 %v1048, %v1048
        %v1067 = vpack.c.bf16 %v1052, %v1052
        %v1068 = vpack.c.bf16 %v1054, %v1054
        %v1069 = vpack.c.bf16 %v1058, %v1058
        %v1070 = vpack.c.bf16 %v1060, %v1060
        %1073 = vrot.lane.b32.xlu0 %v1037, 112
        %v1074 = vpop.permute.xlu0 %1073
        %1075 = vrot.lane.b32.xlu0 %v1041, 112
        %v1076 = vpop.permute.xlu0 %1075
        %1079 = vrot.lane.b32.xlu0 %v1037, 96
        %v1080 = vpop.permute.xlu0 %1079
        %1081 = vrot.lane.b32.xlu0 %v1041, 96
        %v1082 = vpop.permute.xlu0 %1081
        %1085 = vrot.lane.b32.xlu0 %v1037, 80
        %v1086 = vpop.permute.xlu0 %1085
        %1087 = vrot.lane.b32.xlu0 %v1041, 80
        %v1088 = vpop.permute.xlu0 %1087
        %v1091 = vpack.c.bf16 %v1037, %v1037
        %v1092 = vpack.c.bf16 %v1041, %v1041
        %v1093 = vpack.c.bf16 %v1074, %v1074
        %v1094 = vpack.c.bf16 %v1076, %v1076
        %v1095 = vpack.c.bf16 %v1080, %v1080
        %v1096 = vpack.c.bf16 %v1082, %v1082
        %v1097 = vpack.c.bf16 %v1086, %v1086
        %v1098 = vpack.c.bf16 %v1088, %v1088
        %1100 = vrot.lane.b32.xlu0 %v1063, 64
        %v1101 = vpop.permute.xlu0 %1100
        %vm1102 = vcmask 130048
        %v1104 = vsel %vm1102, %v1063, 0
        %v1107 = vsel %vm1102, %v1101, 0
        %1109 = vmatprep.subr.bf16.mxu0 0
        %1110 = vmatpush1.bf16.xpose.msra.mxu0 %v1107
        %1111 = vmatprep.subr.bf16.mxu0 0
        %1112 = vmatpush1.bf16.xpose.msra.mxu0 0
        %1113 = vmatprep.subr.bf16.mxu0 0
        %1114 = vmatpush1.bf16.xpose.msra.mxu0 0
        %1115 = vmatprep.subr.bf16.mxu0 0
        %1116 = vmatpush1.bf16.xpose.msra.mxu0 0
        %1117 = vmatprep.subr.bf16.mxu0 0
        %1118 = vmatpush1.bf16.xpose.msra.mxu0 0
        %1119 = vmatprep.subr.bf16.mxu0 0
        %1120 = vmatpush1.bf16.xpose.msra.mxu0 0
        %1121 = vmatprep.subr.bf16.mxu0 0
        %1122 = vmatpush1.bf16.xpose.msra.mxu0 0
        %1123 = vmatprep.subr.bf16.mxu0 0
        %1124 = vmatpush1.bf16.xpose.msra.mxu0 0
        %1125 = vmatprep.subr.bf16.mxu0 0
        %1126 = vmatpush1.bf16.xpose.msra.mxu0 0
        %1127 = vmatprep.subr.bf16.mxu0 0
        %1128 = vmatpush1.bf16.xpose.msra.mxu0 0
        %1129 = vmatprep.subr.bf16.mxu0 0
        %1130 = vmatpush1.bf16.xpose.msra.mxu0 0
        %1131 = vmatprep.subr.bf16.mxu0 0
        %1132 = vmatpush1.bf16.xpose.msra.mxu0 0
        %1133 = vmatprep.subr.bf16.mxu0 0
        %1134 = vmatpush1.bf16.xpose.msra.mxu0 0
        %1135 = vmatprep.subr.bf16.mxu0 0
        %1136 = vmatpush1.bf16.xpose.msra.mxu0 0
        %1137 = vmatprep.subr.bf16.mxu0 0
        %1138 = vmatpush1.bf16.xpose.msra.mxu0 0
        %1139 = vmatprep.subr.bf16.mxu0 0
        %1140 = vmatpush1.bf16.xpose.msra.mxu0 0
        %1141 = vmatprep.mubr.bf16.mxu0 0
        %1142 = vmatmul.mubr.bf16.gmra.mrb[0].mxu0 %v1104
        %v1143 = vpop.f32.mrb[0].mxu0
        %v1144 = vadd.f32 %v935, %v1143
        %v1145 = vpop.f32.mrb[0].mxu0
        %v1146 = vpop.f32.mrb[0].mxu0
        %v1147 = vpop.f32.mrb[0].mxu0
        %1148 = vdwg.mxu0
        %1150 = vrot.lane.b32.xlu0 %v1064, 64
        %v1151 = vpop.permute.xlu0 %1150
        %v1153 = vsel %vm1102, %v1064, 0
        %v1156 = vsel %vm1102, %v1151, 0
        %1158 = vmatprep.subr.bf16.mxu0 0
        %1159 = vmatpush1.bf16.xpose.msra.mxu0 %v1156
        %1160 = vmatprep.subr.bf16.mxu0 0
        %1161 = vmatpush1.bf16.xpose.msra.mxu0 0
        %1162 = vmatprep.subr.bf16.mxu0 0
        %1163 = vmatpush1.bf16.xpose.msra.mxu0 0
        %1164 = vmatprep.subr.bf16.mxu0 0
        %1165 = vmatpush1.bf16.xpose.msra.mxu0 0
        %1166 = vmatprep.subr.bf16.mxu0 0
        %1167 = vmatpush1.bf16.xpose.msra.mxu0 0
        %1168 = vmatprep.subr.bf16.mxu0 0
        %1169 = vmatpush1.bf16.xpose.msra.mxu0 0
        %1170 = vmatprep.subr.bf16.mxu0 0
        %1171 = vmatpush1.bf16.xpose.msra.mxu0 0
        %1172 = vmatprep.subr.bf16.mxu0 0
        %1173 = vmatpush1.bf16.xpose.msra.mxu0 0
        %1174 = vmatprep.subr.bf16.mxu0 0
        %1175 = vmatpush1.bf16.xpose.msra.mxu0 0
        %1176 = vmatprep.subr.bf16.mxu0 0
        %1177 = vmatpush1.bf16.xpose.msra.mxu0 0
        %1178 = vmatprep.subr.bf16.mxu0 0
        %1179 = vmatpush1.bf16.xpose.msra.mxu0 0
        %1180 = vmatprep.subr.bf16.mxu0 0
        %1181 = vmatpush1.bf16.xpose.msra.mxu0 0
        %1182 = vmatprep.subr.bf16.mxu0 0
        %1183 = vmatpush1.bf16.xpose.msra.mxu0 0
        %1184 = vmatprep.subr.bf16.mxu0 0
        %1185 = vmatpush1.bf16.xpose.msra.mxu0 0
        %1186 = vmatprep.subr.bf16.mxu0 0
        %1187 = vmatpush1.bf16.xpose.msra.mxu0 0
        %1188 = vmatprep.subr.bf16.mxu0 0
        %1189 = vmatpush1.bf16.xpose.msra.mxu0 0
        %1190 = vmatprep.mubr.bf16.mxu0 0
        %1191 = vmatmul.mubr.bf16.gmra.mrb[0].mxu0 %v1153
        %v1192 = vpop.f32.mrb[0].mxu0
        %v1193 = vadd.f32 %v935, %v1192
        %v1194 = vpop.f32.mrb[0].mxu0
        %v1195 = vpop.f32.mrb[0].mxu0
        %v1196 = vpop.f32.mrb[0].mxu0
        %1197 = vdwg.mxu0
        %1199 = vrot.lane.b32.xlu0 %v1065, 64
        %v1200 = vpop.permute.xlu0 %1199
        %v1202 = vsel %vm1102, %v1065, 0
        %v1205 = vsel %vm1102, %v1200, 0
        %1207 = vmatprep.subr.bf16.mxu0 0
        %1208 = vmatpush1.bf16.xpose.msra.mxu0 %v1205
        %1209 = vmatprep.subr.bf16.mxu0 0
        %1210 = vmatpush1.bf16.xpose.msra.mxu0 0
        %1211 = vmatprep.subr.bf16.mxu0 0
        %1212 = vmatpush1.bf16.xpose.msra.mxu0 0
        %1213 = vmatprep.subr.bf16.mxu0 0
        %1214 = vmatpush1.bf16.xpose.msra.mxu0 0
        %1215 = vmatprep.subr.bf16.mxu0 0
        %1216 = vmatpush1.bf16.xpose.msra.mxu0 0
        %1217 = vmatprep.subr.bf16.mxu0 0
        %1218 = vmatpush1.bf16.xpose.msra.mxu0 0
        %1219 = vmatprep.subr.bf16.mxu0 0
        %1220 = vmatpush1.bf16.xpose.msra.mxu0 0
        %1221 = vmatprep.subr.bf16.mxu0 0
        %1222 = vmatpush1.bf16.xpose.msra.mxu0 0
        %1223 = vmatprep.subr.bf16.mxu0 0
        %1224 = vmatpush1.bf16.xpose.msra.mxu0 0
        %1225 = vmatprep.subr.bf16.mxu0 0
        %1226 = vmatpush1.bf16.xpose.msra.mxu0 0
        %1227 = vmatprep.subr.bf16.mxu0 0
        %1228 = vmatpush1.bf16.xpose.msra.mxu0 0
        %1229 = vmatprep.subr.bf16.mxu0 0
        %1230 = vmatpush1.bf16.xpose.msra.mxu0 0
        %1231 = vmatprep.subr.bf16.mxu0 0
        %1232 = vmatpush1.bf16.xpose.msra.mxu0 0
        %1233 = vmatprep.subr.bf16.mxu0 0
        %1234 = vmatpush1.bf16.xpose.msra.mxu0 0
        %1235 = vmatprep.subr.bf16.mxu0 0
        %1236 = vmatpush1.bf16.xpose.msra.mxu0 0
        %1237 = vmatprep.subr.bf16.mxu0 0
        %1238 = vmatpush1.bf16.xpose.msra.mxu0 0
        %1239 = vmatprep.mubr.bf16.mxu0 0
        %1240 = vmatmul.mubr.bf16.gmra.mrb[0].mxu0 %v1202
        %v1241 = vpop.f32.mrb[0].mxu0
        %v1242 = vadd.f32 %v935, %v1241
        %v1243 = vpop.f32.mrb[0].mxu0
        %v1244 = vpop.f32.mrb[0].mxu0
        %v1245 = vpop.f32.mrb[0].mxu0
        %1246 = vdwg.mxu0
        %1248 = vrot.lane.b32.xlu0 %v1066, 64
        %v1249 = vpop.permute.xlu0 %1248
        %v1251 = vsel %vm1102, %v1066, 0
        %v1254 = vsel %vm1102, %v1249, 0
        %1256 = vmatprep.subr.bf16.mxu0 0
        %1257 = vmatpush1.bf16.xpose.msra.mxu0 %v1254
        %1258 = vmatprep.subr.bf16.mxu0 0
        %1259 = vmatpush1.bf16.xpose.msra.mxu0 0
        %1260 = vmatprep.subr.bf16.mxu0 0
        %1261 = vmatpush1.bf16.xpose.msra.mxu0 0
        %1262 = vmatprep.subr.bf16.mxu0 0
        %1263 = vmatpush1.bf16.xpose.msra.mxu0 0
        %1264 = vmatprep.subr.bf16.mxu0 0
        %1265 = vmatpush1.bf16.xpose.msra.mxu0 0
        %1266 = vmatprep.subr.bf16.mxu0 0
        %1267 = vmatpush1.bf16.xpose.msra.mxu0 0
        %1268 = vmatprep.subr.bf16.mxu0 0
        %1269 = vmatpush1.bf16.xpose.msra.mxu0 0
        %1270 = vmatprep.subr.bf16.mxu0 0
        %1271 = vmatpush1.bf16.xpose.msra.mxu0 0
        %1272 = vmatprep.subr.bf16.mxu0 0
        %1273 = vmatpush1.bf16.xpose.msra.mxu0 0
        %1274 = vmatprep.subr.bf16.mxu0 0
        %1275 = vmatpush1.bf16.xpose.msra.mxu0 0
        %1276 = vmatprep.subr.bf16.mxu0 0
        %1277 = vmatpush1.bf16.xpose.msra.mxu0 0
        %1278 = vmatprep.subr.bf16.mxu0 0
        %1279 = vmatpush1.bf16.xpose.msra.mxu0 0
        %1280 = vmatprep.subr.bf16.mxu0 0
        %1281 = vmatpush1.bf16.xpose.msra.mxu0 0
        %1282 = vmatprep.subr.bf16.mxu0 0
        %1283 = vmatpush1.bf16.xpose.msra.mxu0 0
        %1284 = vmatprep.subr.bf16.mxu0 0
        %1285 = vmatpush1.bf16.xpose.msra.mxu0 0
        %1286 = vmatprep.subr.bf16.mxu0 0
        %1287 = vmatpush1.bf16.xpose.msra.mxu0 0
        %1288 = vmatprep.mubr.bf16.mxu0 0
        %1289 = vmatmul.mubr.bf16.gmra.mrb[0].mxu0 %v1251
        %v1290 = vpop.f32.mrb[0].mxu0
        %v1291 = vadd.f32 %v935, %v1290
        %v1292 = vpop.f32.mrb[0].mxu0
        %v1293 = vpop.f32.mrb[0].mxu0
        %v1294 = vpop.f32.mrb[0].mxu0
        %1295 = vdwg.mxu0
        %1297 = vrot.lane.b32.xlu0 %v1067, 64
        %v1298 = vpop.permute.xlu0 %1297
        %v1300 = vsel %vm1102, %v1067, 0
        %v1303 = vsel %vm1102, %v1298, 0
        %1305 = vmatprep.subr.bf16.mxu0 0
        %1306 = vmatpush1.bf16.xpose.msra.mxu0 %v1303
        %1307 = vmatprep.subr.bf16.mxu0 0
        %1308 = vmatpush1.bf16.xpose.msra.mxu0 0
        %1309 = vmatprep.subr.bf16.mxu0 0
        %1310 = vmatpush1.bf16.xpose.msra.mxu0 0
        %1311 = vmatprep.subr.bf16.mxu0 0
        %1312 = vmatpush1.bf16.xpose.msra.mxu0 0
        %1313 = vmatprep.subr.bf16.mxu0 0
        %1314 = vmatpush1.bf16.xpose.msra.mxu0 0
        %1315 = vmatprep.subr.bf16.mxu0 0
        %1316 = vmatpush1.bf16.xpose.msra.mxu0 0
        %1317 = vmatprep.subr.bf16.mxu0 0
        %1318 = vmatpush1.bf16.xpose.msra.mxu0 0
        %1319 = vmatprep.subr.bf16.mxu0 0
        %1320 = vmatpush1.bf16.xpose.msra.mxu0 0
        %1321 = vmatprep.subr.bf16.mxu0 0
        %1322 = vmatpush1.bf16.xpose.msra.mxu0 0
        %1323 = vmatprep.subr.bf16.mxu0 0
        %1324 = vmatpush1.bf16.xpose.msra.mxu0 0
        %1325 = vmatprep.subr.bf16.mxu0 0
        %1326 = vmatpush1.bf16.xpose.msra.mxu0 0
        %1327 = vmatprep.subr.bf16.mxu0 0
        %1328 = vmatpush1.bf16.xpose.msra.mxu0 0
        %1329 = vmatprep.subr.bf16.mxu0 0
        %1330 = vmatpush1.bf16.xpose.msra.mxu0 0
        %1331 = vmatprep.subr.bf16.mxu0 0
        %1332 = vmatpush1.bf16.xpose.msra.mxu0 0
        %1333 = vmatprep.subr.bf16.mxu0 0
        %1334 = vmatpush1.bf16.xpose.msra.mxu0 0
        %1335 = vmatprep.subr.bf16.mxu0 0
        %1336 = vmatpush1.bf16.xpose.msra.mxu0 0
        %1337 = vmatprep.mubr.bf16.mxu0 0
        %1338 = vmatmul.mubr.bf16.gmra.mrb[0].mxu0 %v1300
        %v1339 = vpop.f32.mrb[0].mxu0
        %v1340 = vadd.f32 %v935, %v1339
        %v1341 = vpop.f32.mrb[0].mxu0
        %v1342 = vpop.f32.mrb[0].mxu0
        %v1343 = vpop.f32.mrb[0].mxu0
        %1344 = vdwg.mxu0
        %1346 = vrot.lane.b32.xlu0 %v1068, 64
        %v1347 = vpop.permute.xlu0 %1346
        %v1349 = vsel %vm1102, %v1068, 0
        %v1352 = vsel %vm1102, %v1347, 0
        %1354 = vmatprep.subr.bf16.mxu0 0
        %1355 = vmatpush1.bf16.xpose.msra.mxu0 %v1352
        %1356 = vmatprep.subr.bf16.mxu0 0
        %1357 = vmatpush1.bf16.xpose.msra.mxu0 0
        %1358 = vmatprep.subr.bf16.mxu0 0
        %1359 = vmatpush1.bf16.xpose.msra.mxu0 0
        %1360 = vmatprep.subr.bf16.mxu0 0
        %1361 = vmatpush1.bf16.xpose.msra.mxu0 0
        %1362 = vmatprep.subr.bf16.mxu0 0
        %1363 = vmatpush1.bf16.xpose.msra.mxu0 0
        %1364 = vmatprep.subr.bf16.mxu0 0
        %1365 = vmatpush1.bf16.xpose.msra.mxu0 0
        %1366 = vmatprep.subr.bf16.mxu0 0
        %1367 = vmatpush1.bf16.xpose.msra.mxu0 0
        %1368 = vmatprep.subr.bf16.mxu0 0
        %1369 = vmatpush1.bf16.xpose.msra.mxu0 0
        %1370 = vmatprep.subr.bf16.mxu0 0
        %1371 = vmatpush1.bf16.xpose.msra.mxu0 0
        %1372 = vmatprep.subr.bf16.mxu0 0
        %1373 = vmatpush1.bf16.xpose.msra.mxu0 0
        %1374 = vmatprep.subr.bf16.mxu0 0
        %1375 = vmatpush1.bf16.xpose.msra.mxu0 0
        %1376 = vmatprep.subr.bf16.mxu0 0
        %1377 = vmatpush1.bf16.xpose.msra.mxu0 0
        %1378 = vmatprep.subr.bf16.mxu0 0
        %1379 = vmatpush1.bf16.xpose.msra.mxu0 0
        %1380 = vmatprep.subr.bf16.mxu0 0
        %1381 = vmatpush1.bf16.xpose.msra.mxu0 0
        %1382 = vmatprep.subr.bf16.mxu0 0
        %1383 = vmatpush1.bf16.xpose.msra.mxu0 0
        %1384 = vmatprep.subr.bf16.mxu0 0
        %1385 = vmatpush1.bf16.xpose.msra.mxu0 0
        %1386 = vmatprep.mubr.bf16.mxu0 0
        %1387 = vmatmul.mubr.bf16.gmra.mrb[0].mxu0 %v1349
        %v1388 = vpop.f32.mrb[0].mxu0
        %v1389 = vadd.f32 %v935, %v1388
        %v1390 = vpop.f32.mrb[0].mxu0
        %v1391 = vpop.f32.mrb[0].mxu0
        %v1392 = vpop.f32.mrb[0].mxu0
        %1393 = vdwg.mxu0
        %1395 = vrot.lane.b32.xlu0 %v1069, 64
        %v1396 = vpop.permute.xlu0 %1395
        %v1398 = vsel %vm1102, %v1069, 0
        %v1401 = vsel %vm1102, %v1396, 0
        %1403 = vmatprep.subr.bf16.mxu0 0
        %1404 = vmatpush1.bf16.xpose.msra.mxu0 %v1401
        %1405 = vmatprep.subr.bf16.mxu0 0
        %1406 = vmatpush1.bf16.xpose.msra.mxu0 0
        %1407 = vmatprep.subr.bf16.mxu0 0
        %1408 = vmatpush1.bf16.xpose.msra.mxu0 0
        %1409 = vmatprep.subr.bf16.mxu0 0
        %1410 = vmatpush1.bf16.xpose.msra.mxu0 0
        %1411 = vmatprep.subr.bf16.mxu0 0
        %1412 = vmatpush1.bf16.xpose.msra.mxu0 0
        %1413 = vmatprep.subr.bf16.mxu0 0
        %1414 = vmatpush1.bf16.xpose.msra.mxu0 0
        %1415 = vmatprep.subr.bf16.mxu0 0
        %1416 = vmatpush1.bf16.xpose.msra.mxu0 0
        %1417 = vmatprep.subr.bf16.mxu0 0
        %1418 = vmatpush1.bf16.xpose.msra.mxu0 0
        %1419 = vmatprep.subr.bf16.mxu0 0
        %1420 = vmatpush1.bf16.xpose.msra.mxu0 0
        %1421 = vmatprep.subr.bf16.mxu0 0
        %1422 = vmatpush1.bf16.xpose.msra.mxu0 0
        %1423 = vmatprep.subr.bf16.mxu0 0
        %1424 = vmatpush1.bf16.xpose.msra.mxu0 0
        %1425 = vmatprep.subr.bf16.mxu0 0
        %1426 = vmatpush1.bf16.xpose.msra.mxu0 0
        %1427 = vmatprep.subr.bf16.mxu0 0
        %1428 = vmatpush1.bf16.xpose.msra.mxu0 0
        %1429 = vmatprep.subr.bf16.mxu0 0
        %1430 = vmatpush1.bf16.xpose.msra.mxu0 0
        %1431 = vmatprep.subr.bf16.mxu0 0
        %1432 = vmatpush1.bf16.xpose.msra.mxu0 0
        %1433 = vmatprep.subr.bf16.mxu0 0
        %1434 = vmatpush1.bf16.xpose.msra.mxu0 0
        %1435 = vmatprep.mubr.bf16.mxu0 0
        %1436 = vmatmul.mubr.bf16.gmra.mrb[0].mxu0 %v1398
        %v1437 = vpop.f32.mrb[0].mxu0
        %v1438 = vadd.f32 %v935, %v1437
        %v1439 = vpop.f32.mrb[0].mxu0
        %v1440 = vpop.f32.mrb[0].mxu0
        %v1441 = vpop.f32.mrb[0].mxu0
        %1442 = vdwg.mxu0
        %1444 = vrot.lane.b32.xlu0 %v1070, 64
        %v1445 = vpop.permute.xlu0 %1444
        %v1447 = vsel %vm1102, %v1070, 0
        %v1450 = vsel %vm1102, %v1445, 0
        %1452 = vmatprep.subr.bf16.mxu0 0
        %1453 = vmatpush1.bf16.xpose.msra.mxu0 %v1450
        %1454 = vmatprep.subr.bf16.mxu0 0
        %1455 = vmatpush1.bf16.xpose.msra.mxu0 0
        %1456 = vmatprep.subr.bf16.mxu0 0
        %1457 = vmatpush1.bf16.xpose.msra.mxu0 0
        %1458 = vmatprep.subr.bf16.mxu0 0
        %1459 = vmatpush1.bf16.xpose.msra.mxu0 0
        %1460 = vmatprep.subr.bf16.mxu0 0
        %1461 = vmatpush1.bf16.xpose.msra.mxu0 0
        %1462 = vmatprep.subr.bf16.mxu0 0
        %1463 = vmatpush1.bf16.xpose.msra.mxu0 0
        %1464 = vmatprep.subr.bf16.mxu0 0
        %1465 = vmatpush1.bf16.xpose.msra.mxu0 0
        %1466 = vmatprep.subr.bf16.mxu0 0
        %1467 = vmatpush1.bf16.xpose.msra.mxu0 0
        %1468 = vmatprep.subr.bf16.mxu0 0
        %1469 = vmatpush1.bf16.xpose.msra.mxu0 0
        %1470 = vmatprep.subr.bf16.mxu0 0
        %1471 = vmatpush1.bf16.xpose.msra.mxu0 0
        %1472 = vmatprep.subr.bf16.mxu0 0
        %1473 = vmatpush1.bf16.xpose.msra.mxu0 0
        %1474 = vmatprep.subr.bf16.mxu0 0
        %1475 = vmatpush1.bf16.xpose.msra.mxu0 0
        %1476 = vmatprep.subr.bf16.mxu0 0
        %1477 = vmatpush1.bf16.xpose.msra.mxu0 0
        %1478 = vmatprep.subr.bf16.mxu0 0
        %1479 = vmatpush1.bf16.xpose.msra.mxu0 0
        %1480 = vmatprep.subr.bf16.mxu0 0
        %1481 = vmatpush1.bf16.xpose.msra.mxu0 0
        %1482 = vmatprep.subr.bf16.mxu0 0
        %1483 = vmatpush1.bf16.xpose.msra.mxu0 0
        %1484 = vmatprep.mubr.bf16.mxu0 0
        %1485 = vmatmul.mubr.bf16.gmra.mrb[0].mxu0 %v1447
        %v1486 = vpop.f32.mrb[0].mxu0
        %v1487 = vadd.f32 %v935, %v1486
        %v1488 = vpop.f32.mrb[0].mxu0
        %v1489 = vpop.f32.mrb[0].mxu0
        %v1490 = vpop.f32.mrb[0].mxu0
        %1491 = vdwg.mxu0
        %vm1492 = vcmask 64512
        %v1493 = vsel %vm1492, %v1144, -inf
        %1494 = vmax.xlane.f32.xlu0 %v1493
        %v1495 = vpop.xlane.xlu0 %1494
        %v1496 = vsel %vm1492, %v1193, -inf
        %1497 = vmax.xlane.f32.xlu0 %v1496
        %v1498 = vpop.xlane.xlu0 %1497
        %v1499 = vsel %vm1492, %v1242, -inf
        %1500 = vmax.xlane.f32.xlu0 %v1499
        %v1501 = vpop.xlane.xlu0 %1500
        %v1502 = vsel %vm1492, %v1291, -inf
        %1503 = vmax.xlane.f32.xlu0 %v1502
        %v1504 = vpop.xlane.xlu0 %1503
        %v1505 = vsel %vm1492, %v1340, -inf
        %1506 = vmax.xlane.f32.xlu0 %v1505
        %v1507 = vpop.xlane.xlu0 %1506
        %v1508 = vsel %vm1492, %v1389, -inf
        %1509 = vmax.xlane.f32.xlu0 %v1508
        %v1510 = vpop.xlane.xlu0 %1509
        %v1511 = vsel %vm1492, %v1438, -inf
        %1512 = vmax.xlane.f32.xlu0 %v1511
        %v1513 = vpop.xlane.xlu0 %1512
        %v1514 = vsel %vm1492, %v1487, -inf
        %1515 = vmax.xlane.f32.xlu0 %v1514
        %v1516 = vpop.xlane.xlu0 %1515
        %v1517 = vsub.f32 %v1144, %v1495
        %v1518 = vsub.f32 %v1193, %v1498
        %v1519 = vsub.f32 %v1242, %v1501
        %v1520 = vsub.f32 %v1291, %v1504
        %v1521 = vsub.f32 %v1340, %v1507
        %v1522 = vsub.f32 %v1389, %v1510
        %v1523 = vsub.f32 %v1438, %v1513
        %v1524 = vsub.f32 %v1487, %v1516
        %v1525 = vmul.f32 %v1517, 1.442695
        %v1526 = vpow.pop %v1525
        %v1527 = vmul.f32 %v1518, 1.442695
        %v1528 = vpow.pop %v1527
        %v1529 = vmul.f32 %v1519, 1.442695
        %v1530 = vpow.pop %v1529
        %v1531 = vmul.f32 %v1520, 1.442695
        %v1532 = vpow.pop %v1531
        %v1533 = vmul.f32 %v1521, 1.442695
        %v1534 = vpow.pop %v1533
        %v1535 = vmul.f32 %v1522, 1.442695
        %v1536 = vpow.pop %v1535
        %v1537 = vmul.f32 %v1523, 1.442695
        %v1538 = vpow.pop %v1537
        %v1539 = vmul.f32 %v1524, 1.442695
        %v1540 = vpow.pop %v1539
        %v1541 = vsel %vm1492, %v1526, 0.0
        %1542 = vadd.xlane.f32.xlu0 %v1541
        %v1543 = vpop.xlane.xlu0 %1542
        %v1544 = vsel %vm1492, %v1528, 0.0
        %1545 = vadd.xlane.f32.xlu0 %v1544
        %v1546 = vpop.xlane.xlu0 %1545
        %v1547 = vsel %vm1492, %v1530, 0.0
        %1548 = vadd.xlane.f32.xlu0 %v1547
        %v1549 = vpop.xlane.xlu0 %1548
        %v1550 = vsel %vm1492, %v1532, 0.0
        %1551 = vadd.xlane.f32.xlu0 %v1550
        %v1552 = vpop.xlane.xlu0 %1551
        %v1553 = vsel %vm1492, %v1534, 0.0
        %1554 = vadd.xlane.f32.xlu0 %v1553
        %v1555 = vpop.xlane.xlu0 %1554
        %v1556 = vsel %vm1492, %v1536, 0.0
        %1557 = vadd.xlane.f32.xlu0 %v1556
        %v1558 = vpop.xlane.xlu0 %1557
        %v1559 = vsel %vm1492, %v1538, 0.0
        %1560 = vadd.xlane.f32.xlu0 %v1559
        %v1561 = vpop.xlane.xlu0 %1560
        %v1562 = vsel %vm1492, %v1540, 0.0
        %1563 = vadd.xlane.f32.xlu0 %v1562
        %v1564 = vpop.xlane.xlu0 %1563
        %v1565 = vrcp.pop %v1543
        %v1566 = vrcp.pop %v1546
        %v1567 = vrcp.pop %v1549
        %v1568 = vrcp.pop %v1552
        %v1569 = vrcp.pop %v1555
        %v1570 = vrcp.pop %v1558
        %v1571 = vrcp.pop %v1561
        %v1572 = vrcp.pop %v1564
        %v1573 = vmul.f32 %v1526, %v1565
        %v1574 = vmul.f32 %v1528, %v1566
        %v1575 = vmul.f32 %v1530, %v1567
        %v1576 = vmul.f32 %v1532, %v1568
        %v1577 = vmul.f32 %v1534, %v1569
        %v1578 = vmul.f32 %v1536, %v1570
        %v1579 = vmul.f32 %v1538, %v1571
        %v1580 = vmul.f32 %v1540, %v1572
        %v1581 = vpack.c.bf16 %v1573, %v1573
        %v1582 = vpack.c.bf16 %v1574, %v1574
        %v1583 = vpack.c.bf16 %v1575, %v1575
        %v1584 = vpack.c.bf16 %v1576, %v1576
        %v1585 = vpack.c.bf16 %v1577, %v1577
        %v1586 = vpack.c.bf16 %v1578, %v1578
        %v1587 = vpack.c.bf16 %v1579, %v1579
        %v1588 = vpack.c.bf16 %v1580, %v1580
        %v1590 = vsel %vm1492, %v1581, 0
        %vm1592 = vcmask 1043456
        %v1594 = vsel %vm1592, %v1091, 0
        %1596 = vmatprep.subr.bf16.mxu0 0
        %1597 = vmatpush1.bf16.msra.mxu0 %v1594
        %1598 = vmatprep.subr.bf16.mxu0 0
        %1599 = vmatpush1.bf16.msra.mxu0 0
        %1600 = vmatprep.subr.bf16.mxu0 0
        %1601 = vmatpush1.bf16.msra.mxu0 0
        %1602 = vmatprep.subr.bf16.mxu0 0
        %1603 = vmatpush1.bf16.msra.mxu0 0
        %1604 = vmatprep.subr.bf16.mxu0 0
        %1605 = vmatpush1.bf16.msra.mxu0 0
        %1606 = vmatprep.subr.bf16.mxu0 0
        %1607 = vmatpush1.bf16.msra.mxu0 0
        %1608 = vmatprep.subr.bf16.mxu0 0
        %1609 = vmatpush1.bf16.msra.mxu0 0
        %1610 = vmatprep.subr.bf16.mxu0 0
        %1611 = vmatpush1.bf16.msra.mxu0 0
        %1612 = vmatprep.subr.bf16.mxu0 0
        %1613 = vmatpush1.bf16.msra.mxu0 0
        %1614 = vmatprep.subr.bf16.mxu0 0
        %1615 = vmatpush1.bf16.msra.mxu0 0
        %1616 = vmatprep.subr.bf16.mxu0 0
        %1617 = vmatpush1.bf16.msra.mxu0 0
        %1618 = vmatprep.subr.bf16.mxu0 0
        %1619 = vmatpush1.bf16.msra.mxu0 0
        %1620 = vmatprep.subr.bf16.mxu0 0
        %1621 = vmatpush1.bf16.msra.mxu0 0
        %1622 = vmatprep.subr.bf16.mxu0 0
        %1623 = vmatpush1.bf16.msra.mxu0 0
        %1624 = vmatprep.subr.bf16.mxu0 0
        %1625 = vmatpush1.bf16.msra.mxu0 0
        %1626 = vmatprep.subr.bf16.mxu0 0
        %1627 = vmatpush1.bf16.msra.mxu0 0
        %1628 = vmatprep.mubr.bf16.mxu0 0
        %1629 = vmatmul.mubr.bf16.gmra.mrb[0].mxu0 %v1590
        %v1630 = vpop.f32.mrb[0].mxu0
        %v1631 = vadd.f32 0.0, %v1630
        %v1632 = vpop.f32.mrb[0].mxu0
        %v1633 = vpop.f32.mrb[0].mxu0
        %v1634 = vpop.f32.mrb[0].mxu0
        %1635 = vdwg.mxu0
        %v1637 = vsel %vm1492, %v1582, 0
        %v1640 = vsel %vm1592, %v1092, 0
        %1642 = vmatprep.subr.bf16.mxu0 0
        %1643 = vmatpush1.bf16.msra.mxu0 %v1640
        %1644 = vmatprep.subr.bf16.mxu0 0
        %1645 = vmatpush1.bf16.msra.mxu0 0
        %1646 = vmatprep.subr.bf16.mxu0 0
        %1647 = vmatpush1.bf16.msra.mxu0 0
        %1648 = vmatprep.subr.bf16.mxu0 0
        %1649 = vmatpush1.bf16.msra.mxu0 0
        %1650 = vmatprep.subr.bf16.mxu0 0
        %1651 = vmatpush1.bf16.msra.mxu0 0
        %1652 = vmatprep.subr.bf16.mxu0 0
        %1653 = vmatpush1.bf16.msra.mxu0 0
        %1654 = vmatprep.subr.bf16.mxu0 0
        %1655 = vmatpush1.bf16.msra.mxu0 0
        %1656 = vmatprep.subr.bf16.mxu0 0
        %1657 = vmatpush1.bf16.msra.mxu0 0
        %1658 = vmatprep.subr.bf16.mxu0 0
        %1659 = vmatpush1.bf16.msra.mxu0 0
        %1660 = vmatprep.subr.bf16.mxu0 0
        %1661 = vmatpush1.bf16.msra.mxu0 0
        %1662 = vmatprep.subr.bf16.mxu0 0
        %1663 = vmatpush1.bf16.msra.mxu0 0
        %1664 = vmatprep.subr.bf16.mxu0 0
        %1665 = vmatpush1.bf16.msra.mxu0 0
        %1666 = vmatprep.subr.bf16.mxu0 0
        %1667 = vmatpush1.bf16.msra.mxu0 0
        %1668 = vmatprep.subr.bf16.mxu0 0
        %1669 = vmatpush1.bf16.msra.mxu0 0
        %1670 = vmatprep.subr.bf16.mxu0 0
        %1671 = vmatpush1.bf16.msra.mxu0 0
        %1672 = vmatprep.subr.bf16.mxu0 0
        %1673 = vmatpush1.bf16.msra.mxu0 0
        %1674 = vmatprep.mubr.bf16.mxu0 0
        %1675 = vmatmul.mubr.bf16.gmra.mrb[0].mxu0 %v1637
        %v1676 = vpop.f32.mrb[0].mxu0
        %v1677 = vadd.f32 0.0, %v1676
        %v1678 = vpop.f32.mrb[0].mxu0
        %v1679 = vpop.f32.mrb[0].mxu0
        %v1680 = vpop.f32.mrb[0].mxu0
        %1681 = vdwg.mxu0
        %v1683 = vsel %vm1492, %v1583, 0
        %v1686 = vsel %vm1592, %v1093, 0
        %1688 = vmatprep.subr.bf16.mxu0 0
        %1689 = vmatpush1.bf16.msra.mxu0 %v1686
        %1690 = vmatprep.subr.bf16.mxu0 0
        %1691 = vmatpush1.bf16.msra.mxu0 0
        %1692 = vmatprep.subr.bf16.mxu0 0
        %1693 = vmatpush1.bf16.msra.mxu0 0
        %1694 = vmatprep.subr.bf16.mxu0 0
        %1695 = vmatpush1.bf16.msra.mxu0 0
        %1696 = vmatprep.subr.bf16.mxu0 0
        %1697 = vmatpush1.bf16.msra.mxu0 0
        %1698 = vmatprep.subr.bf16.mxu0 0
        %1699 = vmatpush1.bf16.msra.mxu0 0
        %1700 = vmatprep.subr.bf16.mxu0 0
        %1701 = vmatpush1.bf16.msra.mxu0 0
        %1702 = vmatprep.subr.bf16.mxu0 0
        %1703 = vmatpush1.bf16.msra.mxu0 0
        %1704 = vmatprep.subr.bf16.mxu0 0
        %1705 = vmatpush1.bf16.msra.mxu0 0
        %1706 = vmatprep.subr.bf16.mxu0 0
        %1707 = vmatpush1.bf16.msra.mxu0 0
        %1708 = vmatprep.subr.bf16.mxu0 0
        %1709 = vmatpush1.bf16.msra.mxu0 0
        %1710 = vmatprep.subr.bf16.mxu0 0
        %1711 = vmatpush1.bf16.msra.mxu0 0
        %1712 = vmatprep.subr.bf16.mxu0 0
        %1713 = vmatpush1.bf16.msra.mxu0 0
        %1714 = vmatprep.subr.bf16.mxu0 0
        %1715 = vmatpush1.bf16.msra.mxu0 0
        %1716 = vmatprep.subr.bf16.mxu0 0
        %1717 = vmatpush1.bf16.msra.mxu0 0
        %1718 = vmatprep.subr.bf16.mxu0 0
        %1719 = vmatpush1.bf16.msra.mxu0 0
        %1720 = vmatprep.mubr.bf16.mxu0 0
        %1721 = vmatmul.mubr.bf16.gmra.mrb[0].mxu0 %v1683
        %v1722 = vpop.f32.mrb[0].mxu0
        %v1723 = vadd.f32 0.0, %v1722
        %v1724 = vpop.f32.mrb[0].mxu0
        %v1725 = vpop.f32.mrb[0].mxu0
        %v1726 = vpop.f32.mrb[0].mxu0
        %1727 = vdwg.mxu0
        %v1729 = vsel %vm1492, %v1584, 0
        %v1732 = vsel %vm1592, %v1094, 0
        %1734 = vmatprep.subr.bf16.mxu0 0
        %1735 = vmatpush1.bf16.msra.mxu0 %v1732
        %1736 = vmatprep.subr.bf16.mxu0 0
        %1737 = vmatpush1.bf16.msra.mxu0 0
        %1738 = vmatprep.subr.bf16.mxu0 0
        %1739 = vmatpush1.bf16.msra.mxu0 0
        %1740 = vmatprep.subr.bf16.mxu0 0
        %1741 = vmatpush1.bf16.msra.mxu0 0
        %1742 = vmatprep.subr.bf16.mxu0 0
        %1743 = vmatpush1.bf16.msra.mxu0 0
        %1744 = vmatprep.subr.bf16.mxu0 0
        %1745 = vmatpush1.bf16.msra.mxu0 0
        %1746 = vmatprep.subr.bf16.mxu0 0
        %1747 = vmatpush1.bf16.msra.mxu0 0
        %1748 = vmatprep.subr.bf16.mxu0 0
        %1749 = vmatpush1.bf16.msra.mxu0 0
        %1750 = vmatprep.subr.bf16.mxu0 0
        %1751 = vmatpush1.bf16.msra.mxu0 0
        %1752 = vmatprep.subr.bf16.mxu0 0
        %1753 = vmatpush1.bf16.msra.mxu0 0
        %1754 = vmatprep.subr.bf16.mxu0 0
        %1755 = vmatpush1.bf16.msra.mxu0 0
        %1756 = vmatprep.subr.bf16.mxu0 0
        %1757 = vmatpush1.bf16.msra.mxu0 0
        %1758 = vmatprep.subr.bf16.mxu0 0
        %1759 = vmatpush1.bf16.msra.mxu0 0
        %1760 = vmatprep.subr.bf16.mxu0 0
        %1761 = vmatpush1.bf16.msra.mxu0 0
        %1762 = vmatprep.subr.bf16.mxu0 0
        %1763 = vmatpush1.bf16.msra.mxu0 0
        %1764 = vmatprep.subr.bf16.mxu0 0
        %1765 = vmatpush1.bf16.msra.mxu0 0
        %1766 = vmatprep.mubr.bf16.mxu0 0
        %1767 = vmatmul.mubr.bf16.gmra.mrb[0].mxu0 %v1729
        %v1768 = vpop.f32.mrb[0].mxu0
        %v1769 = vadd.f32 0.0, %v1768
        %v1770 = vpop.f32.mrb[0].mxu0
        %v1771 = vpop.f32.mrb[0].mxu0
        %v1772 = vpop.f32.mrb[0].mxu0
        %1773 = vdwg.mxu0
        %v1775 = vsel %vm1492, %v1585, 0
        %v1778 = vsel %vm1592, %v1095, 0
        %1780 = vmatprep.subr.bf16.mxu0 0
        %1781 = vmatpush1.bf16.msra.mxu0 %v1778
        %1782 = vmatprep.subr.bf16.mxu0 0
        %1783 = vmatpush1.bf16.msra.mxu0 0
        %1784 = vmatprep.subr.bf16.mxu0 0
        %1785 = vmatpush1.bf16.msra.mxu0 0
        %1786 = vmatprep.subr.bf16.mxu0 0
        %1787 = vmatpush1.bf16.msra.mxu0 0
        %1788 = vmatprep.subr.bf16.mxu0 0
        %1789 = vmatpush1.bf16.msra.mxu0 0
        %1790 = vmatprep.subr.bf16.mxu0 0
        %1791 = vmatpush1.bf16.msra.mxu0 0
        %1792 = vmatprep.subr.bf16.mxu0 0
        %1793 = vmatpush1.bf16.msra.mxu0 0
        %1794 = vmatprep.subr.bf16.mxu0 0
        %1795 = vmatpush1.bf16.msra.mxu0 0
        %1796 = vmatprep.subr.bf16.mxu0 0
        %1797 = vmatpush1.bf16.msra.mxu0 0
        %1798 = vmatprep.subr.bf16.mxu0 0
        %1799 = vmatpush1.bf16.msra.mxu0 0
        %1800 = vmatprep.subr.bf16.mxu0 0
        %1801 = vmatpush1.bf16.msra.mxu0 0
        %1802 = vmatprep.subr.bf16.mxu0 0
        %1803 = vmatpush1.bf16.msra.mxu0 0
        %1804 = vmatprep.subr.bf16.mxu0 0
        %1805 = vmatpush1.bf16.msra.mxu0 0
        %1806 = vmatprep.subr.bf16.mxu0 0
        %1807 = vmatpush1.bf16.msra.mxu0 0
        %1808 = vmatprep.subr.bf16.mxu0 0
        %1809 = vmatpush1.bf16.msra.mxu0 0
        %1810 = vmatprep.subr.bf16.mxu0 0
        %1811 = vmatpush1.bf16.msra.mxu0 0
        %1812 = vmatprep.mubr.bf16.mxu0 0
        %1813 = vmatmul.mubr.bf16.gmra.mrb[0].mxu0 %v1775
        %v1814 = vpop.f32.mrb[0].mxu0
        %v1815 = vadd.f32 0.0, %v1814
        %v1816 = vpop.f32.mrb[0].mxu0
        %v1817 = vpop.f32.mrb[0].mxu0
        %v1818 = vpop.f32.mrb[0].mxu0
        %1819 = vdwg.mxu0
        %v1821 = vsel %vm1492, %v1586, 0
        %v1824 = vsel %vm1592, %v1096, 0
        %1826 = vmatprep.subr.bf16.mxu0 0
        %1827 = vmatpush1.bf16.msra.mxu0 %v1824
        %1828 = vmatprep.subr.bf16.mxu0 0
        %1829 = vmatpush1.bf16.msra.mxu0 0
        %1830 = vmatprep.subr.bf16.mxu0 0
        %1831 = vmatpush1.bf16.msra.mxu0 0
        %1832 = vmatprep.subr.bf16.mxu0 0
        %1833 = vmatpush1.bf16.msra.mxu0 0
        %1834 = vmatprep.subr.bf16.mxu0 0
        %1835 = vmatpush1.bf16.msra.mxu0 0
        %1836 = vmatprep.subr.bf16.mxu0 0
        %1837 = vmatpush1.bf16.msra.mxu0 0
        %1838 = vmatprep.subr.bf16.mxu0 0
        %1839 = vmatpush1.bf16.msra.mxu0 0
        %1840 = vmatprep.subr.bf16.mxu0 0
        %1841 = vmatpush1.bf16.msra.mxu0 0
        %1842 = vmatprep.subr.bf16.mxu0 0
        %1843 = vmatpush1.bf16.msra.mxu0 0
        %1844 = vmatprep.subr.bf16.mxu0 0
        %1845 = vmatpush1.bf16.msra.mxu0 0
        %1846 = vmatprep.subr.bf16.mxu0 0
        %1847 = vmatpush1.bf16.msra.mxu0 0
        %1848 = vmatprep.subr.bf16.mxu0 0
        %1849 = vmatpush1.bf16.msra.mxu0 0
        %1850 = vmatprep.subr.bf16.mxu0 0
        %1851 = vmatpush1.bf16.msra.mxu0 0
        %1852 = vmatprep.subr.bf16.mxu0 0
        %1853 = vmatpush1.bf16.msra.mxu0 0
        %1854 = vmatprep.subr.bf16.mxu0 0
        %1855 = vmatpush1.bf16.msra.mxu0 0
        %1856 = vmatprep.subr.bf16.mxu0 0
        %1857 = vmatpush1.bf16.msra.mxu0 0
        %1858 = vmatprep.mubr.bf16.mxu0 0
        %1859 = vmatmul.mubr.bf16.gmra.mrb[0].mxu0 %v1821
        %v1860 = vpop.f32.mrb[0].mxu0
        %v1861 = vadd.f32 0.0, %v1860
        %v1862 = vpop.f32.mrb[0].mxu0
        %v1863 = vpop.f32.mrb[0].mxu0
        %v1864 = vpop.f32.mrb[0].mxu0
        %1865 = vdwg.mxu0
        %v1867 = vsel %vm1492, %v1587, 0
        %v1870 = vsel %vm1592, %v1097, 0
        %1872 = vmatprep.subr.bf16.mxu0 0
        %1873 = vmatpush1.bf16.msra.mxu0 %v1870
        %1874 = vmatprep.subr.bf16.mxu0 0
        %1875 = vmatpush1.bf16.msra.mxu0 0
        %1876 = vmatprep.subr.bf16.mxu0 0
        %1877 = vmatpush1.bf16.msra.mxu0 0
        %1878 = vmatprep.subr.bf16.mxu0 0
        %1879 = vmatpush1.bf16.msra.mxu0 0
        %1880 = vmatprep.subr.bf16.mxu0 0
        %1881 = vmatpush1.bf16.msra.mxu0 0
        %1882 = vmatprep.subr.bf16.mxu0 0
        %1883 = vmatpush1.bf16.msra.mxu0 0
        %1884 = vmatprep.subr.bf16.mxu0 0
        %1885 = vmatpush1.bf16.msra.mxu0 0
        %1886 = vmatprep.subr.bf16.mxu0 0
        %1887 = vmatpush1.bf16.msra.mxu0 0
        %1888 = vmatprep.subr.bf16.mxu0 0
        %1889 = vmatpush1.bf16.msra.mxu0 0
        %1890 = vmatprep.subr.bf16.mxu0 0
        %1891 = vmatpush1.bf16.msra.mxu0 0
        %1892 = vmatprep.subr.bf16.mxu0 0
        %1893 = vmatpush1.bf16.msra.mxu0 0
        %1894 = vmatprep.subr.bf16.mxu0 0
        %1895 = vmatpush1.bf16.msra.mxu0 0
        %1896 = vmatprep.subr.bf16.mxu0 0
        %1897 = vmatpush1.bf16.msra.mxu0 0
        %1898 = vmatprep.subr.bf16.mxu0 0
        %1899 = vmatpush1.bf16.msra.mxu0 0
        %1900 = vmatprep.subr.bf16.mxu0 0
        %1901 = vmatpush1.bf16.msra.mxu0 0
        %1902 = vmatprep.subr.bf16.mxu0 0
        %1903 = vmatpush1.bf16.msra.mxu0 0
        %1904 = vmatprep.mubr.bf16.mxu0 0
        %1905 = vmatmul.mubr.bf16.gmra.mrb[0].mxu0 %v1867
        %v1906 = vpop.f32.mrb[0].mxu0
        %v1907 = vadd.f32 0.0, %v1906
        %v1908 = vpop.f32.mrb[0].mxu0
        %v1909 = vpop.f32.mrb[0].mxu0
        %v1910 = vpop.f32.mrb[0].mxu0
        %1911 = vdwg.mxu0
        %v1913 = vsel %vm1492, %v1588, 0
        %v1916 = vsel %vm1592, %v1098, 0
        %1918 = vmatprep.subr.bf16.mxu0 0
        %1919 = vmatpush1.bf16.msra.mxu0 %v1916
        %1920 = vmatprep.subr.bf16.mxu0 0
        %1921 = vmatpush1.bf16.msra.mxu0 0
        %1922 = vmatprep.subr.bf16.mxu0 0
        %1923 = vmatpush1.bf16.msra.mxu0 0
        %1924 = vmatprep.subr.bf16.mxu0 0
        %1925 = vmatpush1.bf16.msra.mxu0 0
        %1926 = vmatprep.subr.bf16.mxu0 0
        %1927 = vmatpush1.bf16.msra.mxu0 0
        %1928 = vmatprep.subr.bf16.mxu0 0
        %1929 = vmatpush1.bf16.msra.mxu0 0
        %1930 = vmatprep.subr.bf16.mxu0 0
        %1931 = vmatpush1.bf16.msra.mxu0 0
        %1932 = vmatprep.subr.bf16.mxu0 0
        %1933 = vmatpush1.bf16.msra.mxu0 0
        %1934 = vmatprep.subr.bf16.mxu0 0
        %1935 = vmatpush1.bf16.msra.mxu0 0
        %1936 = vmatprep.subr.bf16.mxu0 0
        %1937 = vmatpush1.bf16.msra.mxu0 0
        %1938 = vmatprep.subr.bf16.mxu0 0
        %1939 = vmatpush1.bf16.msra.mxu0 0
        %1940 = vmatprep.subr.bf16.mxu0 0
        %1941 = vmatpush1.bf16.msra.mxu0 0
        %1942 = vmatprep.subr.bf16.mxu0 0
        %1943 = vmatpush1.bf16.msra.mxu0 0
        %1944 = vmatprep.subr.bf16.mxu0 0
        %1945 = vmatpush1.bf16.msra.mxu0 0
        %1946 = vmatprep.subr.bf16.mxu0 0
        %1947 = vmatpush1.bf16.msra.mxu0 0
        %1948 = vmatprep.subr.bf16.mxu0 0
        %1949 = vmatpush1.bf16.msra.mxu0 0
        %1950 = vmatprep.mubr.bf16.mxu0 0
        %1951 = vmatmul.mubr.bf16.gmra.mrb[0].mxu0 %v1913
        %v1952 = vpop.f32.mrb[0].mxu0
        %v1953 = vadd.f32 0.0, %v1952
        %v1954 = vpop.f32.mrb[0].mxu0
        %v1955 = vpop.f32.mrb[0].mxu0
        %v1956 = vpop.f32.mrb[0].mxu0
        %1957 = vdwg.mxu0
        %1960 = vrot.lane.b32.xlu0 %v1723, 16
        %v1961 = vpop.permute.xlu0 %1960
        %1962 = vrot.lane.b32.xlu0 %v1769, 16
        %v1963 = vpop.permute.xlu0 %1962
        %1968 = vrot.lane.b32.xlu0 %v1815, 32
        %v1969 = vpop.permute.xlu0 %1968
        %1970 = vrot.lane.b32.xlu0 %v1861, 32
        %v1971 = vpop.permute.xlu0 %1970
        %1976 = vrot.lane.b32.xlu0 %v1907, 48
        %v1977 = vpop.permute.xlu0 %1976
        %1978 = vrot.lane.b32.xlu0 %v1953, 48
        %v1979 = vpop.permute.xlu0 %1978
        %v1982 = vsel %vm1102, %v1631, %v1961
        %v1983 = vsel %vm1102, %v1677, %v1963
        %vm1984 = vcmask 261120
        %v1985 = vsel %vm1984, %v1982, %v1969
        %v1986 = vsel %vm1984, %v1983, %v1971
        %vm1987 = vcmask 392192
        %v1988 = vsel %vm1987, %v1985, %v1977
        %v1989 = vsel %vm1987, %v1986, %v1979
        %v1990 = vpack.c.bf16 %v1989, %v1988
        %v1991 = vld [vmem:[%s7] sm:$0xf]
        %v1992 = vld [vmem:[%s7 + $0x4] sm:$0xf]
        %v1993 = vld [vmem:[%s7 + $0x8] sm:$0xf]
        %v1994 = vld [vmem:[%s7 + $0xc] sm:$0xf]
        %v1995 = vld [vmem:[%s7 + $0x10] sm:$0xf]
        %v1996 = vld [vmem:[%s7 + $0x14] sm:$0xf]
        %v1997 = vld [vmem:[%s7 + $0x18] sm:$0xf]
        %v1998 = vld [vmem:[%s7 + $0x1c] sm:$0xf]
        %v2007 = vunpack.c.l.b16 %v1991
        %v2008 = vunpack.c.l.b16 %v1992
        %v2009 = vunpack.c.l.b16 %v1993
        %v2010 = vunpack.c.l.b16 %v1994
        %v2011 = vunpack.c.l.b16 %v1995
        %v2012 = vunpack.c.l.b16 %v1996
        %v2013 = vunpack.c.l.b16 %v1997
        %v2014 = vunpack.c.l.b16 %v1998
        %v2015 = vpack.c.b16 %v2008, %v2007
        %v2016 = vpack.c.b16 %v2010, %v2009
        %v2017 = vpack.c.b16 %v2012, %v2011
        %v2018 = vpack.c.b16 %v2014, %v2013
        %v2024 = vsel %vm887, %v1990, 0
        %2026 = vmatprep.subr.bf16.mxu0 0
        %2027 = vmatpush1.bf16.msra.mxu0 %v2015
        %2028 = vmatprep.subr.bf16.mxu0 0
        %2029 = vmatpush1.bf16.msra.mxu0 %v2016
        %2030 = vmatprep.subr.bf16.mxu0 0
        %2031 = vmatpush1.bf16.msra.mxu0 %v2017
        %2032 = vmatprep.subr.bf16.mxu0 0
        %2033 = vmatpush1.bf16.msra.mxu0 %v2018
        %2034 = vmatprep.subr.bf16.mxu0 0
        %2035 = vmatpush1.bf16.msra.mxu0 0
        %2036 = vmatprep.subr.bf16.mxu0 0
        %2037 = vmatpush1.bf16.msra.mxu0 0
        %2038 = vmatprep.subr.bf16.mxu0 0
        %2039 = vmatpush1.bf16.msra.mxu0 0
        %2040 = vmatprep.subr.bf16.mxu0 0
        %2041 = vmatpush1.bf16.msra.mxu0 0
        %2042 = vmatprep.subr.bf16.mxu0 0
        %2043 = vmatpush1.bf16.msra.mxu0 0
        %2044 = vmatprep.subr.bf16.mxu0 0
        %2045 = vmatpush1.bf16.msra.mxu0 0
        %2046 = vmatprep.subr.bf16.mxu0 0
        %2047 = vmatpush1.bf16.msra.mxu0 0
        %2048 = vmatprep.subr.bf16.mxu0 0
        %2049 = vmatpush1.bf16.msra.mxu0 0
        %2050 = vmatprep.subr.bf16.mxu0 0
        %2051 = vmatpush1.bf16.msra.mxu0 0
        %2052 = vmatprep.subr.bf16.mxu0 0
        %2053 = vmatpush1.bf16.msra.mxu0 0
        %2054 = vmatprep.subr.bf16.mxu0 0
        %2055 = vmatpush1.bf16.msra.mxu0 0
        %2056 = vmatprep.subr.bf16.mxu0 0
        %2057 = vmatpush1.bf16.msra.mxu0 0
        %2058 = vmatprep.mubr.bf16.mxu0 0
        %2059 = vmatmul.mubr.bf16.gmra.mrb[0].mxu0 %v2024
        %v2060 = vpop.f32.mrb[0].mxu0
        %v2061 = vadd.f32 0.0, %v2060
        %v2062 = vpop.f32.mrb[0].mxu0
        %v2063 = vpop.f32.mrb[0].mxu0
        %v2064 = vadd.f32 0.0, %v2063
        %v2065 = vpop.f32.mrb[0].mxu0
        %2066 = vdwg.mxu0
        %v2067 = vadd.f32 %v926, %v2061
        %v2068 = vadd.f32 %v929, %v2064
        %v2069 = vld [vmem:[%s8] sm:$0x1]
        %v2071 = vlaneseq
        %v2072 = vshrl.u32 %v2071, 7
        %v2073 = vsub.s32 0, %v2072
        %v2074 = vrot.slane %v2069, %v2073
        %v2076 = vadd.f32 %v2067, %v2074
        %v2077 = vadd.f32 %v2068, %v2074
        %v2078 = vld [vmem:[%s9] sm:$0x1]
        %v2079 = vld [vmem:[%s10] sm:$0x1]
        %v2080 = vsel %vm887, %v2076, 0.0
        %2081 = vadd.xlane.f32.xlu0 %v2080
        %v2082 = vpop.xlane.xlu0 %2081
        %v2083 = vsel %vm887, %v2077, 0.0
        %2084 = vadd.xlane.f32.xlu0 %v2083
        %v2085 = vpop.xlane.xlu0 %2084
        %v2086 = vrcp.pop 64.0
        %v2087 = vmul.f32 %v2082, %v2086
        %v2088 = vmul.f32 %v2085, %v2086
        %v2089 = vsub.f32 %v2076, %v2087
        %v2090 = vsub.f32 %v2077, %v2088
        %v2091 = vmul.f32 %v2089, %v2089
        %v2092 = vmul.f32 %v2090, %v2090
        %v2093 = vsel %vm887, %v2091, 0.0
        %2094 = vadd.xlane.f32.xlu0 %v2093
        %v2095 = vpop.xlane.xlu0 %2094
        %v2096 = vsel %vm887, %v2092, 0.0
        %2097 = vadd.xlane.f32.xlu0 %v2096
        %v2098 = vpop.xlane.xlu0 %2097
        %v2099 = vmul.f32 %v2095, %v2086
        %v2100 = vmul.f32 %v2098, %v2086
        %v2101 = vadd.f32 %v2099, 1e-06
        %v2102 = vadd.f32 %v2100, 1e-06
        %v2103 = vrsqrt.pop %v2101
        %v2104 = vrsqrt.pop %v2102
        %v2105 = vmul.f32 %v2089, %v2103
        %v2106 = vmul.f32 %v2090, %v2104
        %v2108 = vlaneseq
        %v2109 = vshrl.u32 %v2108, 7
        %v2110 = vsub.s32 0, %v2109
        %v2111 = vrot.slane %v2078, %v2110
        %v2113 = vmul.f32 %v2105, %v2111
        %v2114 = vmul.f32 %v2106, %v2111
        %v2116 = vlaneseq
        %v2117 = vshrl.u32 %v2116, 7
        %v2118 = vsub.s32 0, %v2117
        %v2119 = vrot.slane %v2079, %v2118
        %v2121 = vadd.f32 %v2113, %v2119
        %v2122 = vadd.f32 %v2114, %v2119
        %v2123 = vpack.c.bf16 %v2122, %v2121
        %v2124 = vld [vmem:[%s11] sm:$0xff]
        %v2125 = vld [vmem:[%s11 + $0x8] sm:$0xff]
        %v2126 = vld [vmem:[%s11 + $0x10] sm:$0xff]
        %v2127 = vld [vmem:[%s11 + $0x18] sm:$0xff]
        %v2128 = vld [vmem:[%s11 + $0x20] sm:$0xff]
        %v2129 = vld [vmem:[%s11 + $0x28] sm:$0xff]
        %v2130 = vld [vmem:[%s11 + $0x30] sm:$0xff]
        %v2131 = vld [vmem:[%s11 + $0x38] sm:$0xff]
        %v2132 = vld [vmem:[%s12] sm:$0x3]
        %v2134 = vlaneseq
        %v2135 = vshrl.u32 %v2134, 7
        %v2136 = vsub.s32 0, %v2135
        %v2137 = vrot.slane %v2132, %v2136
        %v2138 = vlaneseq
        %v2139 = vshrl.u32 %v2138, 7
        %v2140 = vsub.s32 1, %v2139
        %v2141 = vrot.slane %v2132, %v2140
        %v2152 = vunpack.c.l.b16 %v2124
        %v2153 = vunpack.c.h.b16 %v2124
        %v2154 = vunpack.c.l.b16 %v2125
        %v2155 = vunpack.c.h.b16 %v2125
        %v2156 = vunpack.c.l.b16 %v2126
        %v2157 = vunpack.c.h.b16 %v2126
        %v2158 = vunpack.c.l.b16 %v2127
        %v2159 = vunpack.c.h.b16 %v2127
        %v2160 = vunpack.c.l.b16 %v2128
        %v2161 = vunpack.c.h.b16 %v2128
        %v2162 = vunpack.c.l.b16 %v2129
        %v2163 = vunpack.c.h.b16 %v2129
        %v2164 = vunpack.c.l.b16 %v2130
        %v2165 = vunpack.c.h.b16 %v2130
        %v2166 = vunpack.c.l.b16 %v2131
        %v2167 = vunpack.c.h.b16 %v2131
        %v2168 = vpack.c.b16 %v2154, %v2152
        %v2169 = vpack.c.b16 %v2155, %v2153
        %v2170 = vpack.c.b16 %v2158, %v2156
        %v2171 = vpack.c.b16 %v2159, %v2157
        %v2172 = vpack.c.b16 %v2162, %v2160
        %v2173 = vpack.c.b16 %v2163, %v2161
        %v2174 = vpack.c.b16 %v2166, %v2164
        %v2175 = vpack.c.b16 %v2167, %v2165
        %v2185 = vsel %vm887, %v2123, 0
        %2187 = vmatprep.subr.bf16.mxu0 %v2169
        %2188 = vmatpush1.bf16.msra.mxu0 %v2168
        %2189 = vmatprep.subr.bf16.mxu0 %v2171
        %2190 = vmatpush1.bf16.msra.mxu0 %v2170
        %2191 = vmatprep.subr.bf16.mxu0 %v2173
        %2192 = vmatpush1.bf16.msra.mxu0 %v2172
        %2193 = vmatprep.subr.bf16.mxu0 %v2175
        %2194 = vmatpush1.bf16.msra.mxu0 %v2174
        %2195 = vmatprep.subr.bf16.mxu0 0
        %2196 = vmatpush1.bf16.msra.mxu0 0
        %2197 = vmatprep.subr.bf16.mxu0 0
        %2198 = vmatpush1.bf16.msra.mxu0 0
        %2199 = vmatprep.subr.bf16.mxu0 0
        %2200 = vmatpush1.bf16.msra.mxu0 0
        %2201 = vmatprep.subr.bf16.mxu0 0
        %2202 = vmatpush1.bf16.msra.mxu0 0
        %2203 = vmatprep.subr.bf16.mxu0 0
        %2204 = vmatpush1.bf16.msra.mxu0 0
        %2205 = vmatprep.subr.bf16.mxu0 0
        %2206 = vmatpush1.bf16.msra.mxu0 0
        %2207 = vmatprep.subr.bf16.mxu0 0
        %2208 = vmatpush1.bf16.msra.mxu0 0
        %2209 = vmatprep.subr.bf16.mxu0 0
        %2210 = vmatpush1.bf16.msra.mxu0 0
        %2211 = vmatprep.subr.bf16.mxu0 0
        %2212 = vmatpush1.bf16.msra.mxu0 0
        %2213 = vmatprep.subr.bf16.mxu0 0
        %2214 = vmatpush1.bf16.msra.mxu0 0
        %2215 = vmatprep.subr.bf16.mxu0 0
        %2216 = vmatpush1.bf16.msra.mxu0 0
        %2217 = vmatprep.subr.bf16.mxu0 0
        %2218 = vmatpush1.bf16.msra.mxu0 0
        %2219 = vmatprep.mubr.bf16.mxu0 0
        %2220 = vmatmul.mubr.bf16.gmra.mrb[0].mxu0 %v2185
        %v2221 = vpop.f32.mrb[0].mxu0
        %v2222 = vadd.f32 %v2137, %v2221
        %v2223 = vpop.f32.mrb[0].mxu0
        %v2224 = vadd.f32 %v2141, %v2223
        %v2225 = vpop.f32.mrb[0].mxu0
        %v2226 = vadd.f32 %v2137, %v2225
        %v2227 = vpop.f32.mrb[0].mxu0
        %v2228 = vadd.f32 %v2141, %v2227
        %2229 = vdwg.mxu0
        %v2230 = vmul.f32 %v2222, 0.5
        %v2231 = vmul.f32 %v2224, 0.5
        %v2232 = vmul.f32 %v2226, 0.5
        %v2233 = vmul.f32 %v2228, 0.5
        %v2234 = vmul.f32 %v2222, 0.70710677
        %v2235 = vmul.f32 %v2224, 0.70710677
        %v2236 = vmul.f32 %v2226, 0.70710677
        %v2237 = vmul.f32 %v2228, 0.70710677
        %v2238 = verf.f32.pop %v2234
        %v2239 = verf.f32.pop %v2235
        %v2240 = verf.f32.pop %v2236
        %v2241 = verf.f32.pop %v2237
        %v2242 = vadd.f32 %v2238, 1.0
        %v2243 = vadd.f32 %v2239, 1.0
        %v2244 = vadd.f32 %v2240, 1.0
        %v2245 = vadd.f32 %v2241, 1.0
        %v2246 = vmul.f32 %v2230, %v2242
        %v2247 = vmul.f32 %v2231, %v2243
        %v2248 = vmul.f32 %v2232, %v2244
        %v2249 = vmul.f32 %v2233, %v2245
        %v2250 = vpack.c.bf16 %v2248, %v2246
        %v2251 = vpack.c.bf16 %v2249, %v2247
        %v2252 = vld [vmem:[%s13] sm:$0xf]
        %v2253 = vld [vmem:[%s13 + $0x4] sm:$0xf]
        %v2254 = vld [vmem:[%s13 + $0x8] sm:$0xf]
        %v2255 = vld [vmem:[%s13 + $0xc] sm:$0xf]
        %v2256 = vld [vmem:[%s13 + $0x10] sm:$0xf]
        %v2257 = vld [vmem:[%s13 + $0x14] sm:$0xf]
        %v2258 = vld [vmem:[%s13 + $0x18] sm:$0xf]
        %v2259 = vld [vmem:[%s13 + $0x1c] sm:$0xf]
        %v2260 = vld [vmem:[%s13 + $0x20] sm:$0xf]
        %v2261 = vld [vmem:[%s13 + $0x24] sm:$0xf]
        %v2262 = vld [vmem:[%s13 + $0x28] sm:$0xf]
        %v2263 = vld [vmem:[%s13 + $0x2c] sm:$0xf]
        %v2264 = vld [vmem:[%s13 + $0x30] sm:$0xf]
        %v2265 = vld [vmem:[%s13 + $0x34] sm:$0xf]
        %v2266 = vld [vmem:[%s13 + $0x38] sm:$0xf]
        %v2267 = vld [vmem:[%s13 + $0x3c] sm:$0xf]
        %v2268 = vld [vmem:[%s13 + $0x40] sm:$0xf]
        %v2269 = vld [vmem:[%s13 + $0x44] sm:$0xf]
        %v2270 = vld [vmem:[%s13 + $0x48] sm:$0xf]
        %v2271 = vld [vmem:[%s13 + $0x4c] sm:$0xf]
        %v2272 = vld [vmem:[%s13 + $0x50] sm:$0xf]
        %v2273 = vld [vmem:[%s13 + $0x54] sm:$0xf]
        %v2274 = vld [vmem:[%s13 + $0x58] sm:$0xf]
        %v2275 = vld [vmem:[%s13 + $0x5c] sm:$0xf]
        %v2276 = vld [vmem:[%s13 + $0x60] sm:$0xf]
        %v2277 = vld [vmem:[%s13 + $0x64] sm:$0xf]
        %v2278 = vld [vmem:[%s13 + $0x68] sm:$0xf]
        %v2279 = vld [vmem:[%s13 + $0x6c] sm:$0xf]
        %v2280 = vld [vmem:[%s13 + $0x70] sm:$0xf]
        %v2281 = vld [vmem:[%s13 + $0x74] sm:$0xf]
        %v2282 = vld [vmem:[%s13 + $0x78] sm:$0xf]
        %v2283 = vld [vmem:[%s13 + $0x7c] sm:$0xf]
        %v2284 = vld [vmem:[%s14] sm:$0x1]
        %v2286 = vlaneseq
        %v2287 = vshrl.u32 %v2286, 7
        %v2288 = vsub.s32 0, %v2287
        %v2289 = vrot.slane %v2284, %v2288
        %v2323 = vunpack.c.l.b16 %v2252
        %v2324 = vunpack.c.l.b16 %v2253
        %v2325 = vunpack.c.l.b16 %v2254
        %v2326 = vunpack.c.l.b16 %v2255
        %v2327 = vunpack.c.l.b16 %v2256
        %v2328 = vunpack.c.l.b16 %v2257
        %v2329 = vunpack.c.l.b16 %v2258
        %v2330 = vunpack.c.l.b16 %v2259
        %v2331 = vunpack.c.l.b16 %v2260
        %v2332 = vunpack.c.l.b16 %v2261
        %v2333 = vunpack.c.l.b16 %v2262
        %v2334 = vunpack.c.l.b16 %v2263
        %v2335 = vunpack.c.l.b16 %v2264
        %v2336 = vunpack.c.l.b16 %v2265
        %v2337 = vunpack.c.l.b16 %v2266
        %v2338 = vunpack.c.l.b16 %v2267
        %v2339 = vunpack.c.l.b16 %v2268
        %v2340 = vunpack.c.l.b16 %v2269
        %v2341 = vunpack.c.l.b16 %v2270
        %v2342 = vunpack.c.l.b16 %v2271
        %v2343 = vunpack.c.l.b16 %v2272
        %v2344 = vunpack.c.l.b16 %v2273
        %v2345 = vunpack.c.l.b16 %v2274
        %v2346 = vunpack.c.l.b16 %v2275
        %v2347 = vunpack.c.l.b16 %v2276
        %v2348 = vunpack.c.l.b16 %v2277
        %v2349 = vunpack.c.l.b16 %v2278
        %v2350 = vunpack.c.l.b16 %v2279
        %v2351 = vunpack.c.l.b16 %v2280
        %v2352 = vunpack.c.l.b16 %v2281
        %v2353 = vunpack.c.l.b16 %v2282
        %v2354 = vunpack.c.l.b16 %v2283
        %v2355 = vpack.c.b16 %v2324, %v2323
        %v2356 = vpack.c.b16 %v2326, %v2325
        %v2357 = vpack.c.b16 %v2328, %v2327
        %v2358 = vpack.c.b16 %v2330, %v2329
        %v2359 = vpack.c.b16 %v2332, %v2331
        %v2360 = vpack.c.b16 %v2334, %v2333
        %v2361 = vpack.c.b16 %v2336, %v2335
        %v2362 = vpack.c.b16 %v2338, %v2337
        %v2363 = vpack.c.b16 %v2340, %v2339
        %v2364 = vpack.c.b16 %v2342, %v2341
        %v2365 = vpack.c.b16 %v2344, %v2343
        %v2366 = vpack.c.b16 %v2346, %v2345
        %v2367 = vpack.c.b16 %v2348, %v2347
        %v2368 = vpack.c.b16 %v2350, %v2349
        %v2369 = vpack.c.b16 %v2352, %v2351
        %v2370 = vpack.c.b16 %v2354, %v2353
        %2387 = vmatprep.subr.bf16.mxu0 0
        %2388 = vmatpush1.bf16.msra.mxu0 %v2355
        %2389 = vmatprep.subr.bf16.mxu0 0
        %2390 = vmatpush1.bf16.msra.mxu0 %v2356
        %2391 = vmatprep.subr.bf16.mxu0 0
        %2392 = vmatpush1.bf16.msra.mxu0 %v2357
        %2393 = vmatprep.subr.bf16.mxu0 0
        %2394 = vmatpush1.bf16.msra.mxu0 %v2358
        %2395 = vmatprep.subr.bf16.mxu0 0
        %2396 = vmatpush1.bf16.msra.mxu0 %v2359
        %2397 = vmatprep.subr.bf16.mxu0 0
        %2398 = vmatpush1.bf16.msra.mxu0 %v2360
        %2399 = vmatprep.subr.bf16.mxu0 0
        %2400 = vmatpush1.bf16.msra.mxu0 %v2361
        %2401 = vmatprep.subr.bf16.mxu0 0
        %2402 = vmatpush1.bf16.msra.mxu0 %v2362
        %2403 = vmatprep.subr.bf16.mxu0 0
        %2404 = vmatpush1.bf16.msra.mxu0 %v2363
        %2405 = vmatprep.subr.bf16.mxu0 0
        %2406 = vmatpush1.bf16.msra.mxu0 %v2364
        %2407 = vmatprep.subr.bf16.mxu0 0
        %2408 = vmatpush1.bf16.msra.mxu0 %v2365
        %2409 = vmatprep.subr.bf16.mxu0 0
        %2410 = vmatpush1.bf16.msra.mxu0 %v2366
        %2411 = vmatprep.subr.bf16.mxu0 0
        %2412 = vmatpush1.bf16.msra.mxu0 %v2367
        %2413 = vmatprep.subr.bf16.mxu0 0
        %2414 = vmatpush1.bf16.msra.mxu0 %v2368
        %2415 = vmatprep.subr.bf16.mxu0 0
        %2416 = vmatpush1.bf16.msra.mxu0 %v2369
        %2417 = vmatprep.subr.bf16.mxu0 0
        %2418 = vmatpush1.bf16.msra.mxu0 %v2370
        %2419 = vmatprep.mubr.bf16.mxu0 %v2251
        %2420 = vmatmul.mubr.bf16.gmra.mrb[0].mxu0 %v2250
        %v2421 = vpop.f32.mrb[0].mxu0
        %v2422 = vadd.f32 %v2289, %v2421
        %v2423 = vpop.f32.mrb[0].mxu0
        %v2424 = vpop.f32.mrb[0].mxu0
        %v2425 = vadd.f32 %v2289, %v2424
        %v2426 = vpop.f32.mrb[0].mxu0
        %2427 = vdwg.mxu0
        %v2428 = vadd.f32 %v2121, %v2422
        %v2429 = vadd.f32 %v2122, %v2425
        %v2430 = vld [vmem:[%s15] sm:$0x1]
        %v2431 = vld [vmem:[%s16] sm:$0x1]
        %v2432 = vsel %vm887, %v2428, 0.0
        %2433 = vadd.xlane.f32.xlu0 %v2432
        %v2434 = vpop.xlane.xlu0 %2433
        %v2435 = vsel %vm887, %v2429, 0.0
        %2436 = vadd.xlane.f32.xlu0 %v2435
        %v2437 = vpop.xlane.xlu0 %2436
        %v2438 = vmul.f32 %v2434, %v2086
        %v2439 = vmul.f32 %v2437, %v2086
        %v2440 = vsub.f32 %v2428, %v2438
        %v2441 = vsub.f32 %v2429, %v2439
        %v2442 = vmul.f32 %v2440, %v2440
        %v2443 = vmul.f32 %v2441, %v2441
        %v2444 = vsel %vm887, %v2442, 0.0
        %2445 = vadd.xlane.f32.xlu0 %v2444
        %v2446 = vpop.xlane.xlu0 %2445
        %v2447 = vsel %vm887, %v2443, 0.0
        %2448 = vadd.xlane.f32.xlu0 %v2447
        %v2449 = vpop.xlane.xlu0 %2448
        %v2450 = vmul.f32 %v2446, %v2086
        %v2451 = vmul.f32 %v2449, %v2086
        %v2452 = vadd.f32 %v2450, 1e-06
        %v2453 = vadd.f32 %v2451, 1e-06
        %v2454 = vrsqrt.pop %v2452
        %v2455 = vrsqrt.pop %v2453
        %v2456 = vmul.f32 %v2440, %v2454
        %v2457 = vmul.f32 %v2441, %v2455
        %v2459 = vlaneseq
        %v2460 = vshrl.u32 %v2459, 7
        %v2461 = vsub.s32 0, %v2460
        %v2462 = vrot.slane %v2430, %v2461
        %v2464 = vmul.f32 %v2456, %v2462
        %v2465 = vmul.f32 %v2457, %v2462
        %v2467 = vlaneseq
        %v2468 = vshrl.u32 %v2467, 7
        %v2469 = vsub.s32 0, %v2468
        %v2470 = vrot.slane %v2431, %v2469
        %v2472 = vadd.f32 %v2464, %v2470
        %v2473 = vadd.f32 %v2465, %v2470
        %v2474 = vpack.c.bf16 %v2473, %v2472
        %s2475 = scalar_lea.vmem %s5, 64
        %v2476 = vld [vmem:[%s2475] sm:$0xff]
        %v2477 = vld [vmem:[%s2475 + $0x8] sm:$0xff]
        %v2478 = vld [vmem:[%s2475 + $0x10] sm:$0xff]
        %v2479 = vld [vmem:[%s2475 + $0x18] sm:$0xff]
        %v2480 = vld [vmem:[%s2475 + $0x20] sm:$0xff]
        %v2481 = vld [vmem:[%s2475 + $0x28] sm:$0xff]
        %v2482 = vld [vmem:[%s2475 + $0x30] sm:$0xff]
        %v2483 = vld [vmem:[%s2475 + $0x38] sm:$0xff]
        %s2484 = scalar_lea.vmem %s6, 2
        %v2485 = vld [vmem:[%s2484] sm:$0x3]
        %v2487 = vlaneseq
        %v2488 = vshrl.u32 %v2487, 7
        %v2489 = vsub.s32 0, %v2488
        %v2490 = vrot.slane %v2485, %v2489
        %v2491 = vlaneseq
        %v2492 = vshrl.u32 %v2491, 7
        %v2493 = vsub.s32 1, %v2492
        %v2494 = vrot.slane %v2485, %v2493
        %v2505 = vunpack.c.l.b16 %v2476
        %v2506 = vunpack.c.h.b16 %v2476
        %v2507 = vunpack.c.l.b16 %v2477
        %v2508 = vunpack.c.h.b16 %v2477
        %v2509 = vunpack.c.l.b16 %v2478
        %v2510 = vunpack.c.h.b16 %v2478
        %v2511 = vunpack.c.l.b16 %v2479
        %v2512 = vunpack.c.h.b16 %v2479
        %v2513 = vunpack.c.l.b16 %v2480
        %v2514 = vunpack.c.h.b16 %v2480
        %v2515 = vunpack.c.l.b16 %v2481
        %v2516 = vunpack.c.h.b16 %v2481
        %v2517 = vunpack.c.l.b16 %v2482
        %v2518 = vunpack.c.h.b16 %v2482
        %v2519 = vunpack.c.l.b16 %v2483
        %v2520 = vunpack.c.h.b16 %v2483
        %v2521 = vpack.c.b16 %v2507, %v2505
        %v2522 = vpack.c.b16 %v2508, %v2506
        %v2523 = vpack.c.b16 %v2511, %v2509
        %v2524 = vpack.c.b16 %v2512, %v2510
        %v2525 = vpack.c.b16 %v2515, %v2513
        %v2526 = vpack.c.b16 %v2516, %v2514
        %v2527 = vpack.c.b16 %v2519, %v2517
        %v2528 = vpack.c.b16 %v2520, %v2518
        %v2538 = vsel %vm887, %v2474, 0
        %2540 = vmatprep.subr.bf16.mxu0 %v2522
        %2541 = vmatpush1.bf16.msra.mxu0 %v2521
        %2542 = vmatprep.subr.bf16.mxu0 %v2524
        %2543 = vmatpush1.bf16.msra.mxu0 %v2523
        %2544 = vmatprep.subr.bf16.mxu0 %v2526
        %2545 = vmatpush1.bf16.msra.mxu0 %v2525
        %2546 = vmatprep.subr.bf16.mxu0 %v2528
        %2547 = vmatpush1.bf16.msra.mxu0 %v2527
        %2548 = vmatprep.subr.bf16.mxu0 0
        %2549 = vmatpush1.bf16.msra.mxu0 0
        %2550 = vmatprep.subr.bf16.mxu0 0
        %2551 = vmatpush1.bf16.msra.mxu0 0
        %2552 = vmatprep.subr.bf16.mxu0 0
        %2553 = vmatpush1.bf16.msra.mxu0 0
        %2554 = vmatprep.subr.bf16.mxu0 0
        %2555 = vmatpush1.bf16.msra.mxu0 0
        %2556 = vmatprep.subr.bf16.mxu0 0
        %2557 = vmatpush1.bf16.msra.mxu0 0
        %2558 = vmatprep.subr.bf16.mxu0 0
        %2559 = vmatpush1.bf16.msra.mxu0 0
        %2560 = vmatprep.subr.bf16.mxu0 0
        %2561 = vmatpush1.bf16.msra.mxu0 0
        %2562 = vmatprep.subr.bf16.mxu0 0
        %2563 = vmatpush1.bf16.msra.mxu0 0
        %2564 = vmatprep.subr.bf16.mxu0 0
        %2565 = vmatpush1.bf16.msra.mxu0 0
        %2566 = vmatprep.subr.bf16.mxu0 0
        %2567 = vmatpush1.bf16.msra.mxu0 0
        %2568 = vmatprep.subr.bf16.mxu0 0
        %2569 = vmatpush1.bf16.msra.mxu0 0
        %2570 = vmatprep.subr.bf16.mxu0 0
        %2571 = vmatpush1.bf16.msra.mxu0 0
        %2572 = vmatprep.mubr.bf16.mxu0 0
        %2573 = vmatmul.mubr.bf16.gmra.mrb[0].mxu0 %v2538
        %v2574 = vpop.f32.mrb[0].mxu0
        %v2575 = vadd.f32 %v2490, %v2574
        %v2576 = vpop.f32.mrb[0].mxu0
        %v2577 = vadd.f32 %v2494, %v2576
        %v2578 = vpop.f32.mrb[0].mxu0
        %v2579 = vadd.f32 %v2490, %v2578
        %v2580 = vpop.f32.mrb[0].mxu0
        %v2581 = vadd.f32 %v2494, %v2580
        %2582 = vdwg.mxu0
        %2585 = vrot.lane.b32.xlu0 %v2575, 112
        %v2586 = vpop.permute.xlu0 %2585
        %2587 = vrot.lane.b32.xlu0 %v2579, 112
        %v2588 = vpop.permute.xlu0 %2587
        %2591 = vrot.lane.b32.xlu0 %v2575, 96
        %v2592 = vpop.permute.xlu0 %2591
        %2593 = vrot.lane.b32.xlu0 %v2579, 96
        %v2594 = vpop.permute.xlu0 %2593
        %2597 = vrot.lane.b32.xlu0 %v2575, 80
        %v2598 = vpop.permute.xlu0 %2597
        %2599 = vrot.lane.b32.xlu0 %v2579, 80
        %v2600 = vpop.permute.xlu0 %2599
        %v2603 = vpack.c.bf16 %v2575, %v2575
        %v2604 = vpack.c.bf16 %v2579, %v2579
        %v2605 = vpack.c.bf16 %v2586, %v2586
        %v2606 = vpack.c.bf16 %v2588, %v2588
        %v2607 = vpack.c.bf16 %v2592, %v2592
        %v2608 = vpack.c.bf16 %v2594, %v2594
        %v2609 = vpack.c.bf16 %v2598, %v2598
        %v2610 = vpack.c.bf16 %v2600, %v2600
        %2613 = vrot.lane.b32.xlu0 %v2577, 112
        %v2614 = vpop.permute.xlu0 %2613
        %2615 = vrot.lane.b32.xlu0 %v2581, 112
        %v2616 = vpop.permute.xlu0 %2615
        %2619 = vrot.lane.b32.xlu0 %v2577, 96
        %v2620 = vpop.permute.xlu0 %2619
        %2621 = vrot.lane.b32.xlu0 %v2581, 96
        %v2622 = vpop.permute.xlu0 %2621
        %2625 = vrot.lane.b32.xlu0 %v2577, 80
        %v2626 = vpop.permute.xlu0 %2625
        %2627 = vrot.lane.b32.xlu0 %v2581, 80
        %v2628 = vpop.permute.xlu0 %2627
        %v2631 = vpack.c.bf16 %v2577, %v2577
        %v2632 = vpack.c.bf16 %v2581, %v2581
        %v2633 = vpack.c.bf16 %v2614, %v2614
        %v2634 = vpack.c.bf16 %v2616, %v2616
        %v2635 = vpack.c.bf16 %v2620, %v2620
        %v2636 = vpack.c.bf16 %v2622, %v2622
        %v2637 = vpack.c.bf16 %v2626, %v2626
        %v2638 = vpack.c.bf16 %v2628, %v2628
        %2640 = vrot.lane.b32.xlu0 %v2603, 64
        %v2641 = vpop.permute.xlu0 %2640
        %v2643 = vsel %vm1102, %v2603, 0
        %v2646 = vsel %vm1102, %v2641, 0
        %2648 = vmatprep.subr.bf16.mxu0 0
        %2649 = vmatpush1.bf16.xpose.msra.mxu0 %v2646
        %2650 = vmatprep.subr.bf16.mxu0 0
        %2651 = vmatpush1.bf16.xpose.msra.mxu0 0
        %2652 = vmatprep.subr.bf16.mxu0 0
        %2653 = vmatpush1.bf16.xpose.msra.mxu0 0
        %2654 = vmatprep.subr.bf16.mxu0 0
        %2655 = vmatpush1.bf16.xpose.msra.mxu0 0
        %2656 = vmatprep.subr.bf16.mxu0 0
        %2657 = vmatpush1.bf16.xpose.msra.mxu0 0
        %2658 = vmatprep.subr.bf16.mxu0 0
        %2659 = vmatpush1.bf16.xpose.msra.mxu0 0
        %2660 = vmatprep.subr.bf16.mxu0 0
        %2661 = vmatpush1.bf16.xpose.msra.mxu0 0
        %2662 = vmatprep.subr.bf16.mxu0 0
        %2663 = vmatpush1.bf16.xpose.msra.mxu0 0
        %2664 = vmatprep.subr.bf16.mxu0 0
        %2665 = vmatpush1.bf16.xpose.msra.mxu0 0
        %2666 = vmatprep.subr.bf16.mxu0 0
        %2667 = vmatpush1.bf16.xpose.msra.mxu0 0
        %2668 = vmatprep.subr.bf16.mxu0 0
        %2669 = vmatpush1.bf16.xpose.msra.mxu0 0
        %2670 = vmatprep.subr.bf16.mxu0 0
        %2671 = vmatpush1.bf16.xpose.msra.mxu0 0
        %2672 = vmatprep.subr.bf16.mxu0 0
        %2673 = vmatpush1.bf16.xpose.msra.mxu0 0
        %2674 = vmatprep.subr.bf16.mxu0 0
        %2675 = vmatpush1.bf16.xpose.msra.mxu0 0
        %2676 = vmatprep.subr.bf16.mxu0 0
        %2677 = vmatpush1.bf16.xpose.msra.mxu0 0
        %2678 = vmatprep.subr.bf16.mxu0 0
        %2679 = vmatpush1.bf16.xpose.msra.mxu0 0
        %2680 = vmatprep.mubr.bf16.mxu0 0
        %2681 = vmatmul.mubr.bf16.gmra.mrb[0].mxu0 %v2643
        %v2682 = vpop.f32.mrb[0].mxu0
        %v2683 = vadd.f32 %v935, %v2682
        %v2684 = vpop.f32.mrb[0].mxu0
        %v2685 = vpop.f32.mrb[0].mxu0
        %v2686 = vpop.f32.mrb[0].mxu0
        %2687 = vdwg.mxu0
        %2689 = vrot.lane.b32.xlu0 %v2604, 64
        %v2690 = vpop.permute.xlu0 %2689
        %v2692 = vsel %vm1102, %v2604, 0
        %v2695 = vsel %vm1102, %v2690, 0
        %2697 = vmatprep.subr.bf16.mxu0 0
        %2698 = vmatpush1.bf16.xpose.msra.mxu0 %v2695
        %2699 = vmatprep.subr.bf16.mxu0 0
        %2700 = vmatpush1.bf16.xpose.msra.mxu0 0
        %2701 = vmatprep.subr.bf16.mxu0 0
        %2702 = vmatpush1.bf16.xpose.msra.mxu0 0
        %2703 = vmatprep.subr.bf16.mxu0 0
        %2704 = vmatpush1.bf16.xpose.msra.mxu0 0
        %2705 = vmatprep.subr.bf16.mxu0 0
        %2706 = vmatpush1.bf16.xpose.msra.mxu0 0
        %2707 = vmatprep.subr.bf16.mxu0 0
        %2708 = vmatpush1.bf16.xpose.msra.mxu0 0
        %2709 = vmatprep.subr.bf16.mxu0 0
        %2710 = vmatpush1.bf16.xpose.msra.mxu0 0
        %2711 = vmatprep.subr.bf16.mxu0 0
        %2712 = vmatpush1.bf16.xpose.msra.mxu0 0
        %2713 = vmatprep.subr.bf16.mxu0 0
        %2714 = vmatpush1.bf16.xpose.msra.mxu0 0
        %2715 = vmatprep.subr.bf16.mxu0 0
        %2716 = vmatpush1.bf16.xpose.msra.mxu0 0
        %2717 = vmatprep.subr.bf16.mxu0 0
        %2718 = vmatpush1.bf16.xpose.msra.mxu0 0
        %2719 = vmatprep.subr.bf16.mxu0 0
        %2720 = vmatpush1.bf16.xpose.msra.mxu0 0
        %2721 = vmatprep.subr.bf16.mxu0 0
        %2722 = vmatpush1.bf16.xpose.msra.mxu0 0
        %2723 = vmatprep.subr.bf16.mxu0 0
        %2724 = vmatpush1.bf16.xpose.msra.mxu0 0
        %2725 = vmatprep.subr.bf16.mxu0 0
        %2726 = vmatpush1.bf16.xpose.msra.mxu0 0
        %2727 = vmatprep.subr.bf16.mxu0 0
        %2728 = vmatpush1.bf16.xpose.msra.mxu0 0
        %2729 = vmatprep.mubr.bf16.mxu0 0
        %2730 = vmatmul.mubr.bf16.gmra.mrb[0].mxu0 %v2692
        %v2731 = vpop.f32.mrb[0].mxu0
        %v2732 = vadd.f32 %v935, %v2731
        %v2733 = vpop.f32.mrb[0].mxu0
        %v2734 = vpop.f32.mrb[0].mxu0
        %v2735 = vpop.f32.mrb[0].mxu0
        %2736 = vdwg.mxu0
        %2738 = vrot.lane.b32.xlu0 %v2605, 64
        %v2739 = vpop.permute.xlu0 %2738
        %v2741 = vsel %vm1102, %v2605, 0
        %v2744 = vsel %vm1102, %v2739, 0
        %2746 = vmatprep.subr.bf16.mxu0 0
        %2747 = vmatpush1.bf16.xpose.msra.mxu0 %v2744
        %2748 = vmatprep.subr.bf16.mxu0 0
        %2749 = vmatpush1.bf16.xpose.msra.mxu0 0
        %2750 = vmatprep.subr.bf16.mxu0 0
        %2751 = vmatpush1.bf16.xpose.msra.mxu0 0
        %2752 = vmatprep.subr.bf16.mxu0 0
        %2753 = vmatpush1.bf16.xpose.msra.mxu0 0
        %2754 = vmatprep.subr.bf16.mxu0 0
        %2755 = vmatpush1.bf16.xpose.msra.mxu0 0
        %2756 = vmatprep.subr.bf16.mxu0 0
        %2757 = vmatpush1.bf16.xpose.msra.mxu0 0
        %2758 = vmatprep.subr.bf16.mxu0 0
        %2759 = vmatpush1.bf16.xpose.msra.mxu0 0
        %2760 = vmatprep.subr.bf16.mxu0 0
        %2761 = vmatpush1.bf16.xpose.msra.mxu0 0
        %2762 = vmatprep.subr.bf16.mxu0 0
        %2763 = vmatpush1.bf16.xpose.msra.mxu0 0
        %2764 = vmatprep.subr.bf16.mxu0 0
        %2765 = vmatpush1.bf16.xpose.msra.mxu0 0
        %2766 = vmatprep.subr.bf16.mxu0 0
        %2767 = vmatpush1.bf16.xpose.msra.mxu0 0
        %2768 = vmatprep.subr.bf16.mxu0 0
        %2769 = vmatpush1.bf16.xpose.msra.mxu0 0
        %2770 = vmatprep.subr.bf16.mxu0 0
        %2771 = vmatpush1.bf16.xpose.msra.mxu0 0
        %2772 = vmatprep.subr.bf16.mxu0 0
        %2773 = vmatpush1.bf16.xpose.msra.mxu0 0
        %2774 = vmatprep.subr.bf16.mxu0 0
        %2775 = vmatpush1.bf16.xpose.msra.mxu0 0
        %2776 = vmatprep.subr.bf16.mxu0 0
        %2777 = vmatpush1.bf16.xpose.msra.mxu0 0
        %2778 = vmatprep.mubr.bf16.mxu0 0
        %2779 = vmatmul.mubr.bf16.gmra.mrb[0].mxu0 %v2741
        %v2780 = vpop.f32.mrb[0].mxu0
        %v2781 = vadd.f32 %v935, %v2780
        %v2782 = vpop.f32.mrb[0].mxu0
        %v2783 = vpop.f32.mrb[0].mxu0
        %v2784 = vpop.f32.mrb[0].mxu0
        %2785 = vdwg.mxu0
        %2787 = vrot.lane.b32.xlu0 %v2606, 64
        %v2788 = vpop.permute.xlu0 %2787
        %v2790 = vsel %vm1102, %v2606, 0
        %v2793 = vsel %vm1102, %v2788, 0
        %2795 = vmatprep.subr.bf16.mxu0 0
        %2796 = vmatpush1.bf16.xpose.msra.mxu0 %v2793
        %2797 = vmatprep.subr.bf16.mxu0 0
        %2798 = vmatpush1.bf16.xpose.msra.mxu0 0
        %2799 = vmatprep.subr.bf16.mxu0 0
        %2800 = vmatpush1.bf16.xpose.msra.mxu0 0
        %2801 = vmatprep.subr.bf16.mxu0 0
        %2802 = vmatpush1.bf16.xpose.msra.mxu0 0
        %2803 = vmatprep.subr.bf16.mxu0 0
        %2804 = vmatpush1.bf16.xpose.msra.mxu0 0
        %2805 = vmatprep.subr.bf16.mxu0 0
        %2806 = vmatpush1.bf16.xpose.msra.mxu0 0
        %2807 = vmatprep.subr.bf16.mxu0 0
        %2808 = vmatpush1.bf16.xpose.msra.mxu0 0
        %2809 = vmatprep.subr.bf16.mxu0 0
        %2810 = vmatpush1.bf16.xpose.msra.mxu0 0
        %2811 = vmatprep.subr.bf16.mxu0 0
        %2812 = vmatpush1.bf16.xpose.msra.mxu0 0
        %2813 = vmatprep.subr.bf16.mxu0 0
        %2814 = vmatpush1.bf16.xpose.msra.mxu0 0
        %2815 = vmatprep.subr.bf16.mxu0 0
        %2816 = vmatpush1.bf16.xpose.msra.mxu0 0
        %2817 = vmatprep.subr.bf16.mxu0 0
        %2818 = vmatpush1.bf16.xpose.msra.mxu0 0
        %2819 = vmatprep.subr.bf16.mxu0 0
        %2820 = vmatpush1.bf16.xpose.msra.mxu0 0
        %2821 = vmatprep.subr.bf16.mxu0 0
        %2822 = vmatpush1.bf16.xpose.msra.mxu0 0
        %2823 = vmatprep.subr.bf16.mxu0 0
        %2824 = vmatpush1.bf16.xpose.msra.mxu0 0
        %2825 = vmatprep.subr.bf16.mxu0 0
        %2826 = vmatpush1.bf16.xpose.msra.mxu0 0
        %2827 = vmatprep.mubr.bf16.mxu0 0
        %2828 = vmatmul.mubr.bf16.gmra.mrb[0].mxu0 %v2790
        %v2829 = vpop.f32.mrb[0].mxu0
        %v2830 = vadd.f32 %v935, %v2829
        %v2831 = vpop.f32.mrb[0].mxu0
        %v2832 = vpop.f32.mrb[0].mxu0
        %v2833 = vpop.f32.mrb[0].mxu0
        %2834 = vdwg.mxu0
        %2836 = vrot.lane.b32.xlu0 %v2607, 64
        %v2837 = vpop.permute.xlu0 %2836
        %v2839 = vsel %vm1102, %v2607, 0
        %v2842 = vsel %vm1102, %v2837, 0
        %2844 = vmatprep.subr.bf16.mxu0 0
        %2845 = vmatpush1.bf16.xpose.msra.mxu0 %v2842
        %2846 = vmatprep.subr.bf16.mxu0 0
        %2847 = vmatpush1.bf16.xpose.msra.mxu0 0
        %2848 = vmatprep.subr.bf16.mxu0 0
        %2849 = vmatpush1.bf16.xpose.msra.mxu0 0
        %2850 = vmatprep.subr.bf16.mxu0 0
        %2851 = vmatpush1.bf16.xpose.msra.mxu0 0
        %2852 = vmatprep.subr.bf16.mxu0 0
        %2853 = vmatpush1.bf16.xpose.msra.mxu0 0
        %2854 = vmatprep.subr.bf16.mxu0 0
        %2855 = vmatpush1.bf16.xpose.msra.mxu0 0
        %2856 = vmatprep.subr.bf16.mxu0 0
        %2857 = vmatpush1.bf16.xpose.msra.mxu0 0
        %2858 = vmatprep.subr.bf16.mxu0 0
        %2859 = vmatpush1.bf16.xpose.msra.mxu0 0
        %2860 = vmatprep.subr.bf16.mxu0 0
        %2861 = vmatpush1.bf16.xpose.msra.mxu0 0
        %2862 = vmatprep.subr.bf16.mxu0 0
        %2863 = vmatpush1.bf16.xpose.msra.mxu0 0
        %2864 = vmatprep.subr.bf16.mxu0 0
        %2865 = vmatpush1.bf16.xpose.msra.mxu0 0
        %2866 = vmatprep.subr.bf16.mxu0 0
        %2867 = vmatpush1.bf16.xpose.msra.mxu0 0
        %2868 = vmatprep.subr.bf16.mxu0 0
        %2869 = vmatpush1.bf16.xpose.msra.mxu0 0
        %2870 = vmatprep.subr.bf16.mxu0 0
        %2871 = vmatpush1.bf16.xpose.msra.mxu0 0
        %2872 = vmatprep.subr.bf16.mxu0 0
        %2873 = vmatpush1.bf16.xpose.msra.mxu0 0
        %2874 = vmatprep.subr.bf16.mxu0 0
        %2875 = vmatpush1.bf16.xpose.msra.mxu0 0
        %2876 = vmatprep.mubr.bf16.mxu0 0
        %2877 = vmatmul.mubr.bf16.gmra.mrb[0].mxu0 %v2839
        %v2878 = vpop.f32.mrb[0].mxu0
        %v2879 = vadd.f32 %v935, %v2878
        %v2880 = vpop.f32.mrb[0].mxu0
        %v2881 = vpop.f32.mrb[0].mxu0
        %v2882 = vpop.f32.mrb[0].mxu0
        %2883 = vdwg.mxu0
        %2885 = vrot.lane.b32.xlu0 %v2608, 64
        %v2886 = vpop.permute.xlu0 %2885
        %v2888 = vsel %vm1102, %v2608, 0
        %v2891 = vsel %vm1102, %v2886, 0
        %2893 = vmatprep.subr.bf16.mxu0 0
        %2894 = vmatpush1.bf16.xpose.msra.mxu0 %v2891
        %2895 = vmatprep.subr.bf16.mxu0 0
        %2896 = vmatpush1.bf16.xpose.msra.mxu0 0
        %2897 = vmatprep.subr.bf16.mxu0 0
        %2898 = vmatpush1.bf16.xpose.msra.mxu0 0
        %2899 = vmatprep.subr.bf16.mxu0 0
        %2900 = vmatpush1.bf16.xpose.msra.mxu0 0
        %2901 = vmatprep.subr.bf16.mxu0 0
        %2902 = vmatpush1.bf16.xpose.msra.mxu0 0
        %2903 = vmatprep.subr.bf16.mxu0 0
        %2904 = vmatpush1.bf16.xpose.msra.mxu0 0
        %2905 = vmatprep.subr.bf16.mxu0 0
        %2906 = vmatpush1.bf16.xpose.msra.mxu0 0
        %2907 = vmatprep.subr.bf16.mxu0 0
        %2908 = vmatpush1.bf16.xpose.msra.mxu0 0
        %2909 = vmatprep.subr.bf16.mxu0 0
        %2910 = vmatpush1.bf16.xpose.msra.mxu0 0
        %2911 = vmatprep.subr.bf16.mxu0 0
        %2912 = vmatpush1.bf16.xpose.msra.mxu0 0
        %2913 = vmatprep.subr.bf16.mxu0 0
        %2914 = vmatpush1.bf16.xpose.msra.mxu0 0
        %2915 = vmatprep.subr.bf16.mxu0 0
        %2916 = vmatpush1.bf16.xpose.msra.mxu0 0
        %2917 = vmatprep.subr.bf16.mxu0 0
        %2918 = vmatpush1.bf16.xpose.msra.mxu0 0
        %2919 = vmatprep.subr.bf16.mxu0 0
        %2920 = vmatpush1.bf16.xpose.msra.mxu0 0
        %2921 = vmatprep.subr.bf16.mxu0 0
        %2922 = vmatpush1.bf16.xpose.msra.mxu0 0
        %2923 = vmatprep.subr.bf16.mxu0 0
        %2924 = vmatpush1.bf16.xpose.msra.mxu0 0
        %2925 = vmatprep.mubr.bf16.mxu0 0
        %2926 = vmatmul.mubr.bf16.gmra.mrb[0].mxu0 %v2888
        %v2927 = vpop.f32.mrb[0].mxu0
        %v2928 = vadd.f32 %v935, %v2927
        %v2929 = vpop.f32.mrb[0].mxu0
        %v2930 = vpop.f32.mrb[0].mxu0
        %v2931 = vpop.f32.mrb[0].mxu0
        %2932 = vdwg.mxu0
        %2934 = vrot.lane.b32.xlu0 %v2609, 64
        %v2935 = vpop.permute.xlu0 %2934
        %v2937 = vsel %vm1102, %v2609, 0
        %v2940 = vsel %vm1102, %v2935, 0
        %2942 = vmatprep.subr.bf16.mxu0 0
        %2943 = vmatpush1.bf16.xpose.msra.mxu0 %v2940
        %2944 = vmatprep.subr.bf16.mxu0 0
        %2945 = vmatpush1.bf16.xpose.msra.mxu0 0
        %2946 = vmatprep.subr.bf16.mxu0 0
        %2947 = vmatpush1.bf16.xpose.msra.mxu0 0
        %2948 = vmatprep.subr.bf16.mxu0 0
        %2949 = vmatpush1.bf16.xpose.msra.mxu0 0
        %2950 = vmatprep.subr.bf16.mxu0 0
        %2951 = vmatpush1.bf16.xpose.msra.mxu0 0
        %2952 = vmatprep.subr.bf16.mxu0 0
        %2953 = vmatpush1.bf16.xpose.msra.mxu0 0
        %2954 = vmatprep.subr.bf16.mxu0 0
        %2955 = vmatpush1.bf16.xpose.msra.mxu0 0
        %2956 = vmatprep.subr.bf16.mxu0 0
        %2957 = vmatpush1.bf16.xpose.msra.mxu0 0
        %2958 = vmatprep.subr.bf16.mxu0 0
        %2959 = vmatpush1.bf16.xpose.msra.mxu0 0
        %2960 = vmatprep.subr.bf16.mxu0 0
        %2961 = vmatpush1.bf16.xpose.msra.mxu0 0
        %2962 = vmatprep.subr.bf16.mxu0 0
        %2963 = vmatpush1.bf16.xpose.msra.mxu0 0
        %2964 = vmatprep.subr.bf16.mxu0 0
        %2965 = vmatpush1.bf16.xpose.msra.mxu0 0
        %2966 = vmatprep.subr.bf16.mxu0 0
        %2967 = vmatpush1.bf16.xpose.msra.mxu0 0
        %2968 = vmatprep.subr.bf16.mxu0 0
        %2969 = vmatpush1.bf16.xpose.msra.mxu0 0
        %2970 = vmatprep.subr.bf16.mxu0 0
        %2971 = vmatpush1.bf16.xpose.msra.mxu0 0
        %2972 = vmatprep.subr.bf16.mxu0 0
        %2973 = vmatpush1.bf16.xpose.msra.mxu0 0
        %2974 = vmatprep.mubr.bf16.mxu0 0
        %2975 = vmatmul.mubr.bf16.gmra.mrb[0].mxu0 %v2937
        %v2976 = vpop.f32.mrb[0].mxu0
        %v2977 = vadd.f32 %v935, %v2976
        %v2978 = vpop.f32.mrb[0].mxu0
        %v2979 = vpop.f32.mrb[0].mxu0
        %v2980 = vpop.f32.mrb[0].mxu0
        %2981 = vdwg.mxu0
        %2983 = vrot.lane.b32.xlu0 %v2610, 64
        %v2984 = vpop.permute.xlu0 %2983
        %v2986 = vsel %vm1102, %v2610, 0
        %v2989 = vsel %vm1102, %v2984, 0
        %2991 = vmatprep.subr.bf16.mxu0 0
        %2992 = vmatpush1.bf16.xpose.msra.mxu0 %v2989
        %2993 = vmatprep.subr.bf16.mxu0 0
        %2994 = vmatpush1.bf16.xpose.msra.mxu0 0
        %2995 = vmatprep.subr.bf16.mxu0 0
        %2996 = vmatpush1.bf16.xpose.msra.mxu0 0
        %2997 = vmatprep.subr.bf16.mxu0 0
        %2998 = vmatpush1.bf16.xpose.msra.mxu0 0
        %2999 = vmatprep.subr.bf16.mxu0 0
        %3000 = vmatpush1.bf16.xpose.msra.mxu0 0
        %3001 = vmatprep.subr.bf16.mxu0 0
        %3002 = vmatpush1.bf16.xpose.msra.mxu0 0
        %3003 = vmatprep.subr.bf16.mxu0 0
        %3004 = vmatpush1.bf16.xpose.msra.mxu0 0
        %3005 = vmatprep.subr.bf16.mxu0 0
        %3006 = vmatpush1.bf16.xpose.msra.mxu0 0
        %3007 = vmatprep.subr.bf16.mxu0 0
        %3008 = vmatpush1.bf16.xpose.msra.mxu0 0
        %3009 = vmatprep.subr.bf16.mxu0 0
        %3010 = vmatpush1.bf16.xpose.msra.mxu0 0
        %3011 = vmatprep.subr.bf16.mxu0 0
        %3012 = vmatpush1.bf16.xpose.msra.mxu0 0
        %3013 = vmatprep.subr.bf16.mxu0 0
        %3014 = vmatpush1.bf16.xpose.msra.mxu0 0
        %3015 = vmatprep.subr.bf16.mxu0 0
        %3016 = vmatpush1.bf16.xpose.msra.mxu0 0
        %3017 = vmatprep.subr.bf16.mxu0 0
        %3018 = vmatpush1.bf16.xpose.msra.mxu0 0
        %3019 = vmatprep.subr.bf16.mxu0 0
        %3020 = vmatpush1.bf16.xpose.msra.mxu0 0
        %3021 = vmatprep.subr.bf16.mxu0 0
        %3022 = vmatpush1.bf16.xpose.msra.mxu0 0
        %3023 = vmatprep.mubr.bf16.mxu0 0
        %3024 = vmatmul.mubr.bf16.gmra.mrb[0].mxu0 %v2986
        %v3025 = vpop.f32.mrb[0].mxu0
        %v3026 = vadd.f32 %v935, %v3025
        %v3027 = vpop.f32.mrb[0].mxu0
        %v3028 = vpop.f32.mrb[0].mxu0
        %v3029 = vpop.f32.mrb[0].mxu0
        %3030 = vdwg.mxu0
        %v3031 = vsel %vm1492, %v2683, -inf
        %3032 = vmax.xlane.f32.xlu0 %v3031
        %v3033 = vpop.xlane.xlu0 %3032
        %v3034 = vsel %vm1492, %v2732, -inf
        %3035 = vmax.xlane.f32.xlu0 %v3034
        %v3036 = vpop.xlane.xlu0 %3035
        %v3037 = vsel %vm1492, %v2781, -inf
        %3038 = vmax.xlane.f32.xlu0 %v3037
        %v3039 = vpop.xlane.xlu0 %3038
        %v3040 = vsel %vm1492, %v2830, -inf
        %3041 = vmax.xlane.f32.xlu0 %v3040
        %v3042 = vpop.xlane.xlu0 %3041
        %v3043 = vsel %vm1492, %v2879, -inf
        %3044 = vmax.xlane.f32.xlu0 %v3043
        %v3045 = vpop.xlane.xlu0 %3044
        %v3046 = vsel %vm1492, %v2928, -inf
        %3047 = vmax.xlane.f32.xlu0 %v3046
        %v3048 = vpop.xlane.xlu0 %3047
        %v3049 = vsel %vm1492, %v2977, -inf
        %3050 = vmax.xlane.f32.xlu0 %v3049
        %v3051 = vpop.xlane.xlu0 %3050
        %v3052 = vsel %vm1492, %v3026, -inf
        %3053 = vmax.xlane.f32.xlu0 %v3052
        %v3054 = vpop.xlane.xlu0 %3053
        %v3055 = vsub.f32 %v2683, %v3033
        %v3056 = vsub.f32 %v2732, %v3036
        %v3057 = vsub.f32 %v2781, %v3039
        %v3058 = vsub.f32 %v2830, %v3042
        %v3059 = vsub.f32 %v2879, %v3045
        %v3060 = vsub.f32 %v2928, %v3048
        %v3061 = vsub.f32 %v2977, %v3051
        %v3062 = vsub.f32 %v3026, %v3054
        %v3063 = vmul.f32 %v3055, 1.442695
        %v3064 = vpow.pop %v3063
        %v3065 = vmul.f32 %v3056, 1.442695
        %v3066 = vpow.pop %v3065
        %v3067 = vmul.f32 %v3057, 1.442695
        %v3068 = vpow.pop %v3067
        %v3069 = vmul.f32 %v3058, 1.442695
        %v3070 = vpow.pop %v3069
        %v3071 = vmul.f32 %v3059, 1.442695
        %v3072 = vpow.pop %v3071
        %v3073 = vmul.f32 %v3060, 1.442695
        %v3074 = vpow.pop %v3073
        %v3075 = vmul.f32 %v3061, 1.442695
        %v3076 = vpow.pop %v3075
        %v3077 = vmul.f32 %v3062, 1.442695
        %v3078 = vpow.pop %v3077
        %v3079 = vsel %vm1492, %v3064, 0.0
        %3080 = vadd.xlane.f32.xlu0 %v3079
        %v3081 = vpop.xlane.xlu0 %3080
        %v3082 = vsel %vm1492, %v3066, 0.0
        %3083 = vadd.xlane.f32.xlu0 %v3082
        %v3084 = vpop.xlane.xlu0 %3083
        %v3085 = vsel %vm1492, %v3068, 0.0
        %3086 = vadd.xlane.f32.xlu0 %v3085
        %v3087 = vpop.xlane.xlu0 %3086
        %v3088 = vsel %vm1492, %v3070, 0.0
        %3089 = vadd.xlane.f32.xlu0 %v3088
        %v3090 = vpop.xlane.xlu0 %3089
        %v3091 = vsel %vm1492, %v3072, 0.0
        %3092 = vadd.xlane.f32.xlu0 %v3091
        %v3093 = vpop.xlane.xlu0 %3092
        %v3094 = vsel %vm1492, %v3074, 0.0
        %3095 = vadd.xlane.f32.xlu0 %v3094
        %v3096 = vpop.xlane.xlu0 %3095
        %v3097 = vsel %vm1492, %v3076, 0.0
        %3098 = vadd.xlane.f32.xlu0 %v3097
        %v3099 = vpop.xlane.xlu0 %3098
        %v3100 = vsel %vm1492, %v3078, 0.0
        %3101 = vadd.xlane.f32.xlu0 %v3100
        %v3102 = vpop.xlane.xlu0 %3101
        %v3103 = vrcp.pop %v3081
        %v3104 = vrcp.pop %v3084
        %v3105 = vrcp.pop %v3087
        %v3106 = vrcp.pop %v3090
        %v3107 = vrcp.pop %v3093
        %v3108 = vrcp.pop %v3096
        %v3109 = vrcp.pop %v3099
        %v3110 = vrcp.pop %v3102
        %v3111 = vmul.f32 %v3064, %v3103
        %v3112 = vmul.f32 %v3066, %v3104
        %v3113 = vmul.f32 %v3068, %v3105
        %v3114 = vmul.f32 %v3070, %v3106
        %v3115 = vmul.f32 %v3072, %v3107
        %v3116 = vmul.f32 %v3074, %v3108
        %v3117 = vmul.f32 %v3076, %v3109
        %v3118 = vmul.f32 %v3078, %v3110
        %v3119 = vpack.c.bf16 %v3111, %v3111
        %v3120 = vpack.c.bf16 %v3112, %v3112
        %v3121 = vpack.c.bf16 %v3113, %v3113
        %v3122 = vpack.c.bf16 %v3114, %v3114
        %v3123 = vpack.c.bf16 %v3115, %v3115
        %v3124 = vpack.c.bf16 %v3116, %v3116
        %v3125 = vpack.c.bf16 %v3117, %v3117
        %v3126 = vpack.c.bf16 %v3118, %v3118
        %v3128 = vsel %vm1492, %v3119, 0
        %v3131 = vsel %vm1592, %v2631, 0
        %3133 = vmatprep.subr.bf16.mxu0 0
        %3134 = vmatpush1.bf16.msra.mxu0 %v3131
        %3135 = vmatprep.subr.bf16.mxu0 0
        %3136 = vmatpush1.bf16.msra.mxu0 0
        %3137 = vmatprep.subr.bf16.mxu0 0
        %3138 = vmatpush1.bf16.msra.mxu0 0
        %3139 = vmatprep.subr.bf16.mxu0 0
        %3140 = vmatpush1.bf16.msra.mxu0 0
        %3141 = vmatprep.subr.bf16.mxu0 0
        %3142 = vmatpush1.bf16.msra.mxu0 0
        %3143 = vmatprep.subr.bf16.mxu0 0
        %3144 = vmatpush1.bf16.msra.mxu0 0
        %3145 = vmatprep.subr.bf16.mxu0 0
        %3146 = vmatpush1.bf16.msra.mxu0 0
        %3147 = vmatprep.subr.bf16.mxu0 0
        %3148 = vmatpush1.bf16.msra.mxu0 0
        %3149 = vmatprep.subr.bf16.mxu0 0
        %3150 = vmatpush1.bf16.msra.mxu0 0
        %3151 = vmatprep.subr.bf16.mxu0 0
        %3152 = vmatpush1.bf16.msra.mxu0 0
        %3153 = vmatprep.subr.bf16.mxu0 0
        %3154 = vmatpush1.bf16.msra.mxu0 0
        %3155 = vmatprep.subr.bf16.mxu0 0
        %3156 = vmatpush1.bf16.msra.mxu0 0
        %3157 = vmatprep.subr.bf16.mxu0 0
        %3158 = vmatpush1.bf16.msra.mxu0 0
        %3159 = vmatprep.subr.bf16.mxu0 0
        %3160 = vmatpush1.bf16.msra.mxu0 0
        %3161 = vmatprep.subr.bf16.mxu0 0
        %3162 = vmatpush1.bf16.msra.mxu0 0
        %3163 = vmatprep.subr.bf16.mxu0 0
        %3164 = vmatpush1.bf16.msra.mxu0 0
        %3165 = vmatprep.mubr.bf16.mxu0 0
        %3166 = vmatmul.mubr.bf16.gmra.mrb[0].mxu0 %v3128
        %v3167 = vpop.f32.mrb[0].mxu0
        %v3168 = vadd.f32 0.0, %v3167
        %v3169 = vpop.f32.mrb[0].mxu0
        %v3170 = vpop.f32.mrb[0].mxu0
        %v3171 = vpop.f32.mrb[0].mxu0
        %3172 = vdwg.mxu0
        %v3174 = vsel %vm1492, %v3120, 0
        %v3177 = vsel %vm1592, %v2632, 0
        %3179 = vmatprep.subr.bf16.mxu0 0
        %3180 = vmatpush1.bf16.msra.mxu0 %v3177
        %3181 = vmatprep.subr.bf16.mxu0 0
        %3182 = vmatpush1.bf16.msra.mxu0 0
        %3183 = vmatprep.subr.bf16.mxu0 0
        %3184 = vmatpush1.bf16.msra.mxu0 0
        %3185 = vmatprep.subr.bf16.mxu0 0
        %3186 = vmatpush1.bf16.msra.mxu0 0
        %3187 = vmatprep.subr.bf16.mxu0 0
        %3188 = vmatpush1.bf16.msra.mxu0 0
        %3189 = vmatprep.subr.bf16.mxu0 0
        %3190 = vmatpush1.bf16.msra.mxu0 0
        %3191 = vmatprep.subr.bf16.mxu0 0
        %3192 = vmatpush1.bf16.msra.mxu0 0
        %3193 = vmatprep.subr.bf16.mxu0 0
        %3194 = vmatpush1.bf16.msra.mxu0 0
        %3195 = vmatprep.subr.bf16.mxu0 0
        %3196 = vmatpush1.bf16.msra.mxu0 0
        %3197 = vmatprep.subr.bf16.mxu0 0
        %3198 = vmatpush1.bf16.msra.mxu0 0
        %3199 = vmatprep.subr.bf16.mxu0 0
        %3200 = vmatpush1.bf16.msra.mxu0 0
        %3201 = vmatprep.subr.bf16.mxu0 0
        %3202 = vmatpush1.bf16.msra.mxu0 0
        %3203 = vmatprep.subr.bf16.mxu0 0
        %3204 = vmatpush1.bf16.msra.mxu0 0
        %3205 = vmatprep.subr.bf16.mxu0 0
        %3206 = vmatpush1.bf16.msra.mxu0 0
        %3207 = vmatprep.subr.bf16.mxu0 0
        %3208 = vmatpush1.bf16.msra.mxu0 0
        %3209 = vmatprep.subr.bf16.mxu0 0
        %3210 = vmatpush1.bf16.msra.mxu0 0
        %3211 = vmatprep.mubr.bf16.mxu0 0
        %3212 = vmatmul.mubr.bf16.gmra.mrb[0].mxu0 %v3174
        %v3213 = vpop.f32.mrb[0].mxu0
        %v3214 = vadd.f32 0.0, %v3213
        %v3215 = vpop.f32.mrb[0].mxu0
        %v3216 = vpop.f32.mrb[0].mxu0
        %v3217 = vpop.f32.mrb[0].mxu0
        %3218 = vdwg.mxu0
        %v3220 = vsel %vm1492, %v3121, 0
        %v3223 = vsel %vm1592, %v2633, 0
        %3225 = vmatprep.subr.bf16.mxu0 0
        %3226 = vmatpush1.bf16.msra.mxu0 %v3223
        %3227 = vmatprep.subr.bf16.mxu0 0
        %3228 = vmatpush1.bf16.msra.mxu0 0
        %3229 = vmatprep.subr.bf16.mxu0 0
        %3230 = vmatpush1.bf16.msra.mxu0 0
        %3231 = vmatprep.subr.bf16.mxu0 0
        %3232 = vmatpush1.bf16.msra.mxu0 0
        %3233 = vmatprep.subr.bf16.mxu0 0
        %3234 = vmatpush1.bf16.msra.mxu0 0
        %3235 = vmatprep.subr.bf16.mxu0 0
        %3236 = vmatpush1.bf16.msra.mxu0 0
        %3237 = vmatprep.subr.bf16.mxu0 0
        %3238 = vmatpush1.bf16.msra.mxu0 0
        %3239 = vmatprep.subr.bf16.mxu0 0
        %3240 = vmatpush1.bf16.msra.mxu0 0
        %3241 = vmatprep.subr.bf16.mxu0 0
        %3242 = vmatpush1.bf16.msra.mxu0 0
        %3243 = vmatprep.subr.bf16.mxu0 0
        %3244 = vmatpush1.bf16.msra.mxu0 0
        %3245 = vmatprep.subr.bf16.mxu0 0
        %3246 = vmatpush1.bf16.msra.mxu0 0
        %3247 = vmatprep.subr.bf16.mxu0 0
        %3248 = vmatpush1.bf16.msra.mxu0 0
        %3249 = vmatprep.subr.bf16.mxu0 0
        %3250 = vmatpush1.bf16.msra.mxu0 0
        %3251 = vmatprep.subr.bf16.mxu0 0
        %3252 = vmatpush1.bf16.msra.mxu0 0
        %3253 = vmatprep.subr.bf16.mxu0 0
        %3254 = vmatpush1.bf16.msra.mxu0 0
        %3255 = vmatprep.subr.bf16.mxu0 0
        %3256 = vmatpush1.bf16.msra.mxu0 0
        %3257 = vmatprep.mubr.bf16.mxu0 0
        %3258 = vmatmul.mubr.bf16.gmra.mrb[0].mxu0 %v3220
        %v3259 = vpop.f32.mrb[0].mxu0
        %v3260 = vadd.f32 0.0, %v3259
        %v3261 = vpop.f32.mrb[0].mxu0
        %v3262 = vpop.f32.mrb[0].mxu0
        %v3263 = vpop.f32.mrb[0].mxu0
        %3264 = vdwg.mxu0
        %v3266 = vsel %vm1492, %v3122, 0
        %v3269 = vsel %vm1592, %v2634, 0
        %3271 = vmatprep.subr.bf16.mxu0 0
        %3272 = vmatpush1.bf16.msra.mxu0 %v3269
        %3273 = vmatprep.subr.bf16.mxu0 0
        %3274 = vmatpush1.bf16.msra.mxu0 0
        %3275 = vmatprep.subr.bf16.mxu0 0
        %3276 = vmatpush1.bf16.msra.mxu0 0
        %3277 = vmatprep.subr.bf16.mxu0 0
        %3278 = vmatpush1.bf16.msra.mxu0 0
        %3279 = vmatprep.subr.bf16.mxu0 0
        %3280 = vmatpush1.bf16.msra.mxu0 0
        %3281 = vmatprep.subr.bf16.mxu0 0
        %3282 = vmatpush1.bf16.msra.mxu0 0
        %3283 = vmatprep.subr.bf16.mxu0 0
        %3284 = vmatpush1.bf16.msra.mxu0 0
        %3285 = vmatprep.subr.bf16.mxu0 0
        %3286 = vmatpush1.bf16.msra.mxu0 0
        %3287 = vmatprep.subr.bf16.mxu0 0
        %3288 = vmatpush1.bf16.msra.mxu0 0
        %3289 = vmatprep.subr.bf16.mxu0 0
        %3290 = vmatpush1.bf16.msra.mxu0 0
        %3291 = vmatprep.subr.bf16.mxu0 0
        %3292 = vmatpush1.bf16.msra.mxu0 0
        %3293 = vmatprep.subr.bf16.mxu0 0
        %3294 = vmatpush1.bf16.msra.mxu0 0
        %3295 = vmatprep.subr.bf16.mxu0 0
        %3296 = vmatpush1.bf16.msra.mxu0 0
        %3297 = vmatprep.subr.bf16.mxu0 0
        %3298 = vmatpush1.bf16.msra.mxu0 0
        %3299 = vmatprep.subr.bf16.mxu0 0
        %3300 = vmatpush1.bf16.msra.mxu0 0
        %3301 = vmatprep.subr.bf16.mxu0 0
        %3302 = vmatpush1.bf16.msra.mxu0 0
        %3303 = vmatprep.mubr.bf16.mxu0 0
        %3304 = vmatmul.mubr.bf16.gmra.mrb[0].mxu0 %v3266
        %v3305 = vpop.f32.mrb[0].mxu0
        %v3306 = vadd.f32 0.0, %v3305
        %v3307 = vpop.f32.mrb[0].mxu0
        %v3308 = vpop.f32.mrb[0].mxu0
        %v3309 = vpop.f32.mrb[0].mxu0
        %3310 = vdwg.mxu0
        %v3312 = vsel %vm1492, %v3123, 0
        %v3315 = vsel %vm1592, %v2635, 0
        %3317 = vmatprep.subr.bf16.mxu0 0
        %3318 = vmatpush1.bf16.msra.mxu0 %v3315
        %3319 = vmatprep.subr.bf16.mxu0 0
        %3320 = vmatpush1.bf16.msra.mxu0 0
        %3321 = vmatprep.subr.bf16.mxu0 0
        %3322 = vmatpush1.bf16.msra.mxu0 0
        %3323 = vmatprep.subr.bf16.mxu0 0
        %3324 = vmatpush1.bf16.msra.mxu0 0
        %3325 = vmatprep.subr.bf16.mxu0 0
        %3326 = vmatpush1.bf16.msra.mxu0 0
        %3327 = vmatprep.subr.bf16.mxu0 0
        %3328 = vmatpush1.bf16.msra.mxu0 0
        %3329 = vmatprep.subr.bf16.mxu0 0
        %3330 = vmatpush1.bf16.msra.mxu0 0
        %3331 = vmatprep.subr.bf16.mxu0 0
        %3332 = vmatpush1.bf16.msra.mxu0 0
        %3333 = vmatprep.subr.bf16.mxu0 0
        %3334 = vmatpush1.bf16.msra.mxu0 0
        %3335 = vmatprep.subr.bf16.mxu0 0
        %3336 = vmatpush1.bf16.msra.mxu0 0
        %3337 = vmatprep.subr.bf16.mxu0 0
        %3338 = vmatpush1.bf16.msra.mxu0 0
        %3339 = vmatprep.subr.bf16.mxu0 0
        %3340 = vmatpush1.bf16.msra.mxu0 0
        %3341 = vmatprep.subr.bf16.mxu0 0
        %3342 = vmatpush1.bf16.msra.mxu0 0
        %3343 = vmatprep.subr.bf16.mxu0 0
        %3344 = vmatpush1.bf16.msra.mxu0 0
        %3345 = vmatprep.subr.bf16.mxu0 0
        %3346 = vmatpush1.bf16.msra.mxu0 0
        %3347 = vmatprep.subr.bf16.mxu0 0
        %3348 = vmatpush1.bf16.msra.mxu0 0
        %3349 = vmatprep.mubr.bf16.mxu0 0
        %3350 = vmatmul.mubr.bf16.gmra.mrb[0].mxu0 %v3312
        %v3351 = vpop.f32.mrb[0].mxu0
        %v3352 = vadd.f32 0.0, %v3351
        %v3353 = vpop.f32.mrb[0].mxu0
        %v3354 = vpop.f32.mrb[0].mxu0
        %v3355 = vpop.f32.mrb[0].mxu0
        %3356 = vdwg.mxu0
        %v3358 = vsel %vm1492, %v3124, 0
        %v3361 = vsel %vm1592, %v2636, 0
        %3363 = vmatprep.subr.bf16.mxu0 0
        %3364 = vmatpush1.bf16.msra.mxu0 %v3361
        %3365 = vmatprep.subr.bf16.mxu0 0
        %3366 = vmatpush1.bf16.msra.mxu0 0
        %3367 = vmatprep.subr.bf16.mxu0 0
        %3368 = vmatpush1.bf16.msra.mxu0 0
        %3369 = vmatprep.subr.bf16.mxu0 0
        %3370 = vmatpush1.bf16.msra.mxu0 0
        %3371 = vmatprep.subr.bf16.mxu0 0
        %3372 = vmatpush1.bf16.msra.mxu0 0
        %3373 = vmatprep.subr.bf16.mxu0 0
        %3374 = vmatpush1.bf16.msra.mxu0 0
        %3375 = vmatprep.subr.bf16.mxu0 0
        %3376 = vmatpush1.bf16.msra.mxu0 0
        %3377 = vmatprep.subr.bf16.mxu0 0
        %3378 = vmatpush1.bf16.msra.mxu0 0
        %3379 = vmatprep.subr.bf16.mxu0 0
        %3380 = vmatpush1.bf16.msra.mxu0 0
        %3381 = vmatprep.subr.bf16.mxu0 0
        %3382 = vmatpush1.bf16.msra.mxu0 0
        %3383 = vmatprep.subr.bf16.mxu0 0
        %3384 = vmatpush1.bf16.msra.mxu0 0
        %3385 = vmatprep.subr.bf16.mxu0 0
        %3386 = vmatpush1.bf16.msra.mxu0 0
        %3387 = vmatprep.subr.bf16.mxu0 0
        %3388 = vmatpush1.bf16.msra.mxu0 0
        %3389 = vmatprep.subr.bf16.mxu0 0
        %3390 = vmatpush1.bf16.msra.mxu0 0
        %3391 = vmatprep.subr.bf16.mxu0 0
        %3392 = vmatpush1.bf16.msra.mxu0 0
        %3393 = vmatprep.subr.bf16.mxu0 0
        %3394 = vmatpush1.bf16.msra.mxu0 0
        %3395 = vmatprep.mubr.bf16.mxu0 0
        %3396 = vmatmul.mubr.bf16.gmra.mrb[0].mxu0 %v3358
        %v3397 = vpop.f32.mrb[0].mxu0
        %v3398 = vadd.f32 0.0, %v3397
        %v3399 = vpop.f32.mrb[0].mxu0
        %v3400 = vpop.f32.mrb[0].mxu0
        %v3401 = vpop.f32.mrb[0].mxu0
        %3402 = vdwg.mxu0
        %v3404 = vsel %vm1492, %v3125, 0
        %v3407 = vsel %vm1592, %v2637, 0
        %3409 = vmatprep.subr.bf16.mxu0 0
        %3410 = vmatpush1.bf16.msra.mxu0 %v3407
        %3411 = vmatprep.subr.bf16.mxu0 0
        %3412 = vmatpush1.bf16.msra.mxu0 0
        %3413 = vmatprep.subr.bf16.mxu0 0
        %3414 = vmatpush1.bf16.msra.mxu0 0
        %3415 = vmatprep.subr.bf16.mxu0 0
        %3416 = vmatpush1.bf16.msra.mxu0 0
        %3417 = vmatprep.subr.bf16.mxu0 0
        %3418 = vmatpush1.bf16.msra.mxu0 0
        %3419 = vmatprep.subr.bf16.mxu0 0
        %3420 = vmatpush1.bf16.msra.mxu0 0
        %3421 = vmatprep.subr.bf16.mxu0 0
        %3422 = vmatpush1.bf16.msra.mxu0 0
        %3423 = vmatprep.subr.bf16.mxu0 0
        %3424 = vmatpush1.bf16.msra.mxu0 0
        %3425 = vmatprep.subr.bf16.mxu0 0
        %3426 = vmatpush1.bf16.msra.mxu0 0
        %3427 = vmatprep.subr.bf16.mxu0 0
        %3428 = vmatpush1.bf16.msra.mxu0 0
        %3429 = vmatprep.subr.bf16.mxu0 0
        %3430 = vmatpush1.bf16.msra.mxu0 0
        %3431 = vmatprep.subr.bf16.mxu0 0
        %3432 = vmatpush1.bf16.msra.mxu0 0
        %3433 = vmatprep.subr.bf16.mxu0 0
        %3434 = vmatpush1.bf16.msra.mxu0 0
        %3435 = vmatprep.subr.bf16.mxu0 0
        %3436 = vmatpush1.bf16.msra.mxu0 0
        %3437 = vmatprep.subr.bf16.mxu0 0
        %3438 = vmatpush1.bf16.msra.mxu0 0
        %3439 = vmatprep.subr.bf16.mxu0 0
        %3440 = vmatpush1.bf16.msra.mxu0 0
        %3441 = vmatprep.mubr.bf16.mxu0 0
        %3442 = vmatmul.mubr.bf16.gmra.mrb[0].mxu0 %v3404
        %v3443 = vpop.f32.mrb[0].mxu0
        %v3444 = vadd.f32 0.0, %v3443
        %v3445 = vpop.f32.mrb[0].mxu0
        %v3446 = vpop.f32.mrb[0].mxu0
        %v3447 = vpop.f32.mrb[0].mxu0
        %3448 = vdwg.mxu0
        %v3450 = vsel %vm1492, %v3126, 0
        %v3453 = vsel %vm1592, %v2638, 0
        %3455 = vmatprep.subr.bf16.mxu0 0
        %3456 = vmatpush1.bf16.msra.mxu0 %v3453
        %3457 = vmatprep.subr.bf16.mxu0 0
        %3458 = vmatpush1.bf16.msra.mxu0 0
        %3459 = vmatprep.subr.bf16.mxu0 0
        %3460 = vmatpush1.bf16.msra.mxu0 0
        %3461 = vmatprep.subr.bf16.mxu0 0
        %3462 = vmatpush1.bf16.msra.mxu0 0
        %3463 = vmatprep.subr.bf16.mxu0 0
        %3464 = vmatpush1.bf16.msra.mxu0 0
        %3465 = vmatprep.subr.bf16.mxu0 0
        %3466 = vmatpush1.bf16.msra.mxu0 0
        %3467 = vmatprep.subr.bf16.mxu0 0
        %3468 = vmatpush1.bf16.msra.mxu0 0
        %3469 = vmatprep.subr.bf16.mxu0 0
        %3470 = vmatpush1.bf16.msra.mxu0 0
        %3471 = vmatprep.subr.bf16.mxu0 0
        %3472 = vmatpush1.bf16.msra.mxu0 0
        %3473 = vmatprep.subr.bf16.mxu0 0
        %3474 = vmatpush1.bf16.msra.mxu0 0
        %3475 = vmatprep.subr.bf16.mxu0 0
        %3476 = vmatpush1.bf16.msra.mxu0 0
        %3477 = vmatprep.subr.bf16.mxu0 0
        %3478 = vmatpush1.bf16.msra.mxu0 0
        %3479 = vmatprep.subr.bf16.mxu0 0
        %3480 = vmatpush1.bf16.msra.mxu0 0
        %3481 = vmatprep.subr.bf16.mxu0 0
        %3482 = vmatpush1.bf16.msra.mxu0 0
        %3483 = vmatprep.subr.bf16.mxu0 0
        %3484 = vmatpush1.bf16.msra.mxu0 0
        %3485 = vmatprep.subr.bf16.mxu0 0
        %3486 = vmatpush1.bf16.msra.mxu0 0
        %3487 = vmatprep.mubr.bf16.mxu0 0
        %3488 = vmatmul.mubr.bf16.gmra.mrb[0].mxu0 %v3450
        %v3489 = vpop.f32.mrb[0].mxu0
        %v3490 = vadd.f32 0.0, %v3489
        %v3491 = vpop.f32.mrb[0].mxu0
        %v3492 = vpop.f32.mrb[0].mxu0
        %v3493 = vpop.f32.mrb[0].mxu0
        %3494 = vdwg.mxu0
        %3497 = vrot.lane.b32.xlu0 %v3260, 16
        %v3498 = vpop.permute.xlu0 %3497
        %3499 = vrot.lane.b32.xlu0 %v3306, 16
        %v3500 = vpop.permute.xlu0 %3499
        %3505 = vrot.lane.b32.xlu0 %v3352, 32
        %v3506 = vpop.permute.xlu0 %3505
        %3507 = vrot.lane.b32.xlu0 %v3398, 32
        %v3508 = vpop.permute.xlu0 %3507
        %3513 = vrot.lane.b32.xlu0 %v3444, 48
        %v3514 = vpop.permute.xlu0 %3513
        %3515 = vrot.lane.b32.xlu0 %v3490, 48
        %v3516 = vpop.permute.xlu0 %3515
        %v3519 = vsel %vm1102, %v3168, %v3498
        %v3520 = vsel %vm1102, %v3214, %v3500
        %v3521 = vsel %vm1984, %v3519, %v3506
        %v3522 = vsel %vm1984, %v3520, %v3508
        %v3523 = vsel %vm1987, %v3521, %v3514
        %v3524 = vsel %vm1987, %v3522, %v3516
        %v3525 = vpack.c.bf16 %v3524, %v3523
        %s3526 = scalar_lea.vmem %s7, 32
        %v3527 = vld [vmem:[%s3526] sm:$0xf]
        %v3528 = vld [vmem:[%s3526 + $0x4] sm:$0xf]
        %v3529 = vld [vmem:[%s3526 + $0x8] sm:$0xf]
        %v3530 = vld [vmem:[%s3526 + $0xc] sm:$0xf]
        %v3531 = vld [vmem:[%s3526 + $0x10] sm:$0xf]
        %v3532 = vld [vmem:[%s3526 + $0x14] sm:$0xf]
        %v3533 = vld [vmem:[%s3526 + $0x18] sm:$0xf]
        %v3534 = vld [vmem:[%s3526 + $0x1c] sm:$0xf]
        %v3543 = vunpack.c.l.b16 %v3527
        %v3544 = vunpack.c.l.b16 %v3528
        %v3545 = vunpack.c.l.b16 %v3529
        %v3546 = vunpack.c.l.b16 %v3530
        %v3547 = vunpack.c.l.b16 %v3531
        %v3548 = vunpack.c.l.b16 %v3532
        %v3549 = vunpack.c.l.b16 %v3533
        %v3550 = vunpack.c.l.b16 %v3534
        %v3551 = vpack.c.b16 %v3544, %v3543
        %v3552 = vpack.c.b16 %v3546, %v3545
        %v3553 = vpack.c.b16 %v3548, %v3547
        %v3554 = vpack.c.b16 %v3550, %v3549
        %v3560 = vsel %vm887, %v3525, 0
        %3562 = vmatprep.subr.bf16.mxu0 0
        %3563 = vmatpush1.bf16.msra.mxu0 %v3551
        %3564 = vmatprep.subr.bf16.mxu0 0
        %3565 = vmatpush1.bf16.msra.mxu0 %v3552
        %3566 = vmatprep.subr.bf16.mxu0 0
        %3567 = vmatpush1.bf16.msra.mxu0 %v3553
        %3568 = vmatprep.subr.bf16.mxu0 0
        %3569 = vmatpush1.bf16.msra.mxu0 %v3554
        %3570 = vmatprep.subr.bf16.mxu0 0
        %3571 = vmatpush1.bf16.msra.mxu0 0
        %3572 = vmatprep.subr.bf16.mxu0 0
        %3573 = vmatpush1.bf16.msra.mxu0 0
        %3574 = vmatprep.subr.bf16.mxu0 0
        %3575 = vmatpush1.bf16.msra.mxu0 0
        %3576 = vmatprep.subr.bf16.mxu0 0
        %3577 = vmatpush1.bf16.msra.mxu0 0
        %3578 = vmatprep.subr.bf16.mxu0 0
        %3579 = vmatpush1.bf16.msra.mxu0 0
        %3580 = vmatprep.subr.bf16.mxu0 0
        %3581 = vmatpush1.bf16.msra.mxu0 0
        %3582 = vmatprep.subr.bf16.mxu0 0
        %3583 = vmatpush1.bf16.msra.mxu0 0
        %3584 = vmatprep.subr.bf16.mxu0 0
        %3585 = vmatpush1.bf16.msra.mxu0 0
        %3586 = vmatprep.subr.bf16.mxu0 0
        %3587 = vmatpush1.bf16.msra.mxu0 0
        %3588 = vmatprep.subr.bf16.mxu0 0
        %3589 = vmatpush1.bf16.msra.mxu0 0
        %3590 = vmatprep.subr.bf16.mxu0 0
        %3591 = vmatpush1.bf16.msra.mxu0 0
        %3592 = vmatprep.subr.bf16.mxu0 0
        %3593 = vmatpush1.bf16.msra.mxu0 0
        %3594 = vmatprep.mubr.bf16.mxu0 0
        %3595 = vmatmul.mubr.bf16.gmra.mrb[0].mxu0 %v3560
        %v3596 = vpop.f32.mrb[0].mxu0
        %v3597 = vadd.f32 0.0, %v3596
        %v3598 = vpop.f32.mrb[0].mxu0
        %v3599 = vpop.f32.mrb[0].mxu0
        %v3600 = vadd.f32 0.0, %v3599
        %v3601 = vpop.f32.mrb[0].mxu0
        %3602 = vdwg.mxu0
        %v3603 = vadd.f32 %v2472, %v3597
        %v3604 = vadd.f32 %v2473, %v3600
        %s3605 = scalar_lea.vmem %s8, 1
        %v3606 = vld [vmem:[%s3605] sm:$0x1]
        %v3608 = vlaneseq
        %v3609 = vshrl.u32 %v3608, 7
        %v3610 = vsub.s32 0, %v3609
        %v3611 = vrot.slane %v3606, %v3610
        %v3613 = vadd.f32 %v3603, %v3611
        %v3614 = vadd.f32 %v3604, %v3611
        %s3615 = scalar_lea.vmem %s9, 1
        %v3616 = vld [vmem:[%s3615] sm:$0x1]
        %s3617 = scalar_lea.vmem %s10, 1
        %v3618 = vld [vmem:[%s3617] sm:$0x1]
        %v3619 = vsel %vm887, %v3613, 0.0
        %3620 = vadd.xlane.f32.xlu0 %v3619
        %v3621 = vpop.xlane.xlu0 %3620
        %v3622 = vsel %vm887, %v3614, 0.0
        %3623 = vadd.xlane.f32.xlu0 %v3622
        %v3624 = vpop.xlane.xlu0 %3623
        %v3625 = vmul.f32 %v3621, %v2086
        %v3626 = vmul.f32 %v3624, %v2086
        %v3627 = vsub.f32 %v3613, %v3625
        %v3628 = vsub.f32 %v3614, %v3626
        %v3629 = vmul.f32 %v3627, %v3627
        %v3630 = vmul.f32 %v3628, %v3628
        %v3631 = vsel %vm887, %v3629, 0.0
        %3632 = vadd.xlane.f32.xlu0 %v3631
        %v3633 = vpop.xlane.xlu0 %3632
        %v3634 = vsel %vm887, %v3630, 0.0
        %3635 = vadd.xlane.f32.xlu0 %v3634
        %v3636 = vpop.xlane.xlu0 %3635
        %v3637 = vmul.f32 %v3633, %v2086
        %v3638 = vmul.f32 %v3636, %v2086
        %v3639 = vadd.f32 %v3637, 1e-06
        %v3640 = vadd.f32 %v3638, 1e-06
        %v3641 = vrsqrt.pop %v3639
        %v3642 = vrsqrt.pop %v3640
        %v3643 = vmul.f32 %v3627, %v3641
        %v3644 = vmul.f32 %v3628, %v3642
        %v3646 = vlaneseq
        %v3647 = vshrl.u32 %v3646, 7
        %v3648 = vsub.s32 0, %v3647
        %v3649 = vrot.slane %v3616, %v3648
        %v3651 = vmul.f32 %v3643, %v3649
        %v3652 = vmul.f32 %v3644, %v3649
        %v3654 = vlaneseq
        %v3655 = vshrl.u32 %v3654, 7
        %v3656 = vsub.s32 0, %v3655
        %v3657 = vrot.slane %v3618, %v3656
        %v3659 = vadd.f32 %v3651, %v3657
        %v3660 = vadd.f32 %v3652, %v3657
        %v3661 = vpack.c.bf16 %v3660, %v3659
        %s3662 = scalar_lea.vmem %s11, 64
        %v3663 = vld [vmem:[%s3662] sm:$0xff]
        %v3664 = vld [vmem:[%s3662 + $0x8] sm:$0xff]
        %v3665 = vld [vmem:[%s3662 + $0x10] sm:$0xff]
        %v3666 = vld [vmem:[%s3662 + $0x18] sm:$0xff]
        %v3667 = vld [vmem:[%s3662 + $0x20] sm:$0xff]
        %v3668 = vld [vmem:[%s3662 + $0x28] sm:$0xff]
        %v3669 = vld [vmem:[%s3662 + $0x30] sm:$0xff]
        %v3670 = vld [vmem:[%s3662 + $0x38] sm:$0xff]
        %s3671 = scalar_lea.vmem %s12, 2
        %v3672 = vld [vmem:[%s3671] sm:$0x3]
        %v3674 = vlaneseq
        %v3675 = vshrl.u32 %v3674, 7
        %v3676 = vsub.s32 0, %v3675
        %v3677 = vrot.slane %v3672, %v3676
        %v3678 = vlaneseq
        %v3679 = vshrl.u32 %v3678, 7
        %v3680 = vsub.s32 1, %v3679
        %v3681 = vrot.slane %v3672, %v3680
        %v3692 = vunpack.c.l.b16 %v3663
        %v3693 = vunpack.c.h.b16 %v3663
        %v3694 = vunpack.c.l.b16 %v3664
        %v3695 = vunpack.c.h.b16 %v3664
        %v3696 = vunpack.c.l.b16 %v3665
        %v3697 = vunpack.c.h.b16 %v3665
        %v3698 = vunpack.c.l.b16 %v3666
        %v3699 = vunpack.c.h.b16 %v3666
        %v3700 = vunpack.c.l.b16 %v3667
        %v3701 = vunpack.c.h.b16 %v3667
        %v3702 = vunpack.c.l.b16 %v3668
        %v3703 = vunpack.c.h.b16 %v3668
        %v3704 = vunpack.c.l.b16 %v3669
        %v3705 = vunpack.c.h.b16 %v3669
        %v3706 = vunpack.c.l.b16 %v3670
        %v3707 = vunpack.c.h.b16 %v3670
        %v3708 = vpack.c.b16 %v3694, %v3692
        %v3709 = vpack.c.b16 %v3695, %v3693
        %v3710 = vpack.c.b16 %v3698, %v3696
        %v3711 = vpack.c.b16 %v3699, %v3697
        %v3712 = vpack.c.b16 %v3702, %v3700
        %v3713 = vpack.c.b16 %v3703, %v3701
        %v3714 = vpack.c.b16 %v3706, %v3704
        %v3715 = vpack.c.b16 %v3707, %v3705
        %v3725 = vsel %vm887, %v3661, 0
        %3727 = vmatprep.subr.bf16.mxu0 %v3709
        %3728 = vmatpush1.bf16.msra.mxu0 %v3708
        %3729 = vmatprep.subr.bf16.mxu0 %v3711
        %3730 = vmatpush1.bf16.msra.mxu0 %v3710
        %3731 = vmatprep.subr.bf16.mxu0 %v3713
        %3732 = vmatpush1.bf16.msra.mxu0 %v3712
        %3733 = vmatprep.subr.bf16.mxu0 %v3715
        %3734 = vmatpush1.bf16.msra.mxu0 %v3714
        %3735 = vmatprep.subr.bf16.mxu0 0
        %3736 = vmatpush1.bf16.msra.mxu0 0
        %3737 = vmatprep.subr.bf16.mxu0 0
        %3738 = vmatpush1.bf16.msra.mxu0 0
        %3739 = vmatprep.subr.bf16.mxu0 0
        %3740 = vmatpush1.bf16.msra.mxu0 0
        %3741 = vmatprep.subr.bf16.mxu0 0
        %3742 = vmatpush1.bf16.msra.mxu0 0
        %3743 = vmatprep.subr.bf16.mxu0 0
        %3744 = vmatpush1.bf16.msra.mxu0 0
        %3745 = vmatprep.subr.bf16.mxu0 0
        %3746 = vmatpush1.bf16.msra.mxu0 0
        %3747 = vmatprep.subr.bf16.mxu0 0
        %3748 = vmatpush1.bf16.msra.mxu0 0
        %3749 = vmatprep.subr.bf16.mxu0 0
        %3750 = vmatpush1.bf16.msra.mxu0 0
        %3751 = vmatprep.subr.bf16.mxu0 0
        %3752 = vmatpush1.bf16.msra.mxu0 0
        %3753 = vmatprep.subr.bf16.mxu0 0
        %3754 = vmatpush1.bf16.msra.mxu0 0
        %3755 = vmatprep.subr.bf16.mxu0 0
        %3756 = vmatpush1.bf16.msra.mxu0 0
        %3757 = vmatprep.subr.bf16.mxu0 0
        %3758 = vmatpush1.bf16.msra.mxu0 0
        %3759 = vmatprep.mubr.bf16.mxu0 0
        %3760 = vmatmul.mubr.bf16.gmra.mrb[0].mxu0 %v3725
        %v3761 = vpop.f32.mrb[0].mxu0
        %v3762 = vadd.f32 %v3677, %v3761
        %v3763 = vpop.f32.mrb[0].mxu0
        %v3764 = vadd.f32 %v3681, %v3763
        %v3765 = vpop.f32.mrb[0].mxu0
        %v3766 = vadd.f32 %v3677, %v3765
        %v3767 = vpop.f32.mrb[0].mxu0
        %v3768 = vadd.f32 %v3681, %v3767
        %3769 = vdwg.mxu0
        %v3770 = vmul.f32 %v3762, 0.5
        %v3771 = vmul.f32 %v3764, 0.5
        %v3772 = vmul.f32 %v3766, 0.5
        %v3773 = vmul.f32 %v3768, 0.5
        %v3774 = vmul.f32 %v3762, 0.70710677
        %v3775 = vmul.f32 %v3764, 0.70710677
        %v3776 = vmul.f32 %v3766, 0.70710677
        %v3777 = vmul.f32 %v3768, 0.70710677
        %v3778 = verf.f32.pop %v3774
        %v3779 = verf.f32.pop %v3775
        %v3780 = verf.f32.pop %v3776
        %v3781 = verf.f32.pop %v3777
        %v3782 = vadd.f32 %v3778, 1.0
        %v3783 = vadd.f32 %v3779, 1.0
        %v3784 = vadd.f32 %v3780, 1.0
        %v3785 = vadd.f32 %v3781, 1.0
        %v3786 = vmul.f32 %v3770, %v3782
        %v3787 = vmul.f32 %v3771, %v3783
        %v3788 = vmul.f32 %v3772, %v3784
        %v3789 = vmul.f32 %v3773, %v3785
        %v3790 = vpack.c.bf16 %v3788, %v3786
        %v3791 = vpack.c.bf16 %v3789, %v3787
        %s3792 = scalar_lea.vmem %s13, 128
        %v3793 = vld [vmem:[%s3792] sm:$0xf]
        %v3794 = vld [vmem:[%s3792 + $0x4] sm:$0xf]
        %v3795 = vld [vmem:[%s3792 + $0x8] sm:$0xf]
        %v3796 = vld [vmem:[%s3792 + $0xc] sm:$0xf]
        %v3797 = vld [vmem:[%s3792 + $0x10] sm:$0xf]
        %v3798 = vld [vmem:[%s3792 + $0x14] sm:$0xf]
        %v3799 = vld [vmem:[%s3792 + $0x18] sm:$0xf]
        %v3800 = vld [vmem:[%s3792 + $0x1c] sm:$0xf]
        %v3801 = vld [vmem:[%s3792 + $0x20] sm:$0xf]
        %v3802 = vld [vmem:[%s3792 + $0x24] sm:$0xf]
        %v3803 = vld [vmem:[%s3792 + $0x28] sm:$0xf]
        %v3804 = vld [vmem:[%s3792 + $0x2c] sm:$0xf]
        %v3805 = vld [vmem:[%s3792 + $0x30] sm:$0xf]
        %v3806 = vld [vmem:[%s3792 + $0x34] sm:$0xf]
        %v3807 = vld [vmem:[%s3792 + $0x38] sm:$0xf]
        %v3808 = vld [vmem:[%s3792 + $0x3c] sm:$0xf]
        %v3809 = vld [vmem:[%s3792 + $0x40] sm:$0xf]
        %v3810 = vld [vmem:[%s3792 + $0x44] sm:$0xf]
        %v3811 = vld [vmem:[%s3792 + $0x48] sm:$0xf]
        %v3812 = vld [vmem:[%s3792 + $0x4c] sm:$0xf]
        %v3813 = vld [vmem:[%s3792 + $0x50] sm:$0xf]
        %v3814 = vld [vmem:[%s3792 + $0x54] sm:$0xf]
        %v3815 = vld [vmem:[%s3792 + $0x58] sm:$0xf]
        %v3816 = vld [vmem:[%s3792 + $0x5c] sm:$0xf]
        %v3817 = vld [vmem:[%s3792 + $0x60] sm:$0xf]
        %v3818 = vld [vmem:[%s3792 + $0x64] sm:$0xf]
        %v3819 = vld [vmem:[%s3792 + $0x68] sm:$0xf]
        %v3820 = vld [vmem:[%s3792 + $0x6c] sm:$0xf]
        %v3821 = vld [vmem:[%s3792 + $0x70] sm:$0xf]
        %v3822 = vld [vmem:[%s3792 + $0x74] sm:$0xf]
        %v3823 = vld [vmem:[%s3792 + $0x78] sm:$0xf]
        %v3824 = vld [vmem:[%s3792 + $0x7c] sm:$0xf]
        %s3825 = scalar_lea.vmem %s14, 1
        %v3826 = vld [vmem:[%s3825] sm:$0x1]
        %v3828 = vlaneseq
        %v3829 = vshrl.u32 %v3828, 7
        %v3830 = vsub.s32 0, %v3829
        %v3831 = vrot.slane %v3826, %v3830
        %v3865 = vunpack.c.l.b16 %v3793
        %v3866 = vunpack.c.l.b16 %v3794
        %v3867 = vunpack.c.l.b16 %v3795
        %v3868 = vunpack.c.l.b16 %v3796
        %v3869 = vunpack.c.l.b16 %v3797
        %v3870 = vunpack.c.l.b16 %v3798
        %v3871 = vunpack.c.l.b16 %v3799
        %v3872 = vunpack.c.l.b16 %v3800
        %v3873 = vunpack.c.l.b16 %v3801
        %v3874 = vunpack.c.l.b16 %v3802
        %v3875 = vunpack.c.l.b16 %v3803
        %v3876 = vunpack.c.l.b16 %v3804
        %v3877 = vunpack.c.l.b16 %v3805
        %v3878 = vunpack.c.l.b16 %v3806
        %v3879 = vunpack.c.l.b16 %v3807
        %v3880 = vunpack.c.l.b16 %v3808
        %v3881 = vunpack.c.l.b16 %v3809
        %v3882 = vunpack.c.l.b16 %v3810
        %v3883 = vunpack.c.l.b16 %v3811
        %v3884 = vunpack.c.l.b16 %v3812
        %v3885 = vunpack.c.l.b16 %v3813
        %v3886 = vunpack.c.l.b16 %v3814
        %v3887 = vunpack.c.l.b16 %v3815
        %v3888 = vunpack.c.l.b16 %v3816
        %v3889 = vunpack.c.l.b16 %v3817
        %v3890 = vunpack.c.l.b16 %v3818
        %v3891 = vunpack.c.l.b16 %v3819
        %v3892 = vunpack.c.l.b16 %v3820
        %v3893 = vunpack.c.l.b16 %v3821
        %v3894 = vunpack.c.l.b16 %v3822
        %v3895 = vunpack.c.l.b16 %v3823
        %v3896 = vunpack.c.l.b16 %v3824
        %v3897 = vpack.c.b16 %v3866, %v3865
        %v3898 = vpack.c.b16 %v3868, %v3867
        %v3899 = vpack.c.b16 %v3870, %v3869
        %v3900 = vpack.c.b16 %v3872, %v3871
        %v3901 = vpack.c.b16 %v3874, %v3873
        %v3902 = vpack.c.b16 %v3876, %v3875
        %v3903 = vpack.c.b16 %v3878, %v3877
        %v3904 = vpack.c.b16 %v3880, %v3879
        %v3905 = vpack.c.b16 %v3882, %v3881
        %v3906 = vpack.c.b16 %v3884, %v3883
        %v3907 = vpack.c.b16 %v3886, %v3885
        %v3908 = vpack.c.b16 %v3888, %v3887
        %v3909 = vpack.c.b16 %v3890, %v3889
        %v3910 = vpack.c.b16 %v3892, %v3891
        %v3911 = vpack.c.b16 %v3894, %v3893
        %v3912 = vpack.c.b16 %v3896, %v3895
        %3929 = vmatprep.subr.bf16.mxu0 0
        %3930 = vmatpush1.bf16.msra.mxu0 %v3897
        %3931 = vmatprep.subr.bf16.mxu0 0
        %3932 = vmatpush1.bf16.msra.mxu0 %v3898
        %3933 = vmatprep.subr.bf16.mxu0 0
        %3934 = vmatpush1.bf16.msra.mxu0 %v3899
        %3935 = vmatprep.subr.bf16.mxu0 0
        %3936 = vmatpush1.bf16.msra.mxu0 %v3900
        %3937 = vmatprep.subr.bf16.mxu0 0
        %3938 = vmatpush1.bf16.msra.mxu0 %v3901
        %3939 = vmatprep.subr.bf16.mxu0 0
        %3940 = vmatpush1.bf16.msra.mxu0 %v3902
        %3941 = vmatprep.subr.bf16.mxu0 0
        %3942 = vmatpush1.bf16.msra.mxu0 %v3903
        %3943 = vmatprep.subr.bf16.mxu0 0
        %3944 = vmatpush1.bf16.msra.mxu0 %v3904
        %3945 = vmatprep.subr.bf16.mxu0 0
        %3946 = vmatpush1.bf16.msra.mxu0 %v3905
        %3947 = vmatprep.subr.bf16.mxu0 0
        %3948 = vmatpush1.bf16.msra.mxu0 %v3906
        %3949 = vmatprep.subr.bf16.mxu0 0
        %3950 = vmatpush1.bf16.msra.mxu0 %v3907
        %3951 = vmatprep.subr.bf16.mxu0 0
        %3952 = vmatpush1.bf16.msra.mxu0 %v3908
        %3953 = vmatprep.subr.bf16.mxu0 0
        %3954 = vmatpush1.bf16.msra.mxu0 %v3909
        %3955 = vmatprep.subr.bf16.mxu0 0
        %3956 = vmatpush1.bf16.msra.mxu0 %v3910
        %3957 = vmatprep.subr.bf16.mxu0 0
        %3958 = vmatpush1.bf16.msra.mxu0 %v3911
        %3959 = vmatprep.subr.bf16.mxu0 0
        %3960 = vmatpush1.bf16.msra.mxu0 %v3912
        %3961 = vmatprep.mubr.bf16.mxu0 %v3791
        %3962 = vmatmul.mubr.bf16.gmra.mrb[0].mxu0 %v3790
        %v3963 = vpop.f32.mrb[0].mxu0
        %v3964 = vadd.f32 %v3831, %v3963
        %v3965 = vpop.f32.mrb[0].mxu0
        %v3966 = vpop.f32.mrb[0].mxu0
        %v3967 = vadd.f32 %v3831, %v3966
        %v3968 = vpop.f32.mrb[0].mxu0
        %3969 = vdwg.mxu0
        %v3970 = vadd.f32 %v3659, %v3964
        %v3971 = vadd.f32 %v3660, %v3967
        %s3972 = scalar_lea.vmem %s15, 1
        %v3973 = vld [vmem:[%s3972] sm:$0x1]
        %s3974 = scalar_lea.vmem %s16, 1
        %v3975 = vld [vmem:[%s3974] sm:$0x1]
        %v3976 = vsel %vm887, %v3970, 0.0
        %3977 = vadd.xlane.f32.xlu0 %v3976
        %v3978 = vpop.xlane.xlu0 %3977
        %v3979 = vsel %vm887, %v3971, 0.0
        %3980 = vadd.xlane.f32.xlu0 %v3979
        %v3981 = vpop.xlane.xlu0 %3980
        %v3982 = vmul.f32 %v3978, %v2086
        %v3983 = vmul.f32 %v3981, %v2086
        %v3984 = vsub.f32 %v3970, %v3982
        %v3985 = vsub.f32 %v3971, %v3983
        %v3986 = vmul.f32 %v3984, %v3984
        %v3987 = vmul.f32 %v3985, %v3985
        %v3988 = vsel %vm887, %v3986, 0.0
        %3989 = vadd.xlane.f32.xlu0 %v3988
        %v3990 = vpop.xlane.xlu0 %3989
        %v3991 = vsel %vm887, %v3987, 0.0
        %3992 = vadd.xlane.f32.xlu0 %v3991
        %v3993 = vpop.xlane.xlu0 %3992
        %v3994 = vmul.f32 %v3990, %v2086
        %v3995 = vmul.f32 %v3993, %v2086
        %v3996 = vadd.f32 %v3994, 1e-06
        %v3997 = vadd.f32 %v3995, 1e-06
        %v3998 = vrsqrt.pop %v3996
        %v3999 = vrsqrt.pop %v3997
        %v4000 = vmul.f32 %v3984, %v3998
        %v4001 = vmul.f32 %v3985, %v3999
        %v4003 = vlaneseq
        %v4004 = vshrl.u32 %v4003, 7
        %v4005 = vsub.s32 0, %v4004
        %v4006 = vrot.slane %v3973, %v4005
        %v4008 = vmul.f32 %v4000, %v4006
        %v4009 = vmul.f32 %v4001, %v4006
        %v4011 = vlaneseq
        %v4012 = vshrl.u32 %v4011, 7
        %v4013 = vsub.s32 0, %v4012
        %v4014 = vrot.slane %v3975, %v4013
        %v4016 = vadd.f32 %v4008, %v4014
        %v4017 = vadd.f32 %v4009, %v4014
        %v4018 = vld [vmem:[%s17] sm:$0x1]
        %v4019 = vld [vmem:[%s18] sm:$0x1]
        %v4020 = vsel %vm887, %v4016, 0.0
        %4021 = vadd.xlane.f32.xlu0 %v4020
        %v4022 = vpop.xlane.xlu0 %4021
        %v4023 = vsel %vm887, %v4017, 0.0
        %4024 = vadd.xlane.f32.xlu0 %v4023
        %v4025 = vpop.xlane.xlu0 %4024
        %v4026 = vmul.f32 %v4022, %v2086
        %v4027 = vmul.f32 %v4025, %v2086
        %v4028 = vsub.f32 %v4016, %v4026
        %v4029 = vsub.f32 %v4017, %v4027
        %v4030 = vmul.f32 %v4028, %v4028
        %v4031 = vmul.f32 %v4029, %v4029
        %v4032 = vsel %vm887, %v4030, 0.0
        %4033 = vadd.xlane.f32.xlu0 %v4032
        %v4034 = vpop.xlane.xlu0 %4033
        %v4035 = vsel %vm887, %v4031, 0.0
        %4036 = vadd.xlane.f32.xlu0 %v4035
        %v4037 = vpop.xlane.xlu0 %4036
        %v4038 = vmul.f32 %v4034, %v2086
        %v4039 = vmul.f32 %v4037, %v2086
        %v4040 = vadd.f32 %v4038, 1e-06
        %v4041 = vadd.f32 %v4039, 1e-06
        %v4042 = vrsqrt.pop %v4040
        %v4043 = vrsqrt.pop %v4041
        %v4044 = vmul.f32 %v4028, %v4042
        %v4045 = vmul.f32 %v4029, %v4043
        %v4047 = vlaneseq
        %v4048 = vshrl.u32 %v4047, 7
        %v4049 = vsub.s32 0, %v4048
        %v4050 = vrot.slane %v4018, %v4049
        %v4052 = vmul.f32 %v4044, %v4050
        %v4053 = vmul.f32 %v4045, %v4050
        %v4055 = vlaneseq
        %v4056 = vshrl.u32 %v4055, 7
        %v4057 = vsub.s32 0, %v4056
        %v4058 = vrot.slane %v4019, %v4057
        %v4060 = vadd.f32 %v4052, %v4058
        %v4061 = vadd.f32 %v4053, %v4058
        %v4064 = vcombine.high %v4060, %v4060
        %v4066 = vunpack.c.l.s4 1983009808
        %v4067 = vunpack.c.0.s8 %v4066
        %v4068 = vlaneseq
        %v4069 = vshrl.u32 %v4068, 7
        %v4070 = vsub.s32 %v4067, %v4069
        %v4071 = vrot.slane %v4060, %v4070
        %v4073 = vunpack.c.l.s4 1983009808
        %v4074 = vunpack.c.0.s8 %v4073
        %v4075 = vlaneseq
        %v4076 = vshrl.u32 %v4075, 7
        %v4077 = vsub.s32 %v4074, %v4076
        %v4078 = vrot.slane %v4064, %v4077
        %v4079 = vcombine.high %v4071, %v4071
        %v4080 = vcombine.high %v4078, %v4078
        %v4081 = vcombine.high %v4061, %v4061
        %v4083 = vunpack.c.l.s4 1983009808
        %v4084 = vunpack.c.0.s8 %v4083
        %v4085 = vlaneseq
        %v4086 = vshrl.u32 %v4085, 7
        %v4087 = vsub.s32 %v4084, %v4086
        %v4088 = vrot.slane %v4061, %v4087
        %v4090 = vunpack.c.l.s4 1983009808
        %v4091 = vunpack.c.0.s8 %v4090
        %v4092 = vlaneseq
        %v4093 = vshrl.u32 %v4092, 7
        %v4094 = vsub.s32 %v4091, %v4093
        %v4095 = vrot.slane %v4081, %v4094
        %v4096 = vcombine.high %v4088, %v4088
        %v4097 = vcombine.high %v4095, %v4095
        %v4098 = vlaneseq
        %v4099 = vshrl.u32 %v4098, 7
        %v4100 = vsub.s32 0, %v4099
        %v4101 = vrot.slane %v4071, %v4100
        %v4102 = vlaneseq
        %v4103 = vshrl.u32 %v4102, 7
        %v4104 = vsub.s32 0, %v4103
        %v4105 = vrot.slane %v4079, %v4104
        %v4106 = vlaneseq
        %v4107 = vshrl.u32 %v4106, 7
        %v4108 = vsub.s32 0, %v4107
        %v4109 = vrot.slane %v4078, %v4108
        %v4110 = vlaneseq
        %v4111 = vshrl.u32 %v4110, 7
        %v4112 = vsub.s32 0, %v4111
        %v4113 = vrot.slane %v4080, %v4112
        %v4114 = vlaneseq
        %v4115 = vshrl.u32 %v4114, 7
        %v4116 = vsub.s32 0, %v4115
        %v4117 = vrot.slane %v4088, %v4116
        %v4118 = vlaneseq
        %v4119 = vshrl.u32 %v4118, 7
        %v4120 = vsub.s32 0, %v4119
        %v4121 = vrot.slane %v4096, %v4120
        %v4122 = vlaneseq
        %v4123 = vshrl.u32 %v4122, 7
        %v4124 = vsub.s32 0, %v4123
        %v4125 = vrot.slane %v4095, %v4124
        %v4126 = vlaneseq
        %v4127 = vshrl.u32 %v4126, 7
        %v4128 = vsub.s32 0, %v4127
        %v4129 = vrot.slane %v4097, %v4128
        %vm4130 = vcmask 1041409
        %v4131 = vsel %vm4130, %v4105, %v4101
        %vm4132 = vcmask 1042434
        %v4133 = vsel %vm4132, %v4109, %v4131
        %vm4134 = vcmask 1043459
        %v4135 = vsel %vm4134, %v4113, %v4133
        %vm4136 = vcmask 1044484
        %v4137 = vsel %vm4136, %v4117, %v4135
        %vm4138 = vcmask 1045509
        %v4139 = vsel %vm4138, %v4121, %v4137
        %vm4140 = vcmask 1046534
        %v4141 = vsel %vm4140, %v4125, %v4139
        %vm4142 = vcmask 1047559
        %v4143 = vsel %vm4142, %v4129, %v4141
        %v4145 = vlaneseq
        %v4146 = vshrl.u32 %v4145, 7
        %v4147 = vsub.s32 1, %v4146
        %v4148 = vrot.slane %v4071, %v4147
        %v4149 = vlaneseq
        %v4150 = vshrl.u32 %v4149, 7
        %v4151 = vsub.s32 1, %v4150
        %v4152 = vrot.slane %v4079, %v4151
        %v4153 = vlaneseq
        %v4154 = vshrl.u32 %v4153, 7
        %v4155 = vsub.s32 1, %v4154
        %v4156 = vrot.slane %v4078, %v4155
        %v4157 = vlaneseq
        %v4158 = vshrl.u32 %v4157, 7
        %v4159 = vsub.s32 1, %v4158
        %v4160 = vrot.slane %v4080, %v4159
        %v4161 = vlaneseq
        %v4162 = vshrl.u32 %v4161, 7
        %v4163 = vsub.s32 1, %v4162
        %v4164 = vrot.slane %v4088, %v4163
        %v4165 = vlaneseq
        %v4166 = vshrl.u32 %v4165, 7
        %v4167 = vsub.s32 1, %v4166
        %v4168 = vrot.slane %v4096, %v4167
        %v4169 = vlaneseq
        %v4170 = vshrl.u32 %v4169, 7
        %v4171 = vsub.s32 1, %v4170
        %v4172 = vrot.slane %v4095, %v4171
        %v4173 = vlaneseq
        %v4174 = vshrl.u32 %v4173, 7
        %v4175 = vsub.s32 1, %v4174
        %v4176 = vrot.slane %v4097, %v4175
        %v4177 = vsel %vm4130, %v4152, %v4148
        %v4178 = vsel %vm4132, %v4156, %v4177
        %v4179 = vsel %vm4134, %v4160, %v4178
        %v4180 = vsel %vm4136, %v4164, %v4179
        %v4181 = vsel %vm4138, %v4168, %v4180
        %v4182 = vsel %vm4140, %v4172, %v4181
        %v4183 = vsel %vm4142, %v4176, %v4182
        %4184 = vrot.lane.b32.xlu0 %v4183, 64
        %v4185 = vpop.permute.xlu0 %4184
        %v4187 = vsel %vm887, %v4143, %v4185
        %4188 = vst [vmem:[%s612] sm:$0xff] %v4187
        %s4189 = sand.u32 %s450, 1
        %s4190 = scalar_lea.sflag [#allocation3], %s4189
        %s4191 = sand.u32 %s450, 1
        %s4192 = smul.addr %s4191, 8
        %s4193 = scalar_lea.vmem [#allocation2], %s4192
        // Predicated region
        $region97: #{tpu_custom_call.1} parent=95 // pred_check
          %p4194 = pneg %p460
        $region98: #{tpu_custom_call.1} parent=95 // pred_check_branch
          %4196 = sbr.rel (%p4194) target = $region100
        $region99: #{tpu_custom_call.1} parent=95 // pred_region
          %s4198 = ssub.s32 128, 128
          %4199 = vsyncadd %s4190, %s4198
          %s4200 = smul.addr %s33, 128
          %s4201 = scalar_lea.hbm %s19, %s4200
          %s4203 = sshll.u32 %s4193, 4
          %s4204 = int_to_ptr.vmem [resolvable:$true] %s4203
          %4206 = dma.vmem_to_hbm [thread:$0]  %s4204, 128, %s4201, %s4190
        $region100: #{tpu_custom_call.1} parent=95 // pred_fallthru
          _
      $region96: #{tpu_custom_call.1} parent=5 // pred_fallthru
        _
      %p4207 = scmp.le.s32.totalorder 2, %s28
      // Predicated region
      $region101: #{tpu_custom_call.1} parent=5 // pred_check
        %p4208 = pneg %p4207
      $region102: #{tpu_custom_call.1} parent=5 // pred_check_branch
        %4210 = sbr.rel (%p4208) target = $region104
      $region103: #{tpu_custom_call.1} parent=5 // pred_region
        %s4211 = ssub.s32 %s28, 2
        // Predicated region
        $region105: #{tpu_custom_call.1} parent=103 // pred_check
          %p4212 = pneg %p466
        $region106: #{tpu_custom_call.1} parent=103 // pred_check_branch
          %4214 = sbr.rel (%p4212) target = $region108
        $region107: #{tpu_custom_call.1} parent=103 // pred_region
          %s4215 = sand.u32 %s451, 1
          %s4216 = scalar_lea.sflag [#allocation3], %s4215
          %s4217 = sand.u32 %s451, 1
          %s4218 = smul.addr %s4217, 8
          %s4219 = scalar_lea.vmem [#allocation2], %s4218
          %4220 = dma.done %s4216, 128
        $region108: #{tpu_custom_call.1} parent=103 // pred_fallthru
          _
      $region104: #{tpu_custom_call.1} parent=5 // pred_fallthru
        _
    $region6: #{tpu_custom_call.1} parent=1 // loop_footer
      %s32 = sadd.s32 1, %s28
    $region7: #{tpu_custom_call.1} parent=1 // loop_footer_branch
      %27 = sbr.rel target = $region3
    $region8: #{tpu_custom_call.1} parent=1 // loop_exit
      _
    %4221 = vsyncpa [#allocation3], 1
    %s4222 = scalar_lea.sflag [#allocation3], 1
    %4223 = vsyncpa %s4222, 1

</llo_original>
